<compile_context>
chip_gen: v5e
topology: v5e:2x2
jax: 0.10.0
libtpu: 0.0.40
codegen_flags: <defaults>
</compile_context>

<pallas_src>
import functools
import math

import jax
import jax.numpy as jnp
from jax import lax
from jax.experimental import pallas as pl
from jax.experimental.pallas import tpu as pltpu


def transformer_block_kernel(
    x_ref,            # (rows, D)   f32   rows = seqs * seq_len
    wan_ref,          # (1, D)      f32   attn RMSNorm weight
    wqkv_ref,         # (D, 3D)     bf16  to_qkv weight (transposed)
    bqkv_ref,         # (1, 3D)     f32
    wout_ref,         # (D, D)      bf16  to_out weight (transposed)
    bout_ref,         # (1, D)      f32
    wmn_ref,          # (1, D)      f32   mlp RMSNorm weight
    w1_ref,           # (D, FF)     bf16  linear_in weight (transposed)
    b1_ref,           # (1, FF)     f32
    w2_ref,           # (FF, D)     bf16  linear_out weight (transposed)
    b2_ref,           # (1, D)      f32
    cos_ref,          # (rows, D)   f32   per-head [cos|cos], * sqrt(scale)
    sin_ref,          # (rows, D)   f32   per-head [-sin|sin] (sign folded), * sqrt(scale)
    o_ref,            # (rows, D)   f32
    qkv_scr,          # (rows, 3D)  f32 VMEM scratch: roped Q | roped K | V
    attn_scr,         # (rows, D)   f32 VMEM scratch: assembled attention outputs
    *, seqs, seq_len, heads, head_dim, heads_per_group, eps):

    D = heads * head_dim
    half = head_dim // 2
    bf16 = jnp.bfloat16

    x = x_ref[...]                                        # (rows, D) f32

    # ---- attention pre-norm (Fast_RMS_Layernorm: no mean subtraction) ----
    var = jnp.mean(x * x, axis=-1, keepdims=True)
    h = x * lax.rsqrt(var + eps) * wan_ref[0]

    # ---- fused qkv projection: bf16 MXU inputs, f32 accumulation ----
    qkv = jnp.dot(h.astype(bf16), wqkv_ref[...],
                  preferred_element_type=jnp.float32) + bqkv_ref[0]

    # ---- slab-wide RoPE (rotate-half, sign-folded sin, sqrt(scale) folded) ----
    cos = cos_ref[...]
    sin = sin_ref[...]

    def half_swap(t):
        # per-head [t1, t2] -> [t2, t1] across the whole (rows, D) slab
        parts = []
        for hh in range(heads):
            c0 = hh * head_dim
            parts.append(t[:, c0 + half:c0 + head_dim])
            parts.append(t[:, c0:c0 + half])
        return jnp.concatenate(parts, axis=-1)

    q = qkv[:, :D]
    k = qkv[:, D:2 * D]
    qkv_scr[:, :D] = q * cos + half_swap(q) * sin          # roped Q * sqrt(scale)
    qkv_scr[:, D:2 * D] = k * cos + half_swap(k) * sin     # roped K * sqrt(scale)
    qkv_scr[:, 2 * D:3 * D] = qkv[:, 2 * D:3 * D]          # V

    contract_last = (((1,), (1,)), ((), ()))               # QK^T, no materialized transpose
    groups = heads // heads_per_group
    gw = heads_per_group * head_dim                        # lane width per head group

    # ---- per-sequence attention (no mask, dropout p=0) ----
    def seq_body(s, carry):
        r0 = s * seq_len
        if not isinstance(s, int):
            r0 = pl.multiple_of(r0, seq_len)
        for g in range(groups):                            # small static unroll
            c0 = g * gw
            qg = qkv_scr[pl.ds(r0, seq_len), c0:c0 + gw]           # aligned loads
            kg = qkv_scr[pl.ds(r0, seq_len), D + c0:D + c0 + gw]
            vg = qkv_scr[pl.ds(r0, seq_len), 2 * D + c0:2 * D + c0 + gw]
            outs = []
            for j in range(heads_per_group):
                a = j * head_dim
                qh = qg[:, a:a + head_dim].astype(bf16)
                kh = kg[:, a:a + head_dim].astype(bf16)
                vh = vg[:, a:a + head_dim].astype(bf16)
                sc = lax.dot_general(qh, kh, contract_last,
                                     preferred_element_type=jnp.float32)
                m = jnp.max(sc, axis=-1, keepdims=True)
                p = jnp.exp(sc - m)
                l = jnp.sum(p, axis=-1, keepdims=True)
                o = jnp.dot(p.astype(bf16), vh,
                            preferred_element_type=jnp.float32)
                # normalize AFTER the PV matmul: N*head_dim muls, not N*N
                outs.append(o * pl.reciprocal(l, approx=True))
            og = outs[0] if len(outs) == 1 else jnp.concatenate(outs, axis=-1)
            attn_scr[pl.ds(r0, seq_len), c0:c0 + gw] = og          # aligned store
        return carry

    if seqs == 1:
        seq_body(0, 0)                       # static fast path (long-seq / toy case)
    else:
        lax.fori_loop(0, seqs, seq_body, 0)  # bounded live ranges across sequences

    # ---- output projection (single full-width matmul) + residual 1 ----
    attn = jnp.dot(attn_scr[...].astype(bf16), wout_ref[...],
                   preferred_element_type=jnp.float32) + bout_ref[0]
    x1 = x + attn

    # ---- MLP pre-norm + squared-ReLU MLP + residual 2 ----
    var2 = jnp.mean(x1 * x1, axis=-1, keepdims=True)
    h2 = x1 * lax.rsqrt(var2 + eps) * wmn_ref[0]
    ff = jnp.dot(h2.astype(bf16), w1_ref[...],
                 preferred_element_type=jnp.float32) + b1_ref[0]
    r = jnp.maximum(ff, 0.0)
    mlp = jnp.dot((r * r).astype(bf16), w2_ref[...],
                  preferred_element_type=jnp.float32) + b2_ref[0]

    o_ref[...] = x1 + mlp


def _rotary_half_tables(seq_len, dim, half, base=10000.0):
    # Matches RotaryEmbedding(dim): cache built with the FULL model dim, only
    # the first head_dim//2 columns are consumed by fast_rope_embedding.
    inv_freq = 1.0 / (base ** (jnp.arange(0, dim, 2, dtype=jnp.float32) / dim))
    t = jnp.arange(seq_len, dtype=jnp.float32)
    freqs = jnp.outer(t, inv_freq)[:, :half]
    return jnp.cos(freqs), jnp.sin(freqs)


def _pick_seqs_per_tile(batch, seq_len, target_rows):
    """Whole sequences per grid tile: S | batch, (S*seq_len) % 8 == 0, rows near
    target_rows, and >= 2 grid tiles when possible (megacore / v7x 2 TCs)."""
    divs = [s for s in range(1, batch + 1)
            if batch % s == 0 and (s * seq_len) % 8 == 0]
    if not divs:
        return batch                      # single full-array tile is always legal
    target_seqs = max(1, target_rows // seq_len)
    fit = [s for s in divs if s <= target_seqs]
    s = max(fit) if fit else min(divs)
    if batch // s < 2:
        smaller = [d for d in divs if batch // d >= 2]
        if smaller:
            s = max(smaller)
    return s


def transformer_block(x, params, heads, eps=1e-6, target_rows=256):
    """target_rows: ~128 on v5e (128x128 MXU), 256-512 on v6e/v7x (256x256 MXU)."""
    B, N, D = x.shape
    head_dim = D // heads
    half = head_dim // 2
    scale = 1.0 / math.sqrt(head_dim)
    FF = params["w1_t"].shape[1]

    S = _pick_seqs_per_tile(B, N, target_rows)
    rows = S * N
    num_tiles = B // S

    # head groups spanning a multiple of 128 lanes (e.g. 2 heads when head_dim=64)
    hpg = 1 if head_dim % 128 == 0 else max(1, 128 // head_dim)
    while heads % hpg:
        hpg -= 1

    # RoPE tables pre-tiled to (rows, D): per head [cos|cos] and sign-folded
    # [-sin|sin]; sqrt(softmax scale) folded into both so Q.K carries the full
    # 1/sqrt(head_dim) with no in-kernel scale multiply.
    cos_h, sin_h = _rotary_half_tables(N, D, half)
    root_s = math.sqrt(scale)
    cos_head = jnp.concatenate([cos_h, cos_h], axis=-1) * root_s      # (N, head_dim)
    sin_head = jnp.concatenate([-sin_h, sin_h], axis=-1) * root_s
    cos_t = jnp.tile(jnp.tile(cos_head, (1, heads)), (S, 1)).astype(jnp.float32)
    sin_t = jnp.tile(jnp.tile(sin_head, (1, heads)), (S, 1)).astype(jnp.float32)

    # bf16 weights for the MXU; biases / norm weights / tables stay f32.
    bf16 = jnp.bfloat16
    wqkv = params["wqkv_t"].astype(bf16)
    wout = params["wout_t"].astype(bf16)
    w1 = params["w1_t"].astype(bf16)
    w2 = params["w2_t"].astype(bf16)

    x2 = x.reshape(B * N, D)
    operands = (x2, params["attn_norm_w"], wqkv, params["bqkv"],
                wout, params["bout"], params["mlp_norm_w"],
                w1, params["b1"], w2, params["b2"], cos_t, sin_t)

    kernel = functools.partial(
        transformer_block_kernel,
        seqs=S, seq_len=N, heads=heads, head_dim=head_dim,
        heads_per_group=hpg, eps=eps)

    M = B * N
    flops = 2 * M * D * (4 * D + 2 * FF) + 4 * B * heads * N * N * head_dim
    bytes_accessed = (sum(int(a.size) * a.dtype.itemsize for a in operands)
                      + 4 * M * D)
    cost = pl.CostEstimate(flops=int(flops),
                           transcendentals=int(B * heads * N * N),
                           bytes_accessed=int(bytes_accessed))

    # VMEM budget: ~3/4 of physical, capped at 96 MiB (=> ~48 MiB on v7x).
    try:
        vmem_cap = pltpu.get_tpu_info().vmem_capacity_bytes
    except Exception:
        vmem_cap = 128 * 1024 * 1024
    vmem_limit = max(32 * 1024 * 1024, min(3 * vmem_cap // 4, 96 * 1024 * 1024))

    def build(single_buffer_weights):
        if single_buffer_weights:
            def const2d(shape):
                # constant index_map -> DMA'd once; single buffer halves residency
                return pl.BlockSpec(shape, lambda i: (0, 0),
                                    pipeline_mode=pl.Buffered(1))
        else:
            def const2d(shape):
                return pl.BlockSpec(shape, lambda i: (0, 0))
        return pl.pallas_call(
            kernel,
            out_shape=jax.ShapeDtypeStruct((M, D), x.dtype),
            grid_spec=pltpu.PrefetchScalarGridSpec(
                num_scalar_prefetch=0,
                grid=(num_tiles,),
                in_specs=[
                    pl.BlockSpec((rows, D), lambda i: (i, 0)),   # x (flattened M tiles)
                    const2d((1, D)),                             # attn_norm weight
                    const2d((D, 3 * D)),                         # qkv weight^T (bf16)
                    const2d((1, 3 * D)),                         # qkv bias
                    const2d((D, D)),                             # out weight^T (bf16)
                    const2d((1, D)),                             # out bias
                    const2d((1, D)),                             # mlp_norm weight
                    const2d((D, FF)),                            # linear_in weight^T (bf16)
                    const2d((1, FF)),                            # linear_in bias
                    const2d((FF, D)),                            # linear_out weight^T (bf16)
                    const2d((1, D)),                             # linear_out bias
                    const2d((rows, D)),                          # cos table (tiled, scaled)
                    const2d((rows, D)),                          # sin table (sign folded)
                ],
                out_specs=pl.BlockSpec((rows, D), lambda i: (i, 0)),
                scratch_shapes=[pltpu.VMEM((rows, 3 * D), jnp.float32),
                                pltpu.VMEM((rows, D), jnp.float32)],
            ),
            compiler_params=pltpu.CompilerParams(
                dimension_semantics=("parallel",),               # tiles are independent
                vmem_limit_bytes=int(vmem_limit)),
            cost_estimate=cost,
        )

    try:
        out = build(True)(*operands)
    except Exception:
        # pipeline_mode=pl.Buffered(1) unsupported on this jax build; fall back
        # to default (double-buffered) resident weights — still correct.
        out = build(False)(*operands)

    return out.reshape(B, N, D)


def reference_block(x, p, heads, eps=1e-6):
    """Pure-JAX f32 reference mirroring the PyTorch forward semantics."""
    B, N, D = x.shape
    hd = D // heads
    half = hd // 2
    cos, sin = _rotary_half_tables(N, D, half)

    def rms(v, w):
        var = jnp.mean(v * v, axis=-1, keepdims=True)
        return v * lax.rsqrt(var + eps) * w

    h = rms(x, p["attn_norm_w"][0])
    qkv = h @ p["wqkv_t"] + p["bqkv"][0]
    q, k, v = jnp.split(qkv, 3, axis=-1)

    def split_heads(a):
        return a.reshape(B, N, heads, hd).transpose(0, 2, 1, 3)     # (B,h,N,hd)

    q, k, v = split_heads(q), split_heads(k), split_heads(v)

    def rope(a):
        a1, a2 = a[..., :half], a[..., half:]
        return jnp.concatenate([a1 * cos - a2 * sin, a2 * cos + a1 * sin], axis=-1)

    q, k = rope(q), rope(k)
    s = jnp.einsum("bhqd,bhkd->bhqk", q, k) / jnp.sqrt(jnp.float32(hd))
    a = jax.nn.softmax(s, axis=-1)
    o = jnp.einsum("bhqk,bhkd->bhqd", a, v)
    o = o.transpose(0, 2, 1, 3).reshape(B, N, D)
    x1 = x + (o @ p["wout_t"] + p["bout"][0])

    h2 = rms(x1, p["mlp_norm_w"][0])
    ff = h2 @ p["w1_t"] + p["b1"][0]
    r = jnp.maximum(ff, 0.0)
    return x1 + ((r * r) @ p["w2_t"] + p["b2"][0])


if __name__ == "__main__":
    # head_dim = dim // heads must be in [64, 256] per the module's assertion.
    B, N, dim, heads = 2, 8, 128, 2
    FF = 4 * dim

    key = jax.random.PRNGKey(0)
    keys = jax.random.split(key, 11)
    f32 = jnp.float32
    rnd = lambda k, shape, s=0.02: (s * jax.random.normal(k, shape)).astype(f32)

    params = {
        "attn_norm_w": (1.0 + 0.1 * jax.random.normal(keys[0], (1, dim))).astype(f32),
        "mlp_norm_w":  (1.0 + 0.1 * jax.random.normal(keys[1], (1, dim))).astype(f32),
        # torch Linear stores (out, in); the kernel consumes the transpose (in, out).
        "wqkv_t": rnd(keys[2], (dim, 3 * dim)),
        "bqkv":   rnd(keys[3], (1, 3 * dim)),
        "wout_t": rnd(keys[4], (dim, dim)),
        "bout":   rnd(keys[5], (1, dim)),
        "w1_t":   rnd(keys[6], (dim, FF)),
        "b1":     rnd(keys[7], (1, FF)),
        "w2_t":   rnd(keys[8], (FF, dim)),
        "b2":     rnd(keys[9], (1, dim)),
    }

    x = jax.random.normal(keys[10], (B, N, dim), dtype=f32)

    out = jax.block_until_ready(transformer_block(x, params, heads))
    ref = jax.block_until_ready(reference_block(x, params, heads))

    assert out.shape == (B, N, dim)
    err = float(jnp.max(jnp.abs(out - ref)))
    # bf16 matmul inputs (f32 accumulation) => compare at bf16-level tolerance.
    assert jnp.allclose(out, ref, rtol=2e-2, atol=2e-2), err

    print("KERNEL_OK")
</pallas_src>

<mosaic_0001>
module attributes {stable_mosaic.version = 11 : i64} {
  func.func @transformer_block_kernel(%arg0: i32, %arg1: memref<8x128xf32, #tpu.memory_space<vmem>>, %arg2: memref<1x128xf32, #tpu.memory_space<vmem>>, %arg3: memref<128x384xbf16, #tpu.memory_space<vmem>>, %arg4: memref<1x384xf32, #tpu.memory_space<vmem>>, %arg5: memref<128x128xbf16, #tpu.memory_space<vmem>>, %arg6: memref<1x128xf32, #tpu.memory_space<vmem>>, %arg7: memref<1x128xf32, #tpu.memory_space<vmem>>, %arg8: memref<128x512xbf16, #tpu.memory_space<vmem>>, %arg9: memref<1x512xf32, #tpu.memory_space<vmem>>, %arg10: memref<512x128xbf16, #tpu.memory_space<vmem>>, %arg11: memref<1x128xf32, #tpu.memory_space<vmem>>, %arg12: memref<8x128xf32, #tpu.memory_space<vmem>>, %arg13: memref<8x128xf32, #tpu.memory_space<vmem>>, %arg14: memref<8x128xf32, #tpu.memory_space<vmem>>, %arg15: memref<8x384xf32, #tpu.memory_space<vmem>>, %arg16: memref<8x128xf32, #tpu.memory_space<vmem>>) attributes {dimension_semantics = [#tpu.dimension_semantics<parallel>], iteration_bounds = array<i64: 2>, scalar_prefetch = 0 : i64, scratch_operands = 2 : i64, tpu.core_type = #tpu.core_type<tc>, window_params = [{transform_indices = @transform_0, window_bounds = array<i64: 8, 128>}, {pipeline_mode = #tpu.pipeline_mode<synchronous>, transform_indices = @transform_1, window_bounds = array<i64: 1, 128>}, {pipeline_mode = #tpu.pipeline_mode<synchronous>, transform_indices = @transform_2, window_bounds = array<i64: 128, 384>}, {pipeline_mode = #tpu.pipeline_mode<synchronous>, transform_indices = @transform_3, window_bounds = array<i64: 1, 384>}, {pipeline_mode = #tpu.pipeline_mode<synchronous>, transform_indices = @transform_4, window_bounds = array<i64: 128, 128>}, {pipeline_mode = #tpu.pipeline_mode<synchronous>, transform_indices = @transform_5, window_bounds = array<i64: 1, 128>}, {pipeline_mode = #tpu.pipeline_mode<synchronous>, transform_indices = @transform_6, window_bounds = array<i64: 1, 128>}, {pipeline_mode = #tpu.pipeline_mode<synchronous>, transform_indices = @transform_7, window_bounds = array<i64: 128, 512>}, {pipeline_mode = #tpu.pipeline_mode<synchronous>, transform_indices = @transform_8, window_bounds = array<i64: 1, 512>}, {pipeline_mode = #tpu.pipeline_mode<synchronous>, transform_indices = @transform_9, window_bounds = array<i64: 512, 128>}, {pipeline_mode = #tpu.pipeline_mode<synchronous>, transform_indices = @transform_10, window_bounds = array<i64: 1, 128>}, {pipeline_mode = #tpu.pipeline_mode<synchronous>, transform_indices = @transform_11, window_bounds = array<i64: 8, 128>}, {pipeline_mode = #tpu.pipeline_mode<synchronous>, transform_indices = @transform_12, window_bounds = array<i64: 8, 128>}, {transform_indices = @transform_13, window_bounds = array<i64: 8, 128>}]} {
    %c0 = arith.constant 0 : index
    %c0_0 = arith.constant 0 : index
    %0 = vector.load %arg1[%c0, %c0_0] : memref<8x128xf32, #tpu.memory_space<vmem>>, vector<8x128xf32>
    %1 = arith.mulf %0, %0 : vector<8x128xf32>
    %cst = arith.constant dense<0.000000e+00> : vector<8xf32>
    %2 = vector.multi_reduction <add>, %1, %cst [1] : vector<8x128xf32> to vector<8xf32>
    %3 = vector.shape_cast %2 : vector<8xf32> to vector<8x1xf32>
    %cst_1 = arith.constant 1.280000e+02 : f32
    %4 = vector.broadcast %cst_1 : f32 to vector<8x1xf32>
    %5 = arith.divf %3, %4 : vector<8x1xf32>
    %cst_2 = arith.constant 9.99999997E-7 : f32
    %6 = vector.broadcast %cst_2 : f32 to vector<8x1xf32>
    %7 = arith.addf %5, %6 : vector<8x1xf32>
    %8 = math.rsqrt %7 : vector<8x1xf32>
    %9 = vector.broadcast %8 : vector<8x1xf32> to vector<8x128xf32>
    %10 = arith.mulf %0, %9 : vector<8x128xf32>
    %c0_3 = arith.constant 0 : index
    %c0_4 = arith.constant 0 : index
    %11 = vector.load %arg2[%c0_3, %c0_4] : memref<1x128xf32, #tpu.memory_space<vmem>>, vector<1x128xf32>
    %12 = vector.shape_cast %11 : vector<1x128xf32> to vector<128xf32>
    %13 = vector.shape_cast %12 : vector<128xf32> to vector<1x128xf32>
    %14 = vector.broadcast %13 : vector<1x128xf32> to vector<8x128xf32>
    %15 = arith.mulf %10, %14 : vector<8x128xf32>
    %16 = arith.truncf %15 : vector<8x128xf32> to vector<8x128xbf16>
    %c0_5 = arith.constant 0 : index
    %c0_6 = arith.constant 0 : index
    %17 = vector.load %arg3[%c0_5, %c0_6] : memref<128x384xbf16, #tpu.memory_space<vmem>>, vector<128x384xbf16>
    %cst_7 = arith.constant dense<0.000000e+00> : vector<8x384xf32>
    %18 = tpu.matmul %16, %17, %cst_7 {dimension_numbers = #tpu.dot_dimension_numbers<[1], [0], [0], [1], [0, 0, 1, 1], [], []>} : vector<8x128xbf16>, vector<128x384xbf16>, vector<8x384xf32> -> vector<8x384xf32>
    %c0_8 = arith.constant 0 : index
    %c0_9 = arith.constant 0 : index
    %19 = vector.load %arg4[%c0_8, %c0_9] : memref<1x384xf32, #tpu.memory_space<vmem>>, vector<1x384xf32>
    %20 = vector.shape_cast %19 : vector<1x384xf32> to vector<384xf32>
    %21 = vector.shape_cast %20 : vector<384xf32> to vector<1x384xf32>
    %22 = vector.broadcast %21 : vector<1x384xf32> to vector<8x384xf32>
    %23 = arith.addf %18, %22 : vector<8x384xf32>
    %c0_10 = arith.constant 0 : index
    %c0_11 = arith.constant 0 : index
    %24 = vector.load %arg12[%c0_10, %c0_11] : memref<8x128xf32, #tpu.memory_space<vmem>>, vector<8x128xf32>
    %c0_12 = arith.constant 0 : index
    %c0_13 = arith.constant 0 : index
    %25 = vector.load %arg13[%c0_12, %c0_13] : memref<8x128xf32, #tpu.memory_space<vmem>>, vector<8x128xf32>
    %26 = vector.extract_strided_slice %23 {offsets = [0, 0], sizes = [8, 128], strides = [1, 1]} : vector<8x384xf32> to vector<8x128xf32>
    %27 = vector.extract_strided_slice %23 {offsets = [0, 128], sizes = [8, 128], strides = [1, 1]} : vector<8x384xf32> to vector<8x128xf32>
    %28 = arith.mulf %26, %24 : vector<8x128xf32>
    %29 = vector.extract_strided_slice %26 {offsets = [0, 32], sizes = [8, 32], strides = [1, 1]} : vector<8x128xf32> to vector<8x32xf32>
    %30 = vector.extract_strided_slice %26 {offsets = [0, 0], sizes = [8, 32], strides = [1, 1]} : vector<8x128xf32> to vector<8x32xf32>
    %31 = vector.extract_strided_slice %26 {offsets = [0, 96], sizes = [8, 32], strides = [1, 1]} : vector<8x128xf32> to vector<8x32xf32>
    %32 = vector.extract_strided_slice %26 {offsets = [0, 64], sizes = [8, 32], strides = [1, 1]} : vector<8x128xf32> to vector<8x32xf32>
    %33 = tpu.concatenate %29, %30, %31, %32 in 1 : vector<8x32xf32>, vector<8x32xf32>, vector<8x32xf32>, vector<8x32xf32> -> vector<8x128xf32>
    %34 = arith.mulf %33, %25 : vector<8x128xf32>
    %35 = arith.addf %28, %34 : vector<8x128xf32>
    %c0_14 = arith.constant 0 : index
    %c0_15 = arith.constant 0 : index
    %36 = vector.load %arg15[%c0_14, %c0_15] : memref<8x384xf32, #tpu.memory_space<vmem>>, vector<8x128xf32>
    tpu.vector_store %arg15[%c0_14, %c0_15], %35 {strides = array<i32>} : memref<8x384xf32, #tpu.memory_space<vmem>>, vector<8x128xf32>,
    %37 = arith.mulf %27, %24 : vector<8x128xf32>
    %38 = vector.extract_strided_slice %27 {offsets = [0, 32], sizes = [8, 32], strides = [1, 1]} : vector<8x128xf32> to vector<8x32xf32>
    %39 = vector.extract_strided_slice %27 {offsets = [0, 0], sizes = [8, 32], strides = [1, 1]} : vector<8x128xf32> to vector<8x32xf32>
    %40 = vector.extract_strided_slice %27 {offsets = [0, 96], sizes = [8, 32], strides = [1, 1]} : vector<8x128xf32> to vector<8x32xf32>
    %41 = vector.extract_strided_slice %27 {offsets = [0, 64], sizes = [8, 32], strides = [1, 1]} : vector<8x128xf32> to vector<8x32xf32>
    %42 = tpu.concatenate %38, %39, %40, %41 in 1 : vector<8x32xf32>, vector<8x32xf32>, vector<8x32xf32>, vector<8x32xf32> -> vector<8x128xf32>
    %43 = arith.mulf %42, %25 : vector<8x128xf32>
    %44 = arith.addf %37, %43 : vector<8x128xf32>
    %c0_16 = arith.constant 0 : index
    %c128 = arith.constant 128 : index
    %45 = vector.load %arg15[%c0_16, %c128] : memref<8x384xf32, #tpu.memory_space<vmem>>, vector<8x128xf32>
    tpu.vector_store %arg15[%c0_16, %c128], %44 {strides = array<i32>} : memref<8x384xf32, #tpu.memory_space<vmem>>, vector<8x128xf32>,
    %46 = vector.extract_strided_slice %23 {offsets = [0, 256], sizes = [8, 128], strides = [1, 1]} : vector<8x384xf32> to vector<8x128xf32>
    %c0_17 = arith.constant 0 : index
    %c256 = arith.constant 256 : index
    %47 = vector.load %arg15[%c0_17, %c256] : memref<8x384xf32, #tpu.memory_space<vmem>>, vector<8x128xf32>
    tpu.vector_store %arg15[%c0_17, %c256], %46 {strides = array<i32>} : memref<8x384xf32, #tpu.memory_space<vmem>>, vector<8x128xf32>,
    %c0_18 = arith.constant 0 : index
    %c0_19 = arith.constant 0 : index
    %48 = vector.load %arg15[%c0_18, %c0_19] : memref<8x384xf32, #tpu.memory_space<vmem>>, vector<8x128xf32>
    %c0_20 = arith.constant 0 : index
    %c128_21 = arith.constant 128 : index
    %49 = vector.load %arg15[%c0_20, %c128_21] : memref<8x384xf32, #tpu.memory_space<vmem>>, vector<8x128xf32>
    %c0_22 = arith.constant 0 : index
    %c256_23 = arith.constant 256 : index
    %50 = vector.load %arg15[%c0_22, %c256_23] : memref<8x384xf32, #tpu.memory_space<vmem>>, vector<8x128xf32>
    %51 = vector.extract_strided_slice %48 {offsets = [0, 0], sizes = [8, 64], strides = [1, 1]} : vector<8x128xf32> to vector<8x64xf32>
    %52 = arith.truncf %51 : vector<8x64xf32> to vector<8x64xbf16>
    %53 = vector.extract_strided_slice %49 {offsets = [0, 0], sizes = [8, 64], strides = [1, 1]} : vector<8x128xf32> to vector<8x64xf32>
    %54 = arith.truncf %53 : vector<8x64xf32> to vector<8x64xbf16>
    %55 = vector.extract_strided_slice %50 {offsets = [0, 0], sizes = [8, 64], strides = [1, 1]} : vector<8x128xf32> to vector<8x64xf32>
    %56 = arith.truncf %55 : vector<8x64xf32> to vector<8x64xbf16>
    %cst_24 = arith.constant dense<0.000000e+00> : vector<8x8xf32>
    %57 = tpu.matmul %52, %54, %cst_24 {dimension_numbers = #tpu.dot_dimension_numbers<[1], [1], [0], [0], [0, 0, 1, 0], [], []>} : vector<8x64xbf16>, vector<8x64xbf16>, vector<8x8xf32> -> vector<8x8xf32>
    %cst_25 = arith.constant dense<0xFF800000> : vector<8xf32>
    %58 = vector.multi_reduction <maximumf>, %57, %cst_25 [1] : vector<8x8xf32> to vector<8xf32>
    %59 = vector.shape_cast %58 : vector<8xf32> to vector<8x1xf32>
    %60 = vector.broadcast %59 : vector<8x1xf32> to vector<8x8xf32>
    %61 = arith.subf %57, %60 : vector<8x8xf32>
    %62 = math.exp %61 : vector<8x8xf32>
    %cst_26 = arith.constant dense<0.000000e+00> : vector<8xf32>
    %63 = vector.multi_reduction <add>, %62, %cst_26 [1] : vector<8x8xf32> to vector<8xf32>
    %64 = vector.shape_cast %63 : vector<8xf32> to vector<8x1xf32>
    %65 = arith.truncf %62 : vector<8x8xf32> to vector<8x8xbf16>
    %cst_27 = arith.constant dense<0.000000e+00> : vector<8x64xf32>
    %66 = tpu.matmul %65, %56, %cst_27 {dimension_numbers = #tpu.dot_dimension_numbers<[1], [0], [0], [1], [0, 0, 1, 1], [], []>} : vector<8x8xbf16>, vector<8x64xbf16>, vector<8x64xf32> -> vector<8x64xf32>
    %67 = tpu.reciprocal %64 {approx = true} : vector<8x1xf32> -> vector<8x1xf32>
    %68 = vector.broadcast %67 : vector<8x1xf32> to vector<8x64xf32>
    %69 = arith.mulf %66, %68 : vector<8x64xf32>
    %70 = vector.extract_strided_slice %48 {offsets = [0, 64], sizes = [8, 64], strides = [1, 1]} : vector<8x128xf32> to vector<8x64xf32>
    %71 = arith.truncf %70 : vector<8x64xf32> to vector<8x64xbf16>
    %72 = vector.extract_strided_slice %49 {offsets = [0, 64], sizes = [8, 64], strides = [1, 1]} : vector<8x128xf32> to vector<8x64xf32>
    %73 = arith.truncf %72 : vector<8x64xf32> to vector<8x64xbf16>
    %74 = vector.extract_strided_slice %50 {offsets = [0, 64], sizes = [8, 64], strides = [1, 1]} : vector<8x128xf32> to vector<8x64xf32>
    %75 = arith.truncf %74 : vector<8x64xf32> to vector<8x64xbf16>
    %cst_28 = arith.constant dense<0.000000e+00> : vector<8x8xf32>
    %76 = tpu.matmul %71, %73, %cst_28 {dimension_numbers = #tpu.dot_dimension_numbers<[1], [1], [0], [0], [0, 0, 1, 0], [], []>} : vector<8x64xbf16>, vector<8x64xbf16>, vector<8x8xf32> -> vector<8x8xf32>
    %cst_29 = arith.constant dense<0xFF800000> : vector<8xf32>
    %77 = vector.multi_reduction <maximumf>, %76, %cst_29 [1] : vector<8x8xf32> to vector<8xf32>
    %78 = vector.shape_cast %77 : vector<8xf32> to vector<8x1xf32>
    %79 = vector.broadcast %78 : vector<8x1xf32> to vector<8x8xf32>
    %80 = arith.subf %76, %79 : vector<8x8xf32>
    %81 = math.exp %80 : vector<8x8xf32>
    %cst_30 = arith.constant dense<0.000000e+00> : vector<8xf32>
    %82 = vector.multi_reduction <add>, %81, %cst_30 [1] : vector<8x8xf32> to vector<8xf32>
    %83 = vector.shape_cast %82 : vector<8xf32> to vector<8x1xf32>
    %84 = arith.truncf %81 : vector<8x8xf32> to vector<8x8xbf16>
    %cst_31 = arith.constant dense<0.000000e+00> : vector<8x64xf32>
    %85 = tpu.matmul %84, %75, %cst_31 {dimension_numbers = #tpu.dot_dimension_numbers<[1], [0], [0], [1], [0, 0, 1, 1], [], []>} : vector<8x8xbf16>, vector<8x64xbf16>, vector<8x64xf32> -> vector<8x64xf32>
    %86 = tpu.reciprocal %83 {approx = true} : vector<8x1xf32> -> vector<8x1xf32>
    %87 = vector.broadcast %86 : vector<8x1xf32> to vector<8x64xf32>
    %88 = arith.mulf %85, %87 : vector<8x64xf32>
    %89 = tpu.concatenate %69, %88 in 1 : vector<8x64xf32>, vector<8x64xf32> -> vector<8x128xf32>
    %c0_32 = arith.constant 0 : index
    %c0_33 = arith.constant 0 : index
    %90 = vector.load %arg16[%c0_32, %c0_33] : memref<8x128xf32, #tpu.memory_space<vmem>>, vector<8x128xf32>
    tpu.vector_store %arg16[%c0_32, %c0_33], %89 {strides = array<i32>} : memref<8x128xf32, #tpu.memory_space<vmem>>, vector<8x128xf32>,
    %c0_34 = arith.constant 0 : index
    %c0_35 = arith.constant 0 : index
    %91 = vector.load %arg16[%c0_34, %c0_35] : memref<8x128xf32, #tpu.memory_space<vmem>>, vector<8x128xf32>
    %92 = arith.truncf %91 : vector<8x128xf32> to vector<8x128xbf16>
    %c0_36 = arith.constant 0 : index
    %c0_37 = arith.constant 0 : index
    %93 = vector.load %arg5[%c0_36, %c0_37] : memref<128x128xbf16, #tpu.memory_space<vmem>>, vector<128x128xbf16>
    %cst_38 = arith.constant dense<0.000000e+00> : vector<8x128xf32>
    %94 = tpu.matmul %92, %93, %cst_38 {dimension_numbers = #tpu.dot_dimension_numbers<[1], [0], [0], [1], [0, 0, 1, 1], [], []>} : vector<8x128xbf16>, vector<128x128xbf16>, vector<8x128xf32> -> vector<8x128xf32>
    %c0_39 = arith.constant 0 : index
    %c0_40 = arith.constant 0 : index
    %95 = vector.load %arg6[%c0_39, %c0_40] : memref<1x128xf32, #tpu.memory_space<vmem>>, vector<1x128xf32>
    %96 = vector.shape_cast %95 : vector<1x128xf32> to vector<128xf32>
    %97 = vector.shape_cast %96 : vector<128xf32> to vector<1x128xf32>
    %98 = vector.broadcast %97 : vector<1x128xf32> to vector<8x128xf32>
    %99 = arith.addf %94, %98 : vector<8x128xf32>
    %100 = arith.addf %0, %99 : vector<8x128xf32>
    %101 = arith.mulf %100, %100 : vector<8x128xf32>
    %cst_41 = arith.constant dense<0.000000e+00> : vector<8xf32>
    %102 = vector.multi_reduction <add>, %101, %cst_41 [1] : vector<8x128xf32> to vector<8xf32>
    %103 = vector.shape_cast %102 : vector<8xf32> to vector<8x1xf32>
    %cst_42 = arith.constant 1.280000e+02 : f32
    %104 = vector.broadcast %cst_42 : f32 to vector<8x1xf32>
    %105 = arith.divf %103, %104 : vector<8x1xf32>
    %cst_43 = arith.constant 9.99999997E-7 : f32
    %106 = vector.broadcast %cst_43 : f32 to vector<8x1xf32>
    %107 = arith.addf %105, %106 : vector<8x1xf32>
    %108 = math.rsqrt %107 : vector<8x1xf32>
    %109 = vector.broadcast %108 : vector<8x1xf32> to vector<8x128xf32>
    %110 = arith.mulf %100, %109 : vector<8x128xf32>
    %c0_44 = arith.constant 0 : index
    %c0_45 = arith.constant 0 : index
    %111 = vector.load %arg7[%c0_44, %c0_45] : memref<1x128xf32, #tpu.memory_space<vmem>>, vector<1x128xf32>
    %112 = vector.shape_cast %111 : vector<1x128xf32> to vector<128xf32>
    %113 = vector.shape_cast %112 : vector<128xf32> to vector<1x128xf32>
    %114 = vector.broadcast %113 : vector<1x128xf32> to vector<8x128xf32>
    %115 = arith.mulf %110, %114 : vector<8x128xf32>
    %116 = arith.truncf %115 : vector<8x128xf32> to vector<8x128xbf16>
    %c0_46 = arith.constant 0 : index
    %c0_47 = arith.constant 0 : index
    %117 = vector.load %arg8[%c0_46, %c0_47] : memref<128x512xbf16, #tpu.memory_space<vmem>>, vector<128x512xbf16>
    %cst_48 = arith.constant dense<0.000000e+00> : vector<8x512xf32>
    %118 = tpu.matmul %116, %117, %cst_48 {dimension_numbers = #tpu.dot_dimension_numbers<[1], [0], [0], [1], [0, 0, 1, 1], [], []>} : vector<8x128xbf16>, vector<128x512xbf16>, vector<8x512xf32> -> vector<8x512xf32>
    %c0_49 = arith.constant 0 : index
    %c0_50 = arith.constant 0 : index
    %119 = vector.load %arg9[%c0_49, %c0_50] : memref<1x512xf32, #tpu.memory_space<vmem>>, vector<1x512xf32>
    %120 = vector.shape_cast %119 : vector<1x512xf32> to vector<512xf32>
    %121 = vector.shape_cast %120 : vector<512xf32> to vector<1x512xf32>
    %122 = vector.broadcast %121 : vector<1x512xf32> to vector<8x512xf32>
    %123 = arith.addf %118, %122 : vector<8x512xf32>
    %cst_51 = arith.constant 0.000000e+00 : f32
    %124 = vector.broadcast %cst_51 : f32 to vector<8x512xf32>
    %125 = arith.maximumf %123, %124 : vector<8x512xf32>
    %126 = arith.mulf %125, %125 : vector<8x512xf32>
    %127 = arith.truncf %126 : vector<8x512xf32> to vector<8x512xbf16>
    %c0_52 = arith.constant 0 : index
    %c0_53 = arith.constant 0 : index
    %128 = vector.load %arg10[%c0_52, %c0_53] : memref<512x128xbf16, #tpu.memory_space<vmem>>, vector<512x128xbf16>
    %cst_54 = arith.constant dense<0.000000e+00> : vector<8x128xf32>
    %129 = tpu.matmul %127, %128, %cst_54 {dimension_numbers = #tpu.dot_dimension_numbers<[1], [0], [0], [1], [0, 0, 1, 1], [], []>} : vector<8x512xbf16>, vector<512x128xbf16>, vector<8x128xf32> -> vector<8x128xf32>
    %c0_55 = arith.constant 0 : index
    %c0_56 = arith.constant 0 : index
    %130 = vector.load %arg11[%c0_55, %c0_56] : memref<1x128xf32, #tpu.memory_space<vmem>>, vector<1x128xf32>
    %131 = vector.shape_cast %130 : vector<1x128xf32> to vector<128xf32>
    %132 = vector.shape_cast %131 : vector<128xf32> to vector<1x128xf32>
    %133 = vector.broadcast %132 : vector<1x128xf32> to vector<8x128xf32>
    %134 = arith.addf %129, %133 : vector<8x128xf32>
    %135 = arith.addf %100, %134 : vector<8x128xf32>
    %c0_57 = arith.constant 0 : index
    %c0_58 = arith.constant 0 : index
    %136 = vector.load %arg14[%c0_57, %c0_58] : memref<8x128xf32, #tpu.memory_space<vmem>>, vector<8x128xf32>
    tpu.vector_store %arg14[%c0_57, %c0_58], %135 {strides = array<i32>} : memref<8x128xf32, #tpu.memory_space<vmem>>, vector<8x128xf32>,
    return
  }
  func.func @transform_0(%arg0: i32) -> (i32, i32) {
    %c0_i32 = arith.constant 0 : i32
    %c0_i32_0 = arith.constant 0 : i32
    return %arg0, %c0_i32 : i32, i32
  }
  func.func @transform_1(%arg0: i32) -> (i32, i32) {
    %c0_i32 = arith.constant 0 : i32
    %c0_i32_0 = arith.constant 0 : i32
    %c0_i32_1 = arith.constant 0 : i32
    return %c0_i32, %c0_i32_0 : i32, i32
  }
  func.func @transform_2(%arg0: i32) -> (i32, i32) {
    %c0_i32 = arith.constant 0 : i32
    %c0_i32_0 = arith.constant 0 : i32
    %c0_i32_1 = arith.constant 0 : i32
    return %c0_i32, %c0_i32_0 : i32, i32
  }
  func.func @transform_3(%arg0: i32) -> (i32, i32) {
    %c0_i32 = arith.constant 0 : i32
    %c0_i32_0 = arith.constant 0 : i32
    %c0_i32_1 = arith.constant 0 : i32
    return %c0_i32, %c0_i32_0 : i32, i32
  }
  func.func @transform_4(%arg0: i32) -> (i32, i32) {
    %c0_i32 = arith.constant 0 : i32
    %c0_i32_0 = arith.constant 0 : i32
    %c0_i32_1 = arith.constant 0 : i32
    return %c0_i32, %c0_i32_0 : i32, i32
  }
  func.func @transform_5(%arg0: i32) -> (i32, i32) {
    %c0_i32 = arith.constant 0 : i32
    %c0_i32_0 = arith.constant 0 : i32
    %c0_i32_1 = arith.constant 0 : i32
    return %c0_i32, %c0_i32_0 : i32, i32
  }
  func.func @transform_6(%arg0: i32) -> (i32, i32) {
    %c0_i32 = arith.constant 0 : i32
    %c0_i32_0 = arith.constant 0 : i32
    %c0_i32_1 = arith.constant 0 : i32
    return %c0_i32, %c0_i32_0 : i32, i32
  }
  func.func @transform_7(%arg0: i32) -> (i32, i32) {
    %c0_i32 = arith.constant 0 : i32
    %c0_i32_0 = arith.constant 0 : i32
    %c0_i32_1 = arith.constant 0 : i32
    return %c0_i32, %c0_i32_0 : i32, i32
  }
  func.func @transform_8(%arg0: i32) -> (i32, i32) {
    %c0_i32 = arith.constant 0 : i32
    %c0_i32_0 = arith.constant 0 : i32
    %c0_i32_1 = arith.constant 0 : i32
    return %c0_i32, %c0_i32_0 : i32, i32
  }
  func.func @transform_9(%arg0: i32) -> (i32, i32) {
    %c0_i32 = arith.constant 0 : i32
    %c0_i32_0 = arith.constant 0 : i32
    %c0_i32_1 = arith.constant 0 : i32
    return %c0_i32, %c0_i32_0 : i32, i32
  }
  func.func @transform_10(%arg0: i32) -> (i32, i32) {
    %c0_i32 = arith.constant 0 : i32
    %c0_i32_0 = arith.constant 0 : i32
    %c0_i32_1 = arith.constant 0 : i32
    return %c0_i32, %c0_i32_0 : i32, i32
  }
  func.func @transform_11(%arg0: i32) -> (i32, i32) {
    %c0_i32 = arith.constant 0 : i32
    %c0_i32_0 = arith.constant 0 : i32
    %c0_i32_1 = arith.constant 0 : i32
    return %c0_i32, %c0_i32_0 : i32, i32
  }
  func.func @transform_12(%arg0: i32) -> (i32, i32) {
    %c0_i32 = arith.constant 0 : i32
    %c0_i32_0 = arith.constant 0 : i32
    %c0_i32_1 = arith.constant 0 : i32
    return %c0_i32, %c0_i32_0 : i32, i32
  }
  func.func @transform_13(%arg0: i32) -> (i32, i32) {
    %c0_i32 = arith.constant 0 : i32
    %c0_i32_0 = arith.constant 0 : i32
    return %arg0, %c0_i32 : i32, i32
  }
}

module attributes {stable_mosaic.version = 11 : i64} {
  func.func @transformer_block_kernel(%arg0: i32, %arg1: memref<8x128xf32, #tpu.memory_space<vmem>>, %arg2: memref<1x128xf32, #tpu.memory_space<vmem>>, %arg3: memref<128x384xbf16, #tpu.memory_space<vmem>>, %arg4: memref<1x384xf32, #tpu.memory_space<vmem>>, %arg5: memref<128x128xbf16, #tpu.memory_space<vmem>>, %arg6: memref<1x128xf32, #tpu.memory_space<vmem>>, %arg7: memref<1x128xf32, #tpu.memory_space<vmem>>, %arg8: memref<128x512xbf16, #tpu.memory_space<vmem>>, %arg9: memref<1x512xf32, #tpu.memory_space<vmem>>, %arg10: memref<512x128xbf16, #tpu.memory_space<vmem>>, %arg11: memref<1x128xf32, #tpu.memory_space<vmem>>, %arg12: memref<8x128xf32, #tpu.memory_space<vmem>>, %arg13: memref<8x128xf32, #tpu.memory_space<vmem>>, %arg14: memref<8x128xf32, #tpu.memory_space<vmem>>, %arg15: memref<8x384xf32, #tpu.memory_space<vmem>>, %arg16: memref<8x128xf32, #tpu.memory_space<vmem>>) attributes {dimension_semantics = [#tpu.dimension_semantics<parallel>], iteration_bounds = array<i64: 2>, scalar_prefetch = 0 : i64, scratch_operands = 2 : i64, tpu.core_type = #tpu.core_type<tc>, window_params = [{transform_indices = @transform_0, window_bounds = array<i64: 8, 128>}, {pipeline_mode = #tpu.pipeline_mode<synchronous>, transform_indices = @transform_1, window_bounds = array<i64: 1, 128>}, {pipeline_mode = #tpu.pipeline_mode<synchronous>, transform_indices = @transform_2, window_bounds = array<i64: 128, 384>}, {pipeline_mode = #tpu.pipeline_mode<synchronous>, transform_indices = @transform_3, window_bounds = array<i64: 1, 384>}, {pipeline_mode = #tpu.pipeline_mode<synchronous>, transform_indices = @transform_4, window_bounds = array<i64: 128, 128>}, {pipeline_mode = #tpu.pipeline_mode<synchronous>, transform_indices = @transform_5, window_bounds = array<i64: 1, 128>}, {pipeline_mode = #tpu.pipeline_mode<synchronous>, transform_indices = @transform_6, window_bounds = array<i64: 1, 128>}, {pipeline_mode = #tpu.pipeline_mode<synchronous>, transform_indices = @transform_7, window_bounds = array<i64: 128, 512>}, {pipeline_mode = #tpu.pipeline_mode<synchronous>, transform_indices = @transform_8, window_bounds = array<i64: 1, 512>}, {pipeline_mode = #tpu.pipeline_mode<synchronous>, transform_indices = @transform_9, window_bounds = array<i64: 512, 128>}, {pipeline_mode = #tpu.pipeline_mode<synchronous>, transform_indices = @transform_10, window_bounds = array<i64: 1, 128>}, {pipeline_mode = #tpu.pipeline_mode<synchronous>, transform_indices = @transform_11, window_bounds = array<i64: 8, 128>}, {pipeline_mode = #tpu.pipeline_mode<synchronous>, transform_indices = @transform_12, window_bounds = array<i64: 8, 128>}, {transform_indices = @transform_13, window_bounds = array<i64: 8, 128>}]} {
    %c0 = arith.constant 0 : index
    %c0_0 = arith.constant 0 : index
    %0 = vector.load %arg1[%c0, %c0_0] : memref<8x128xf32, #tpu.memory_space<vmem>>, vector<8x128xf32>
    %1 = arith.mulf %0, %0 : vector<8x128xf32>
    %cst = arith.constant dense<0.000000e+00> : vector<8xf32>
    %2 = vector.multi_reduction <add>, %1, %cst [1] : vector<8x128xf32> to vector<8xf32>
    %3 = vector.shape_cast %2 : vector<8xf32> to vector<8x1xf32>
    %cst_1 = arith.constant 1.280000e+02 : f32
    %4 = vector.broadcast %cst_1 : f32 to vector<8x1xf32>
    %5 = arith.divf %3, %4 : vector<8x1xf32>
    %cst_2 = arith.constant 9.99999997E-7 : f32
    %6 = vector.broadcast %cst_2 : f32 to vector<8x1xf32>
    %7 = arith.addf %5, %6 : vector<8x1xf32>
    %8 = math.rsqrt %7 : vector<8x1xf32>
    %9 = vector.broadcast %8 : vector<8x1xf32> to vector<8x128xf32>
    %10 = arith.mulf %0, %9 : vector<8x128xf32>
    %c0_3 = arith.constant 0 : index
    %c0_4 = arith.constant 0 : index
    %11 = vector.load %arg2[%c0_3, %c0_4] : memref<1x128xf32, #tpu.memory_space<vmem>>, vector<1x128xf32>
    %12 = vector.shape_cast %11 : vector<1x128xf32> to vector<128xf32>
    %13 = vector.shape_cast %12 : vector<128xf32> to vector<1x128xf32>
    %14 = vector.broadcast %13 : vector<1x128xf32> to vector<8x128xf32>
    %15 = arith.mulf %10, %14 : vector<8x128xf32>
    %16 = arith.truncf %15 : vector<8x128xf32> to vector<8x128xbf16>
    %c0_5 = arith.constant 0 : index
    %c0_6 = arith.constant 0 : index
    %17 = vector.load %arg3[%c0_5, %c0_6] : memref<128x384xbf16, #tpu.memory_space<vmem>>, vector<128x384xbf16>
    %cst_7 = arith.constant dense<0.000000e+00> : vector<8x384xf32>
    %18 = tpu.matmul %16, %17, %cst_7 {dimension_numbers = #tpu.dot_dimension_numbers<[1], [0], [0], [1], [0, 0, 1, 1], [], []>} : vector<8x128xbf16>, vector<128x384xbf16>, vector<8x384xf32> -> vector<8x384xf32>
    %c0_8 = arith.constant 0 : index
    %c0_9 = arith.constant 0 : index
    %19 = vector.load %arg4[%c0_8, %c0_9] : memref<1x384xf32, #tpu.memory_space<vmem>>, vector<1x384xf32>
    %20 = vector.shape_cast %19 : vector<1x384xf32> to vector<384xf32>
    %21 = vector.shape_cast %20 : vector<384xf32> to vector<1x384xf32>
    %22 = vector.broadcast %21 : vector<1x384xf32> to vector<8x384xf32>
    %23 = arith.addf %18, %22 : vector<8x384xf32>
    %c0_10 = arith.constant 0 : index
    %c0_11 = arith.constant 0 : index
    %24 = vector.load %arg12[%c0_10, %c0_11] : memref<8x128xf32, #tpu.memory_space<vmem>>, vector<8x128xf32>
    %c0_12 = arith.constant 0 : index
    %c0_13 = arith.constant 0 : index
    %25 = vector.load %arg13[%c0_12, %c0_13] : memref<8x128xf32, #tpu.memory_space<vmem>>, vector<8x128xf32>
    %26 = vector.extract_strided_slice %23 {offsets = [0, 0], sizes = [8, 128], strides = [1, 1]} : vector<8x384xf32> to vector<8x128xf32>
    %27 = vector.extract_strided_slice %23 {offsets = [0, 128], sizes = [8, 128], strides = [1, 1]} : vector<8x384xf32> to vector<8x128xf32>
    %28 = arith.mulf %26, %24 : vector<8x128xf32>
    %29 = vector.extract_strided_slice %26 {offsets = [0, 32], sizes = [8, 32], strides = [1, 1]} : vector<8x128xf32> to vector<8x32xf32>
    %30 = vector.extract_strided_slice %26 {offsets = [0, 0], sizes = [8, 32], strides = [1, 1]} : vector<8x128xf32> to vector<8x32xf32>
    %31 = vector.extract_strided_slice %26 {offsets = [0, 96], sizes = [8, 32], strides = [1, 1]} : vector<8x128xf32> to vector<8x32xf32>
    %32 = vector.extract_strided_slice %26 {offsets = [0, 64], sizes = [8, 32], strides = [1, 1]} : vector<8x128xf32> to vector<8x32xf32>
    %33 = tpu.concatenate %29, %30, %31, %32 in 1 : vector<8x32xf32>, vector<8x32xf32>, vector<8x32xf32>, vector<8x32xf32> -> vector<8x128xf32>
    %34 = arith.mulf %33, %25 : vector<8x128xf32>
    %35 = arith.addf %28, %34 : vector<8x128xf32>
    %c0_14 = arith.constant 0 : index
    %c0_15 = arith.constant 0 : index
    %36 = vector.load %arg15[%c0_14, %c0_15] : memref<8x384xf32, #tpu.memory_space<vmem>>, vector<8x128xf32>
    tpu.vector_store %arg15[%c0_14, %c0_15], %35 {strides = array<i32>} : memref<8x384xf32, #tpu.memory_space<vmem>>, vector<8x128xf32>,
    %37 = arith.mulf %27, %24 : vector<8x128xf32>
    %38 = vector.extract_strided_slice %27 {offsets = [0, 32], sizes = [8, 32], strides = [1, 1]} : vector<8x128xf32> to vector<8x32xf32>
    %39 = vector.extract_strided_slice %27 {offsets = [0, 0], sizes = [8, 32], strides = [1, 1]} : vector<8x128xf32> to vector<8x32xf32>
    %40 = vector.extract_strided_slice %27 {offsets = [0, 96], sizes = [8, 32], strides = [1, 1]} : vector<8x128xf32> to vector<8x32xf32>
    %41 = vector.extract_strided_slice %27 {offsets = [0, 64], sizes = [8, 32], strides = [1, 1]} : vector<8x128xf32> to vector<8x32xf32>
    %42 = tpu.concatenate %38, %39, %40, %41 in 1 : vector<8x32xf32>, vector<8x32xf32>, vector<8x32xf32>, vector<8x32xf32> -> vector<8x128xf32>
    %43 = arith.mulf %42, %25 : vector<8x128xf32>
    %44 = arith.addf %37, %43 : vector<8x128xf32>
    %c0_16 = arith.constant 0 : index
    %c128 = arith.constant 128 : index
    %45 = vector.load %arg15[%c0_16, %c128] : memref<8x384xf32, #tpu.memory_space<vmem>>, vector<8x128xf32>
    tpu.vector_store %arg15[%c0_16, %c128], %44 {strides = array<i32>} : memref<8x384xf32, #tpu.memory_space<vmem>>, vector<8x128xf32>,
    %46 = vector.extract_strided_slice %23 {offsets = [0, 256], sizes = [8, 128], strides = [1, 1]} : vector<8x384xf32> to vector<8x128xf32>
    %c0_17 = arith.constant 0 : index
    %c256 = arith.constant 256 : index
    %47 = vector.load %arg15[%c0_17, %c256] : memref<8x384xf32, #tpu.memory_space<vmem>>, vector<8x128xf32>
    tpu.vector_store %arg15[%c0_17, %c256], %46 {strides = array<i32>} : memref<8x384xf32, #tpu.memory_space<vmem>>, vector<8x128xf32>,
    %c0_18 = arith.constant 0 : index
    %c0_19 = arith.constant 0 : index
    %48 = vector.load %arg15[%c0_18, %c0_19] : memref<8x384xf32, #tpu.memory_space<vmem>>, vector<8x128xf32>
    %c0_20 = arith.constant 0 : index
    %c128_21 = arith.constant 128 : index
    %49 = vector.load %arg15[%c0_20, %c128_21] : memref<8x384xf32, #tpu.memory_space<vmem>>, vector<8x128xf32>
    %c0_22 = arith.constant 0 : index
    %c256_23 = arith.constant 256 : index
    %50 = vector.load %arg15[%c0_22, %c256_23] : memref<8x384xf32, #tpu.memory_space<vmem>>, vector<8x128xf32>
    %51 = vector.extract_strided_slice %48 {offsets = [0, 0], sizes = [8, 64], strides = [1, 1]} : vector<8x128xf32> to vector<8x64xf32>
    %52 = arith.truncf %51 : vector<8x64xf32> to vector<8x64xbf16>
    %53 = vector.extract_strided_slice %49 {offsets = [0, 0], sizes = [8, 64], strides = [1, 1]} : vector<8x128xf32> to vector<8x64xf32>
    %54 = arith.truncf %53 : vector<8x64xf32> to vector<8x64xbf16>
    %55 = vector.extract_strided_slice %50 {offsets = [0, 0], sizes = [8, 64], strides = [1, 1]} : vector<8x128xf32> to vector<8x64xf32>
    %56 = arith.truncf %55 : vector<8x64xf32> to vector<8x64xbf16>
    %cst_24 = arith.constant dense<0.000000e+00> : vector<8x8xf32>
    %57 = tpu.matmul %52, %54, %cst_24 {dimension_numbers = #tpu.dot_dimension_numbers<[1], [1], [0], [0], [0, 0, 1, 0], [], []>} : vector<8x64xbf16>, vector<8x64xbf16>, vector<8x8xf32> -> vector<8x8xf32>
    %cst_25 = arith.constant dense<0xFF800000> : vector<8xf32>
    %58 = vector.multi_reduction <maximumf>, %57, %cst_25 [1] : vector<8x8xf32> to vector<8xf32>
    %59 = vector.shape_cast %58 : vector<8xf32> to vector<8x1xf32>
    %60 = vector.broadcast %59 : vector<8x1xf32> to vector<8x8xf32>
    %61 = arith.subf %57, %60 : vector<8x8xf32>
    %62 = math.exp %61 : vector<8x8xf32>
    %cst_26 = arith.constant dense<0.000000e+00> : vector<8xf32>
    %63 = vector.multi_reduction <add>, %62, %cst_26 [1] : vector<8x8xf32> to vector<8xf32>
    %64 = vector.shape_cast %63 : vector<8xf32> to vector<8x1xf32>
    %65 = arith.truncf %62 : vector<8x8xf32> to vector<8x8xbf16>
    %cst_27 = arith.constant dense<0.000000e+00> : vector<8x64xf32>
    %66 = tpu.matmul %65, %56, %cst_27 {dimension_numbers = #tpu.dot_dimension_numbers<[1], [0], [0], [1], [0, 0, 1, 1], [], []>} : vector<8x8xbf16>, vector<8x64xbf16>, vector<8x64xf32> -> vector<8x64xf32>
    %67 = tpu.reciprocal %64 {approx = true} : vector<8x1xf32> -> vector<8x1xf32>
    %68 = vector.broadcast %67 : vector<8x1xf32> to vector<8x64xf32>
    %69 = arith.mulf %66, %68 : vector<8x64xf32>
    %70 = vector.extract_strided_slice %48 {offsets = [0, 64], sizes = [8, 64], strides = [1, 1]} : vector<8x128xf32> to vector<8x64xf32>
    %71 = arith.truncf %70 : vector<8x64xf32> to vector<8x64xbf16>
    %72 = vector.extract_strided_slice %49 {offsets = [0, 64], sizes = [8, 64], strides = [1, 1]} : vector<8x128xf32> to vector<8x64xf32>
    %73 = arith.truncf %72 : vector<8x64xf32> to vector<8x64xbf16>
    %74 = vector.extract_strided_slice %50 {offsets = [0, 64], sizes = [8, 64], strides = [1, 1]} : vector<8x128xf32> to vector<8x64xf32>
    %75 = arith.truncf %74 : vector<8x64xf32> to vector<8x64xbf16>
    %cst_28 = arith.constant dense<0.000000e+00> : vector<8x8xf32>
    %76 = tpu.matmul %71, %73, %cst_28 {dimension_numbers = #tpu.dot_dimension_numbers<[1], [1], [0], [0], [0, 0, 1, 0], [], []>} : vector<8x64xbf16>, vector<8x64xbf16>, vector<8x8xf32> -> vector<8x8xf32>
    %cst_29 = arith.constant dense<0xFF800000> : vector<8xf32>
    %77 = vector.multi_reduction <maximumf>, %76, %cst_29 [1] : vector<8x8xf32> to vector<8xf32>
    %78 = vector.shape_cast %77 : vector<8xf32> to vector<8x1xf32>
    %79 = vector.broadcast %78 : vector<8x1xf32> to vector<8x8xf32>
    %80 = arith.subf %76, %79 : vector<8x8xf32>
    %81 = math.exp %80 : vector<8x8xf32>
    %cst_30 = arith.constant dense<0.000000e+00> : vector<8xf32>
    %82 = vector.multi_reduction <add>, %81, %cst_30 [1] : vector<8x8xf32> to vector<8xf32>
    %83 = vector.shape_cast %82 : vector<8xf32> to vector<8x1xf32>
    %84 = arith.truncf %81 : vector<8x8xf32> to vector<8x8xbf16>
    %cst_31 = arith.constant dense<0.000000e+00> : vector<8x64xf32>
    %85 = tpu.matmul %84, %75, %cst_31 {dimension_numbers = #tpu.dot_dimension_numbers<[1], [0], [0], [1], [0, 0, 1, 1], [], []>} : vector<8x8xbf16>, vector<8x64xbf16>, vector<8x64xf32> -> vector<8x64xf32>
    %86 = tpu.reciprocal %83 {approx = true} : vector<8x1xf32> -> vector<8x1xf32>
    %87 = vector.broadcast %86 : vector<8x1xf32> to vector<8x64xf32>
    %88 = arith.mulf %85, %87 : vector<8x64xf32>
    %89 = tpu.concatenate %69, %88 in 1 : vector<8x64xf32>, vector<8x64xf32> -> vector<8x128xf32>
    %c0_32 = arith.constant 0 : index
    %c0_33 = arith.constant 0 : index
    %90 = vector.load %arg16[%c0_32, %c0_33] : memref<8x128xf32, #tpu.memory_space<vmem>>, vector<8x128xf32>
    tpu.vector_store %arg16[%c0_32, %c0_33], %89 {strides = array<i32>} : memref<8x128xf32, #tpu.memory_space<vmem>>, vector<8x128xf32>,
    %c0_34 = arith.constant 0 : index
    %c0_35 = arith.constant 0 : index
    %91 = vector.load %arg16[%c0_34, %c0_35] : memref<8x128xf32, #tpu.memory_space<vmem>>, vector<8x128xf32>
    %92 = arith.truncf %91 : vector<8x128xf32> to vector<8x128xbf16>
    %c0_36 = arith.constant 0 : index
    %c0_37 = arith.constant 0 : index
    %93 = vector.load %arg5[%c0_36, %c0_37] : memref<128x128xbf16, #tpu.memory_space<vmem>>, vector<128x128xbf16>
    %cst_38 = arith.constant dense<0.000000e+00> : vector<8x128xf32>
    %94 = tpu.matmul %92, %93, %cst_38 {dimension_numbers = #tpu.dot_dimension_numbers<[1], [0], [0], [1], [0, 0, 1, 1], [], []>} : vector<8x128xbf16>, vector<128x128xbf16>, vector<8x128xf32> -> vector<8x128xf32>
    %c0_39 = arith.constant 0 : index
    %c0_40 = arith.constant 0 : index
    %95 = vector.load %arg6[%c0_39, %c0_40] : memref<1x128xf32, #tpu.memory_space<vmem>>, vector<1x128xf32>
    %96 = vector.shape_cast %95 : vector<1x128xf32> to vector<128xf32>
    %97 = vector.shape_cast %96 : vector<128xf32> to vector<1x128xf32>
    %98 = vector.broadcast %97 : vector<1x128xf32> to vector<8x128xf32>
    %99 = arith.addf %94, %98 : vector<8x128xf32>
    %100 = arith.addf %0, %99 : vector<8x128xf32>
    %101 = arith.mulf %100, %100 : vector<8x128xf32>
    %cst_41 = arith.constant dense<0.000000e+00> : vector<8xf32>
    %102 = vector.multi_reduction <add>, %101, %cst_41 [1] : vector<8x128xf32> to vector<8xf32>
    %103 = vector.shape_cast %102 : vector<8xf32> to vector<8x1xf32>
    %cst_42 = arith.constant 1.280000e+02 : f32
    %104 = vector.broadcast %cst_42 : f32 to vector<8x1xf32>
    %105 = arith.divf %103, %104 : vector<8x1xf32>
    %cst_43 = arith.constant 9.99999997E-7 : f32
    %106 = vector.broadcast %cst_43 : f32 to vector<8x1xf32>
    %107 = arith.addf %105, %106 : vector<8x1xf32>
    %108 = math.rsqrt %107 : vector<8x1xf32>
    %109 = vector.broadcast %108 : vector<8x1xf32> to vector<8x128xf32>
    %110 = arith.mulf %100, %109 : vector<8x128xf32>
    %c0_44 = arith.constant 0 : index
    %c0_45 = arith.constant 0 : index
    %111 = vector.load %arg7[%c0_44, %c0_45] : memref<1x128xf32, #tpu.memory_space<vmem>>, vector<1x128xf32>
    %112 = vector.shape_cast %111 : vector<1x128xf32> to vector<128xf32>
    %113 = vector.shape_cast %112 : vector<128xf32> to vector<1x128xf32>
    %114 = vector.broadcast %113 : vector<1x128xf32> to vector<8x128xf32>
    %115 = arith.mulf %110, %114 : vector<8x128xf32>
    %116 = arith.truncf %115 : vector<8x128xf32> to vector<8x128xbf16>
    %c0_46 = arith.constant 0 : index
    %c0_47 = arith.constant 0 : index
    %117 = vector.load %arg8[%c0_46, %c0_47] : memref<128x512xbf16, #tpu.memory_space<vmem>>, vector<128x512xbf16>
    %cst_48 = arith.constant dense<0.000000e+00> : vector<8x512xf32>
    %118 = tpu.matmul %116, %117, %cst_48 {dimension_numbers = #tpu.dot_dimension_numbers<[1], [0], [0], [1], [0, 0, 1, 1], [], []>} : vector<8x128xbf16>, vector<128x512xbf16>, vector<8x512xf32> -> vector<8x512xf32>
    %c0_49 = arith.constant 0 : index
    %c0_50 = arith.constant 0 : index
    %119 = vector.load %arg9[%c0_49, %c0_50] : memref<1x512xf32, #tpu.memory_space<vmem>>, vector<1x512xf32>
    %120 = vector.shape_cast %119 : vector<1x512xf32> to vector<512xf32>
    %121 = vector.shape_cast %120 : vector<512xf32> to vector<1x512xf32>
    %122 = vector.broadcast %121 : vector<1x512xf32> to vector<8x512xf32>
    %123 = arith.addf %118, %122 : vector<8x512xf32>
    %cst_51 = arith.constant 0.000000e+00 : f32
    %124 = vector.broadcast %cst_51 : f32 to vector<8x512xf32>
    %125 = arith.maximumf %123, %124 : vector<8x512xf32>
    %126 = arith.mulf %125, %125 : vector<8x512xf32>
    %127 = arith.truncf %126 : vector<8x512xf32> to vector<8x512xbf16>
    %c0_52 = arith.constant 0 : index
    %c0_53 = arith.constant 0 : index
    %128 = vector.load %arg10[%c0_52, %c0_53] : memref<512x128xbf16, #tpu.memory_space<vmem>>, vector<512x128xbf16>
    %cst_54 = arith.constant dense<0.000000e+00> : vector<8x128xf32>
    %129 = tpu.matmul %127, %128, %cst_54 {dimension_numbers = #tpu.dot_dimension_numbers<[1], [0], [0], [1], [0, 0, 1, 1], [], []>} : vector<8x512xbf16>, vector<512x128xbf16>, vector<8x128xf32> -> vector<8x128xf32>
    %c0_55 = arith.constant 0 : index
    %c0_56 = arith.constant 0 : index
    %130 = vector.load %arg11[%c0_55, %c0_56] : memref<1x128xf32, #tpu.memory_space<vmem>>, vector<1x128xf32>
    %131 = vector.shape_cast %130 : vector<1x128xf32> to vector<128xf32>
    %132 = vector.shape_cast %131 : vector<128xf32> to vector<1x128xf32>
    %133 = vector.broadcast %132 : vector<1x128xf32> to vector<8x128xf32>
    %134 = arith.addf %129, %133 : vector<8x128xf32>
    %135 = arith.addf %100, %134 : vector<8x128xf32>
    %c0_57 = arith.constant 0 : index
    %c0_58 = arith.constant 0 : index
    %136 = vector.load %arg14[%c0_57, %c0_58] : memref<8x128xf32, #tpu.memory_space<vmem>>, vector<8x128xf32>
    tpu.vector_store %arg14[%c0_57, %c0_58], %135 {strides = array<i32>} : memref<8x128xf32, #tpu.memory_space<vmem>>, vector<8x128xf32>,
    return
  }
  func.func @transform_0(%arg0: i32) -> (i32, i32) {
    %c0_i32 = arith.constant 0 : i32
    %c0_i32_0 = arith.constant 0 : i32
    return %arg0, %c0_i32 : i32, i32
  }
  func.func @transform_1(%arg0: i32) -> (i32, i32) {
    %c0_i32 = arith.constant 0 : i32
    %c0_i32_0 = arith.constant 0 : i32
    %c0_i32_1 = arith.constant 0 : i32
    return %c0_i32, %c0_i32_0 : i32, i32
  }
  func.func @transform_2(%arg0: i32) -> (i32, i32) {
    %c0_i32 = arith.constant 0 : i32
    %c0_i32_0 = arith.constant 0 : i32
    %c0_i32_1 = arith.constant 0 : i32
    return %c0_i32, %c0_i32_0 : i32, i32
  }
  func.func @transform_3(%arg0: i32) -> (i32, i32) {
    %c0_i32 = arith.constant 0 : i32
    %c0_i32_0 = arith.constant 0 : i32
    %c0_i32_1 = arith.constant 0 : i32
    return %c0_i32, %c0_i32_0 : i32, i32
  }
  func.func @transform_4(%arg0: i32) -> (i32, i32) {
    %c0_i32 = arith.constant 0 : i32
    %c0_i32_0 = arith.constant 0 : i32
    %c0_i32_1 = arith.constant 0 : i32
    return %c0_i32, %c0_i32_0 : i32, i32
  }
  func.func @transform_5(%arg0: i32) -> (i32, i32) {
    %c0_i32 = arith.constant 0 : i32
    %c0_i32_0 = arith.constant 0 : i32
    %c0_i32_1 = arith.constant 0 : i32
    return %c0_i32, %c0_i32_0 : i32, i32
  }
  func.func @transform_6(%arg0: i32) -> (i32, i32) {
    %c0_i32 = arith.constant 0 : i32
    %c0_i32_0 = arith.constant 0 : i32
    %c0_i32_1 = arith.constant 0 : i32
    return %c0_i32, %c0_i32_0 : i32, i32
  }
  func.func @transform_7(%arg0: i32) -> (i32, i32) {
    %c0_i32 = arith.constant 0 : i32
    %c0_i32_0 = arith.constant 0 : i32
    %c0_i32_1 = arith.constant 0 : i32
    return %c0_i32, %c0_i32_0 : i32, i32
  }
  func.func @transform_8(%arg0: i32) -> (i32, i32) {
    %c0_i32 = arith.constant 0 : i32
    %c0_i32_0 = arith.constant 0 : i32
    %c0_i32_1 = arith.constant 0 : i32
    return %c0_i32, %c0_i32_0 : i32, i32
  }
  func.func @transform_9(%arg0: i32) -> (i32, i32) {
    %c0_i32 = arith.constant 0 : i32
    %c0_i32_0 = arith.constant 0 : i32
    %c0_i32_1 = arith.constant 0 : i32
    return %c0_i32, %c0_i32_0 : i32, i32
  }
  func.func @transform_10(%arg0: i32) -> (i32, i32) {
    %c0_i32 = arith.constant 0 : i32
    %c0_i32_0 = arith.constant 0 : i32
    %c0_i32_1 = arith.constant 0 : i32
    return %c0_i32, %c0_i32_0 : i32, i32
  }
  func.func @transform_11(%arg0: i32) -> (i32, i32) {
    %c0_i32 = arith.constant 0 : i32
    %c0_i32_0 = arith.constant 0 : i32
    %c0_i32_1 = arith.constant 0 : i32
    return %c0_i32, %c0_i32_0 : i32, i32
  }
  func.func @transform_12(%arg0: i32) -> (i32, i32) {
    %c0_i32 = arith.constant 0 : i32
    %c0_i32_0 = arith.constant 0 : i32
    %c0_i32_1 = arith.constant 0 : i32
    return %c0_i32, %c0_i32_0 : i32, i32
  }
  func.func @transform_13(%arg0: i32) -> (i32, i32) {
    %c0_i32 = arith.constant 0 : i32
    %c0_i32_0 = arith.constant 0 : i32
    return %arg0, %c0_i32 : i32, i32
  }
}

</mosaic_0001>

<llo_original>
// kernel: tpu_custom_call.1
$region0: #{tpu_custom_call.1}
  #allocation0 [shape = 'u32[]', space=smem, size = 0x4, offset = 0x4, fixed_abs, tag = 'smem constant byte address 0x4 - core index']
  #allocation1 [shape = 'u32[72,128]{1,0:T(1,128)}', space=vmem, size = 0x9000, scoped, tag = 'internal scratch']
  #allocation2 [shape = 'f32[8,384]{1,0:T(8,128)}', space=vmem, size = 0x3000, scoped, tag = 'scratch operand']
  #allocation3 [shape = 'f32[8,128]{1,0:T(8,128)}', space=vmem, size = 0x1000, scoped, tag = 'scratch operand']
  %s0 = inlined_call_operand.hbm [shape: f32[16,128], index: 0, kind: input, shape index: {}]
  %s1 = inlined_call_operand.hbm [shape: f32[1,128], index: 1, kind: input, shape index: {}]
  %s2 = inlined_call_operand.hbm [shape: bf16[128,384], index: 2, kind: input, shape index: {}]
  %s3 = inlined_call_operand.hbm [shape: f32[1,384], index: 3, kind: input, shape index: {}]
  %s4 = inlined_call_operand.hbm [shape: bf16[128,128], index: 4, kind: input, shape index: {}]
  %s5 = inlined_call_operand.vmem [shape: f32[1,128], index: 5, kind: input, shape index: {}]
  %s6 = inlined_call_operand.vmem [shape: f32[1,128], index: 6, kind: input, shape index: {}]
  %s7 = inlined_call_operand.hbm [shape: bf16[128,512], index: 7, kind: input, shape index: {}]
  %s8 = inlined_call_operand.hbm [shape: f32[1,512], index: 8, kind: input, shape index: {}]
  %s9 = inlined_call_operand.hbm [shape: bf16[512,128], index: 9, kind: input, shape index: {}]
  %s10 = inlined_call_operand.hbm [shape: f32[1,128], index: 10, kind: input, shape index: {}]
  %s11 = inlined_call_operand.vmem [shape: f32[8,128], index: 11, kind: input, shape index: {}]
  %s12 = inlined_call_operand.hbm [shape: f32[8,128], index: 12, kind: input, shape index: {}]
  %s13 = inlined_call_operand.hbm [shape: f32[16,128], index: 13, kind: output, shape index: {}]
  %s14 = sld [smem:[#allocation0]]
  $region125: #{tpu_custom_call.1} parent=0
    _
  %s16 = ssub.s32 1, %s14
  %s17 = scalar_select 0, %s16, %s14
  $region1: #{tpu_custom_call.1} parent=0
    #allocation4 [shape = 'u8[8192]{0}', space=vmem, size = 0x2000, scoped, tag = 'input window, operand 0']
    #allocation5 [shape = 's32[2]{0}', space=sflag, size = 0x8, scoped, tag = 'scoped memory for tpu_custom_call.1']
    #allocation6 [shape = 's32[2]{0}', space=sflag, size = 0x8, scoped, tag = 'scoped memory for tpu_custom_call.1']
    #allocation7 [shape = 'u8[512]{0}', space=vmem, size = 0x400, scoped, tag = 'input window, operand 1, single buffered']
    #allocation8 [shape = 's32[1]{0}', space=sflag, size = 0x4, scoped, tag = 'scoped memory for tpu_custom_call.1']
    #allocation9 [shape = 'u8[98304]{0}', space=vmem, size = 0x18000, scoped, tag = 'input window, operand 2, single buffered']
    #allocation10 [shape = 'u8[1536]{0}', space=vmem, size = 0x800, scoped, tag = 'input window, operand 3, single buffered']
    #allocation11 [shape = 's32[1]{0}', space=sflag, size = 0x4, scoped, tag = 'scoped memory for tpu_custom_call.1']
    #allocation12 [shape = 'u8[32768]{0}', space=vmem, size = 0x8000, scoped, tag = 'input window, operand 4, single buffered']
    #allocation13 [shape = 'u8[131072]{0}', space=vmem, size = 0x20000, scoped, tag = 'input window, operand 7, single buffered']
    #allocation14 [shape = 's32[1]{0}', space=sflag, size = 0x4, scoped, tag = 'scoped memory for tpu_custom_call.1']
    #allocation15 [shape = 'u8[2048]{0}', space=vmem, size = 0x800, scoped, tag = 'input window, operand 8, single buffered']
    #allocation16 [shape = 'u8[131072]{0}', space=vmem, size = 0x20000, scoped, tag = 'input window, operand 9, single buffered']
    #allocation17 [shape = 's32[1]{0}', space=sflag, size = 0x4, scoped, tag = 'scoped memory for tpu_custom_call.1']
    #allocation18 [shape = 'u8[512]{0}', space=vmem, size = 0x400, scoped, tag = 'input window, operand 10, single buffered']
    #allocation19 [shape = 'u8[4096]{0}', space=vmem, size = 0x1000, scoped, tag = 'input window, operand 12, single buffered']
    #allocation20 [shape = 's32[1]{0}', space=sflag, size = 0x4, scoped, tag = 'scoped memory for tpu_custom_call.1']
    #allocation21 [shape = 'u8[8192]{0}', space=vmem, size = 0x2000, scoped, tag = 'output window, operand 0']
    %18 = vsyncpa [#allocation5], 0
    %s19 = scalar_lea.sflag [#allocation5], 1
    %20 = vsyncpa %s19, 0
    %21 = vsyncpa [#allocation8], 0
    %22 = vsyncpa [#allocation11], 0
    %23 = vsyncpa [#allocation14], 0
    %24 = vsyncpa [#allocation17], 0
    %25 = vsyncpa [#allocation20], 0
    %26 = vsyncpa [#allocation6], 0
    %s27 = scalar_lea.sflag [#allocation6], 1
    %28 = vsyncpa %s27, 0
    loop: start=0, step=1, limit=4
    $region2: #{tpu_custom_call.1} parent=1 // loop_pre_header
      _
    $region3: #{tpu_custom_call.1} parent=1 // loop_header
      %s30 = sphi 0, %s34
      %p31 = scmp.ge.s32.totalorder %s30, 4
      %s40 = sphi 0, %s42
      %s43 = sphi 0, %s40
      %s44 = sphi 0, %s43
      %s60 = sphi 0, %s44
      %s64 = sphi 0, %s64
      %s66 = sphi 0, %s64
      %s67 = sphi 0, %s66
      %s81 = sphi 0, %s67
      %s85 = sphi 0, %s85
      %s87 = sphi 0, %s85
      %s88 = sphi 0, %s87
      %s102 = sphi 0, %s88
      %s106 = sphi 0, %s106
      %s108 = sphi 0, %s106
      %s109 = sphi 0, %s108
      %s123 = sphi 0, %s109
      %s127 = sphi 0, %s127
      %s129 = sphi 0, %s127
      %s130 = sphi 0, %s129
      %s144 = sphi 0, %s130
      %s148 = sphi 0, %s148
      %s150 = sphi 0, %s148
      %s151 = sphi 0, %s150
      %s165 = sphi 0, %s151
      %s169 = sphi 0, %s169
      %s171 = sphi 0, %s169
      %s172 = sphi 0, %s171
      %s186 = sphi 0, %s172
      %s190 = sphi 0, %s190
      %s192 = sphi 0, %s190
      %s193 = sphi 0, %s192
      %s207 = sphi 0, %s193
      %s211 = sphi 0, %s211
      %s213 = sphi 0, %s211
      %s214 = sphi 0, %s213
      %s228 = sphi 0, %s214
      %s232 = sphi 0, %s232
      %s234 = sphi 0, %s232
      %s235 = sphi 0, %s234
      %s249 = sphi 0, %s235
      %s253 = sphi 0, %s253
      %s255 = sphi 0, %s253
      %s256 = sphi 0, %s255
      %s270 = sphi 0, %s256
      %s274 = sphi 0, %s274
      %s276 = sphi 0, %s274
      %s277 = sphi 0, %s276
      %s291 = sphi 0, %s277
      %s295 = sphi 0, %s295
      %s297 = sphi 0, %s295
      %s298 = sphi 0, %s297
      %s312 = sphi 0, %s298
      %s318 = sphi 0, %s320
      %s321 = sphi 0, %s318
      %s322 = sphi 0, %s321
      %s338 = sphi 0, %s322
    $region4: #{tpu_custom_call.1} parent=1 // loop_header_branch
      %33 = sbr.rel (%p31) target = $region8
    $region5: #{tpu_custom_call.1} parent=1 // loop_body
      %s35 = ssub.s32 %s30, 1
      %s36 = ssub.s32 %s30, 2
      %s37 = sadd.s32 %s30, 1
      %s38 = ssub.s32 %s30, %s37
      %p39 = scmp.eq.s32.totalorder %s38, 0
      %s41 = sadd.s32 %s40, 1
      %s42 = scalar_select %p39, %s40, %s41
      %p45 = pneg %p39
      %p46 = scmp.eq.s32.totalorder %s30, 1
      %p47 = por %p45, %p46
      %p48 = scmp.ne.s32.totalorder %s40, %s43
      %p49 = scmp.eq.s32.totalorder %s30, 0
      %p50 = por %p48, %p49
      %p51 = scmp.ne.s32.totalorder %s40, %s43
      %p52 = scmp.eq.s32.totalorder %s35, 1
      %p53 = por %p51, %p52
      %p54 = scmp.ne.s32.totalorder %s43, %s44
      %p55 = scmp.eq.s32.totalorder %s35, 0
      %p56 = por %p54, %p55
      %p57 = scmp.ne.s32.totalorder %s43, %s44
      %p58 = scmp.eq.s32.totalorder %s36, 1
      %p59 = por %p57, %p58
      %p61 = scmp.ne.s32.totalorder %s44, %s60
      %p62 = scmp.eq.s32.totalorder %s36, 0
      %p63 = por %p61, %p62
      %s65 = sadd.s32 %s64, 1
      %p68 = scmp.eq.s32.totalorder %s30, 1
      %p69 = scmp.ne.s32.totalorder %s64, %s66
      %p70 = scmp.eq.s32.totalorder %s30, 0
      %p71 = por %p69, %p70
      %p72 = scmp.ne.s32.totalorder %s64, %s66
      %p73 = scmp.eq.s32.totalorder %s35, 1
      %p74 = por %p72, %p73
      %p75 = scmp.ne.s32.totalorder %s66, %s67
      %p76 = scmp.eq.s32.totalorder %s35, 0
      %p77 = por %p75, %p76
      %p78 = scmp.ne.s32.totalorder %s66, %s67
      %p79 = scmp.eq.s32.totalorder %s36, 1
      %p80 = por %p78, %p79
      %p82 = scmp.ne.s32.totalorder %s67, %s81
      %p83 = scmp.eq.s32.totalorder %s36, 0
      %p84 = por %p82, %p83
      %s86 = sadd.s32 %s85, 1
      %p89 = scmp.eq.s32.totalorder %s30, 1
      %p90 = scmp.ne.s32.totalorder %s85, %s87
      %p91 = scmp.eq.s32.totalorder %s30, 0
      %p92 = por %p90, %p91
      %p93 = scmp.ne.s32.totalorder %s85, %s87
      %p94 = scmp.eq.s32.totalorder %s35, 1
      %p95 = por %p93, %p94
      %p96 = scmp.ne.s32.totalorder %s87, %s88
      %p97 = scmp.eq.s32.totalorder %s35, 0
      %p98 = por %p96, %p97
      %p99 = scmp.ne.s32.totalorder %s87, %s88
      %p100 = scmp.eq.s32.totalorder %s36, 1
      %p101 = por %p99, %p100
      %p103 = scmp.ne.s32.totalorder %s88, %s102
      %p104 = scmp.eq.s32.totalorder %s36, 0
      %p105 = por %p103, %p104
      %s107 = sadd.s32 %s106, 1
      %p110 = scmp.eq.s32.totalorder %s30, 1
      %p111 = scmp.ne.s32.totalorder %s106, %s108
      %p112 = scmp.eq.s32.totalorder %s30, 0
      %p113 = por %p111, %p112
      %p114 = scmp.ne.s32.totalorder %s106, %s108
      %p115 = scmp.eq.s32.totalorder %s35, 1
      %p116 = por %p114, %p115
      %p117 = scmp.ne.s32.totalorder %s108, %s109
      %p118 = scmp.eq.s32.totalorder %s35, 0
      %p119 = por %p117, %p118
      %p120 = scmp.ne.s32.totalorder %s108, %s109
      %p121 = scmp.eq.s32.totalorder %s36, 1
      %p122 = por %p120, %p121
      %p124 = scmp.ne.s32.totalorder %s109, %s123
      %p125 = scmp.eq.s32.totalorder %s36, 0
      %p126 = por %p124, %p125
      %s128 = sadd.s32 %s127, 1
      %p131 = scmp.eq.s32.totalorder %s30, 1
      %p132 = scmp.ne.s32.totalorder %s127, %s129
      %p133 = scmp.eq.s32.totalorder %s30, 0
      %p134 = por %p132, %p133
      %p135 = scmp.ne.s32.totalorder %s127, %s129
      %p136 = scmp.eq.s32.totalorder %s35, 1
      %p137 = por %p135, %p136
      %p138 = scmp.ne.s32.totalorder %s129, %s130
      %p139 = scmp.eq.s32.totalorder %s35, 0
      %p140 = por %p138, %p139
      %p141 = scmp.ne.s32.totalorder %s129, %s130
      %p142 = scmp.eq.s32.totalorder %s36, 1
      %p143 = por %p141, %p142
      %p145 = scmp.ne.s32.totalorder %s130, %s144
      %p146 = scmp.eq.s32.totalorder %s36, 0
      %p147 = por %p145, %p146
      %s149 = sadd.s32 %s148, 1
      %p152 = scmp.eq.s32.totalorder %s30, 1
      %p153 = scmp.ne.s32.totalorder %s148, %s150
      %p154 = scmp.eq.s32.totalorder %s30, 0
      %p155 = por %p153, %p154
      %p156 = scmp.ne.s32.totalorder %s148, %s150
      %p157 = scmp.eq.s32.totalorder %s35, 1
      %p158 = por %p156, %p157
      %p159 = scmp.ne.s32.totalorder %s150, %s151
      %p160 = scmp.eq.s32.totalorder %s35, 0
      %p161 = por %p159, %p160
      %p162 = scmp.ne.s32.totalorder %s150, %s151
      %p163 = scmp.eq.s32.totalorder %s36, 1
      %p164 = por %p162, %p163
      %p166 = scmp.ne.s32.totalorder %s151, %s165
      %p167 = scmp.eq.s32.totalorder %s36, 0
      %p168 = por %p166, %p167
      %s170 = sadd.s32 %s169, 1
      %p173 = scmp.eq.s32.totalorder %s30, 1
      %p174 = scmp.ne.s32.totalorder %s169, %s171
      %p175 = scmp.eq.s32.totalorder %s30, 0
      %p176 = por %p174, %p175
      %p177 = scmp.ne.s32.totalorder %s169, %s171
      %p178 = scmp.eq.s32.totalorder %s35, 1
      %p179 = por %p177, %p178
      %p180 = scmp.ne.s32.totalorder %s171, %s172
      %p181 = scmp.eq.s32.totalorder %s35, 0
      %p182 = por %p180, %p181
      %p183 = scmp.ne.s32.totalorder %s171, %s172
      %p184 = scmp.eq.s32.totalorder %s36, 1
      %p185 = por %p183, %p184
      %p187 = scmp.ne.s32.totalorder %s172, %s186
      %p188 = scmp.eq.s32.totalorder %s36, 0
      %p189 = por %p187, %p188
      %s191 = sadd.s32 %s190, 1
      %p194 = scmp.eq.s32.totalorder %s30, 1
      %p195 = scmp.ne.s32.totalorder %s190, %s192
      %p196 = scmp.eq.s32.totalorder %s30, 0
      %p197 = por %p195, %p196
      %p198 = scmp.ne.s32.totalorder %s190, %s192
      %p199 = scmp.eq.s32.totalorder %s35, 1
      %p200 = por %p198, %p199
      %p201 = scmp.ne.s32.totalorder %s192, %s193
      %p202 = scmp.eq.s32.totalorder %s35, 0
      %p203 = por %p201, %p202
      %p204 = scmp.ne.s32.totalorder %s192, %s193
      %p205 = scmp.eq.s32.totalorder %s36, 1
      %p206 = por %p204, %p205
      %p208 = scmp.ne.s32.totalorder %s193, %s207
      %p209 = scmp.eq.s32.totalorder %s36, 0
      %p210 = por %p208, %p209
      %s212 = sadd.s32 %s211, 1
      %p215 = scmp.eq.s32.totalorder %s30, 1
      %p216 = scmp.ne.s32.totalorder %s211, %s213
      %p217 = scmp.eq.s32.totalorder %s30, 0
      %p218 = por %p216, %p217
      %p219 = scmp.ne.s32.totalorder %s211, %s213
      %p220 = scmp.eq.s32.totalorder %s35, 1
      %p221 = por %p219, %p220
      %p222 = scmp.ne.s32.totalorder %s213, %s214
      %p223 = scmp.eq.s32.totalorder %s35, 0
      %p224 = por %p222, %p223
      %p225 = scmp.ne.s32.totalorder %s213, %s214
      %p226 = scmp.eq.s32.totalorder %s36, 1
      %p227 = por %p225, %p226
      %p229 = scmp.ne.s32.totalorder %s214, %s228
      %p230 = scmp.eq.s32.totalorder %s36, 0
      %p231 = por %p229, %p230
      %s233 = sadd.s32 %s232, 1
      %p236 = scmp.eq.s32.totalorder %s30, 1
      %p237 = scmp.ne.s32.totalorder %s232, %s234
      %p238 = scmp.eq.s32.totalorder %s30, 0
      %p239 = por %p237, %p238
      %p240 = scmp.ne.s32.totalorder %s232, %s234
      %p241 = scmp.eq.s32.totalorder %s35, 1
      %p242 = por %p240, %p241
      %p243 = scmp.ne.s32.totalorder %s234, %s235
      %p244 = scmp.eq.s32.totalorder %s35, 0
      %p245 = por %p243, %p244
      %p246 = scmp.ne.s32.totalorder %s234, %s235
      %p247 = scmp.eq.s32.totalorder %s36, 1
      %p248 = por %p246, %p247
      %p250 = scmp.ne.s32.totalorder %s235, %s249
      %p251 = scmp.eq.s32.totalorder %s36, 0
      %p252 = por %p250, %p251
      %s254 = sadd.s32 %s253, 1
      %p257 = scmp.eq.s32.totalorder %s30, 1
      %p258 = scmp.ne.s32.totalorder %s253, %s255
      %p259 = scmp.eq.s32.totalorder %s30, 0
      %p260 = por %p258, %p259
      %p261 = scmp.ne.s32.totalorder %s253, %s255
      %p262 = scmp.eq.s32.totalorder %s35, 1
      %p263 = por %p261, %p262
      %p264 = scmp.ne.s32.totalorder %s255, %s256
      %p265 = scmp.eq.s32.totalorder %s35, 0
      %p266 = por %p264, %p265
      %p267 = scmp.ne.s32.totalorder %s255, %s256
      %p268 = scmp.eq.s32.totalorder %s36, 1
      %p269 = por %p267, %p268
      %p271 = scmp.ne.s32.totalorder %s256, %s270
      %p272 = scmp.eq.s32.totalorder %s36, 0
      %p273 = por %p271, %p272
      %s275 = sadd.s32 %s274, 1
      %p278 = scmp.eq.s32.totalorder %s30, 1
      %p279 = scmp.ne.s32.totalorder %s274, %s276
      %p280 = scmp.eq.s32.totalorder %s30, 0
      %p281 = por %p279, %p280
      %p282 = scmp.ne.s32.totalorder %s274, %s276
      %p283 = scmp.eq.s32.totalorder %s35, 1
      %p284 = por %p282, %p283
      %p285 = scmp.ne.s32.totalorder %s276, %s277
      %p286 = scmp.eq.s32.totalorder %s35, 0
      %p287 = por %p285, %p286
      %p288 = scmp.ne.s32.totalorder %s276, %s277
      %p289 = scmp.eq.s32.totalorder %s36, 1
      %p290 = por %p288, %p289
      %p292 = scmp.ne.s32.totalorder %s277, %s291
      %p293 = scmp.eq.s32.totalorder %s36, 0
      %p294 = por %p292, %p293
      %s296 = sadd.s32 %s295, 1
      %p299 = scmp.eq.s32.totalorder %s30, 1
      %p300 = scmp.ne.s32.totalorder %s295, %s297
      %p301 = scmp.eq.s32.totalorder %s30, 0
      %p302 = por %p300, %p301
      %p303 = scmp.ne.s32.totalorder %s295, %s297
      %p304 = scmp.eq.s32.totalorder %s35, 1
      %p305 = por %p303, %p304
      %p306 = scmp.ne.s32.totalorder %s297, %s298
      %p307 = scmp.eq.s32.totalorder %s35, 0
      %p308 = por %p306, %p307
      %p309 = scmp.ne.s32.totalorder %s297, %s298
      %p310 = scmp.eq.s32.totalorder %s36, 1
      %p311 = por %p309, %p310
      %p313 = scmp.ne.s32.totalorder %s298, %s312
      %p314 = scmp.eq.s32.totalorder %s36, 0
      %p315 = por %p313, %p314
      %s316 = ssub.s32 %s30, %s37
      %p317 = scmp.eq.s32.totalorder %s316, 0
      %s319 = sadd.s32 %s318, 1
      %s320 = scalar_select %p317, %s318, %s319
      %p323 = pneg %p317
      %p324 = scmp.eq.s32.totalorder %s30, 1
      %p325 = por %p323, %p324
      %p326 = scmp.ne.s32.totalorder %s318, %s321
      %p327 = scmp.eq.s32.totalorder %s30, 0
      %p328 = por %p326, %p327
      %p329 = scmp.ne.s32.totalorder %s318, %s321
      %p330 = scmp.eq.s32.totalorder %s35, 1
      %p331 = por %p329, %p330
      %p332 = scmp.ne.s32.totalorder %s321, %s322
      %p333 = scmp.eq.s32.totalorder %s35, 0
      %p334 = por %p332, %p333
      %p335 = scmp.ne.s32.totalorder %s321, %s322
      %p336 = scmp.eq.s32.totalorder %s36, 1
      %p337 = por %p335, %p336
      %p339 = scmp.ne.s32.totalorder %s322, %s338
      %p340 = scmp.eq.s32.totalorder %s36, 0
      %p341 = por %p339, %p340
      %p342 = scmp.le.s32.totalorder 1, %s30
      %p343 = scmp.lt.s32.totalorder %s30, 3
      %p344 = pnand %p342, %p343
      %p345 = pneg %p344
      // Predicated region
      $region9: #{tpu_custom_call.1} parent=5 // pred_check
        _
      $region10: #{tpu_custom_call.1} parent=5 // pred_check_branch
        %347 = sbr.rel (%p344) target = $region12
      $region11: #{tpu_custom_call.1} parent=5 // pred_region
        %s348 = ssub.s32 %s30, 1
        // Predicated region
        $region13: #{tpu_custom_call.1} parent=11 // pred_check
          %p349 = pneg %p77
        $region14: #{tpu_custom_call.1} parent=11 // pred_check_branch
          %351 = sbr.rel (%p349) target = $region16
        $region15: #{tpu_custom_call.1} parent=11 // pred_region
          %353 = vsyncadd [#allocation8], 0
          %s355 = sshll.u32 %s1, 4
          %s356 = int_to_ptr.hbm [resolvable:$true] %s355
          %s357 = sshll.u32 [#allocation7], 4
          %s358 = int_to_ptr.vmem [resolvable:$true] %s357
          %360 = dma.hbm_to_vmem [thread:$0]  %s356, 16, %s358, [#allocation8]
        $region16: #{tpu_custom_call.1} parent=11 // pred_fallthru
          _
        // Predicated region
        $region17: #{tpu_custom_call.1} parent=11 // pred_check
          %p361 = pneg %p98
        $region18: #{tpu_custom_call.1} parent=11 // pred_check_branch
          %363 = sbr.rel (%p361) target = $region20
        $region19: #{tpu_custom_call.1} parent=11 // pred_region
          %365 = vsyncadd [#allocation8], 0
          %s366 = sshll.u32 %s2, 4
          %s367 = int_to_ptr.hbm [resolvable:$true] %s366
          %s368 = sshll.u32 [#allocation9], 4
          %s369 = int_to_ptr.vmem [resolvable:$true] %s368
          %374 = dma.hbm_to_vmem [thread:$0]  %s367, 3072, %s369, [#allocation8], 192, 192, 12
        $region20: #{tpu_custom_call.1} parent=11 // pred_fallthru
          _
        // Predicated region
        $region21: #{tpu_custom_call.1} parent=11 // pred_check
          %p375 = pneg %p119
        $region22: #{tpu_custom_call.1} parent=11 // pred_check_branch
          %377 = sbr.rel (%p375) target = $region24
        $region23: #{tpu_custom_call.1} parent=11 // pred_region
          %379 = vsyncadd [#allocation11], 0
          %s381 = sshll.u32 %s3, 4
          %s382 = int_to_ptr.hbm [resolvable:$true] %s381
          %s383 = sshll.u32 [#allocation10], 4
          %s384 = int_to_ptr.vmem [resolvable:$true] %s383
          %386 = dma.hbm_to_vmem [thread:$0]  %s382, 48, %s384, [#allocation11]
        $region24: #{tpu_custom_call.1} parent=11 // pred_fallthru
          _
        // Predicated region
        $region25: #{tpu_custom_call.1} parent=11 // pred_check
          %p387 = pneg %p140
        $region26: #{tpu_custom_call.1} parent=11 // pred_check_branch
          %389 = sbr.rel (%p387) target = $region28
        $region27: #{tpu_custom_call.1} parent=11 // pred_region
          %391 = vsyncadd [#allocation11], 0
          %s392 = sshll.u32 %s4, 4
          %s393 = int_to_ptr.hbm [resolvable:$true] %s392
          %s394 = sshll.u32 [#allocation12], 4
          %s395 = int_to_ptr.vmem [resolvable:$true] %s394
          %400 = dma.hbm_to_vmem [thread:$0]  %s393, 1024, %s395, [#allocation11], 64, 64, 4
        $region28: #{tpu_custom_call.1} parent=11 // pred_fallthru
          _
        // Predicated region
        $region29: #{tpu_custom_call.1} parent=11 // pred_check
          %p401 = pneg %p161
        $region30: #{tpu_custom_call.1} parent=11 // pred_check_branch
          %403 = sbr.rel (%p401) target = $region32
        $region31: #{tpu_custom_call.1} parent=11 // pred_region
          _
        $region32: #{tpu_custom_call.1} parent=11 // pred_fallthru
          _
        // Predicated region
        $region33: #{tpu_custom_call.1} parent=11 // pred_check
          %p404 = pneg %p182
        $region34: #{tpu_custom_call.1} parent=11 // pred_check_branch
          %406 = sbr.rel (%p404) target = $region36
        $region35: #{tpu_custom_call.1} parent=11 // pred_region
          _
        $region36: #{tpu_custom_call.1} parent=11 // pred_fallthru
          _
        // Predicated region
        $region37: #{tpu_custom_call.1} parent=11 // pred_check
          %p407 = pneg %p203
        $region38: #{tpu_custom_call.1} parent=11 // pred_check_branch
          %409 = sbr.rel (%p407) target = $region40
        $region39: #{tpu_custom_call.1} parent=11 // pred_region
          %411 = vsyncadd [#allocation14], 0
          %s412 = sshll.u32 %s7, 4
          %s413 = int_to_ptr.hbm [resolvable:$true] %s412
          %s414 = sshll.u32 [#allocation13], 4
          %s415 = int_to_ptr.vmem [resolvable:$true] %s414
          %420 = dma.hbm_to_vmem [thread:$0]  %s413, 4096, %s415, [#allocation14], 256, 256, 16
        $region40: #{tpu_custom_call.1} parent=11 // pred_fallthru
          _
        // Predicated region
        $region41: #{tpu_custom_call.1} parent=11 // pred_check
          %p421 = pneg %p224
        $region42: #{tpu_custom_call.1} parent=11 // pred_check_branch
          %423 = sbr.rel (%p421) target = $region44
        $region43: #{tpu_custom_call.1} parent=11 // pred_region
          %425 = vsyncadd [#allocation14], 0
          %s427 = sshll.u32 %s8, 4
          %s428 = int_to_ptr.hbm [resolvable:$true] %s427
          %s429 = sshll.u32 [#allocation15], 4
          %s430 = int_to_ptr.vmem [resolvable:$true] %s429
          %432 = dma.hbm_to_vmem [thread:$0]  %s428, 64, %s430, [#allocation14]
        $region44: #{tpu_custom_call.1} parent=11 // pred_fallthru
          _
        // Predicated region
        $region45: #{tpu_custom_call.1} parent=11 // pred_check
          %p433 = pneg %p245
        $region46: #{tpu_custom_call.1} parent=11 // pred_check_branch
          %435 = sbr.rel (%p433) target = $region48
        $region47: #{tpu_custom_call.1} parent=11 // pred_region
          %437 = vsyncadd [#allocation17], 0
          %s438 = sshll.u32 %s9, 4
          %s439 = int_to_ptr.hbm [resolvable:$true] %s438
          %s440 = sshll.u32 [#allocation16], 4
          %s441 = int_to_ptr.vmem [resolvable:$true] %s440
          %446 = dma.hbm_to_vmem [thread:$0]  %s439, 4096, %s441, [#allocation17], 64, 64, 4
        $region48: #{tpu_custom_call.1} parent=11 // pred_fallthru
          _
        // Predicated region
        $region49: #{tpu_custom_call.1} parent=11 // pred_check
          %p447 = pneg %p266
        $region50: #{tpu_custom_call.1} parent=11 // pred_check_branch
          %449 = sbr.rel (%p447) target = $region52
        $region51: #{tpu_custom_call.1} parent=11 // pred_region
          %451 = vsyncadd [#allocation17], 0
          %s453 = sshll.u32 %s10, 4
          %s454 = int_to_ptr.hbm [resolvable:$true] %s453
          %s455 = sshll.u32 [#allocation18], 4
          %s456 = int_to_ptr.vmem [resolvable:$true] %s455
          %458 = dma.hbm_to_vmem [thread:$0]  %s454, 16, %s456, [#allocation17]
        $region52: #{tpu_custom_call.1} parent=11 // pred_fallthru
          _
        // Predicated region
        $region53: #{tpu_custom_call.1} parent=11 // pred_check
          %p459 = pneg %p287
        $region54: #{tpu_custom_call.1} parent=11 // pred_check_branch
          %461 = sbr.rel (%p459) target = $region56
        $region55: #{tpu_custom_call.1} parent=11 // pred_region
          _
        $region56: #{tpu_custom_call.1} parent=11 // pred_fallthru
          _
        // Predicated region
        $region57: #{tpu_custom_call.1} parent=11 // pred_check
          %p462 = pneg %p308
        $region58: #{tpu_custom_call.1} parent=11 // pred_check_branch
          %464 = sbr.rel (%p462) target = $region60
        $region59: #{tpu_custom_call.1} parent=11 // pred_region
          %466 = vsyncadd [#allocation20], 0
          %s468 = sshll.u32 %s12, 4
          %s469 = int_to_ptr.hbm [resolvable:$true] %s468
          %s470 = sshll.u32 [#allocation19], 4
          %s471 = int_to_ptr.vmem [resolvable:$true] %s470
          %473 = dma.hbm_to_vmem [thread:$0]  %s469, 128, %s471, [#allocation20]
        $region60: #{tpu_custom_call.1} parent=11 // pred_fallthru
          _
      $region12: #{tpu_custom_call.1} parent=5 // pred_fallthru
        _
      %p474 = scmp.lt.s32.totalorder %s30, 2
      // Predicated region
      $region61: #{tpu_custom_call.1} parent=5 // pred_check
        %p475 = pneg %p474
      $region62: #{tpu_custom_call.1} parent=5 // pred_check_branch
        %477 = sbr.rel (%p475) target = $region64
      $region63: #{tpu_custom_call.1} parent=5 // pred_region
        // Predicated region
        $region65: #{tpu_custom_call.1} parent=63 // pred_check
          %p478 = pneg %p50
        $region66: #{tpu_custom_call.1} parent=63 // pred_check_branch
          %480 = sbr.rel (%p478) target = $region68
        $region67: #{tpu_custom_call.1} parent=63 // pred_region
          %s481 = sand.u32 %s40, 1
          %s482 = scalar_lea.sflag [#allocation5], %s481
          %s483 = sand.u32 %s40, 1
          %s484 = smul.addr %s483, 8
          %s485 = scalar_lea.vmem [#allocation4], %s484
          %487 = vsyncadd %s482, 0
          %s488 = smul.addr %s30, 8
          %s489 = scalar_lea.hbm %s0, %s488
          %s491 = sshll.u32 %s489, 4
          %s492 = int_to_ptr.hbm [resolvable:$true] %s491
          %s493 = sshll.u32 %s485, 4
          %s494 = int_to_ptr.vmem [resolvable:$true] %s493
          %496 = dma.hbm_to_vmem [thread:$0]  %s492, 128, %s494, %s482
        $region68: #{tpu_custom_call.1} parent=63 // pred_fallthru
          _
      $region64: #{tpu_custom_call.1} parent=5 // pred_fallthru
        _
      %p497 = scmp.le.s32.totalorder 1, %s30
      %p498 = scmp.lt.s32.totalorder %s30, 3
      %p499 = pnand %p497, %p498
      %p500 = pneg %p499
      // Predicated region
      $region69: #{tpu_custom_call.1} parent=5 // pred_check
        _
      $region70: #{tpu_custom_call.1} parent=5 // pred_check_branch
        %502 = sbr.rel (%p499) target = $region72
      $region71: #{tpu_custom_call.1} parent=5 // pred_region
        %s503 = ssub.s32 %s30, 1
        %s504 = sand.u32 %s43, 1
        %s505 = scalar_lea.sflag [#allocation5], %s504
        %s506 = sand.u32 %s43, 1
        %s507 = smul.addr %s506, 8
        %s508 = scalar_lea.vmem [#allocation4], %s507
        // Predicated region
        $region73: #{tpu_custom_call.1} parent=71 // pred_check
          %p509 = pneg %p56
        $region74: #{tpu_custom_call.1} parent=71 // pred_check_branch
          %511 = sbr.rel (%p509) target = $region76
        $region75: #{tpu_custom_call.1} parent=71 // pred_region
          %513 = dma.done %s505, 128
        $region76: #{tpu_custom_call.1} parent=71 // pred_fallthru
          _
        // Predicated region
        $region77: #{tpu_custom_call.1} parent=71 // pred_check
          %p514 = pneg %p77
        $region78: #{tpu_custom_call.1} parent=71 // pred_check_branch
          %516 = sbr.rel (%p514) target = $region80
        $region79: #{tpu_custom_call.1} parent=71 // pred_region
          %518 = dma.done [#allocation8], 16
        $region80: #{tpu_custom_call.1} parent=71 // pred_fallthru
          _
        // Predicated region
        $region81: #{tpu_custom_call.1} parent=71 // pred_check
          %p519 = pneg %p98
        $region82: #{tpu_custom_call.1} parent=71 // pred_check_branch
          %521 = sbr.rel (%p519) target = $region84
        $region83: #{tpu_custom_call.1} parent=71 // pred_region
          %523 = dma.done [#allocation8], 3072
        $region84: #{tpu_custom_call.1} parent=71 // pred_fallthru
          _
        // Predicated region
        $region85: #{tpu_custom_call.1} parent=71 // pred_check
          %p524 = pneg %p119
        $region86: #{tpu_custom_call.1} parent=71 // pred_check_branch
          %526 = sbr.rel (%p524) target = $region88
        $region87: #{tpu_custom_call.1} parent=71 // pred_region
          %528 = dma.done [#allocation11], 48
        $region88: #{tpu_custom_call.1} parent=71 // pred_fallthru
          _
        // Predicated region
        $region89: #{tpu_custom_call.1} parent=71 // pred_check
          %p529 = pneg %p140
        $region90: #{tpu_custom_call.1} parent=71 // pred_check_branch
          %531 = sbr.rel (%p529) target = $region92
        $region91: #{tpu_custom_call.1} parent=71 // pred_region
          %533 = dma.done [#allocation11], 1024
        $region92: #{tpu_custom_call.1} parent=71 // pred_fallthru
          _
        // Predicated region
        $region93: #{tpu_custom_call.1} parent=71 // pred_check
          %p534 = pneg %p203
        $region94: #{tpu_custom_call.1} parent=71 // pred_check_branch
          %536 = sbr.rel (%p534) target = $region96
        $region95: #{tpu_custom_call.1} parent=71 // pred_region
          %538 = dma.done [#allocation14], 4096
        $region96: #{tpu_custom_call.1} parent=71 // pred_fallthru
          _
        // Predicated region
        $region97: #{tpu_custom_call.1} parent=71 // pred_check
          %p539 = pneg %p224
        $region98: #{tpu_custom_call.1} parent=71 // pred_check_branch
          %541 = sbr.rel (%p539) target = $region100
        $region99: #{tpu_custom_call.1} parent=71 // pred_region
          %543 = dma.done [#allocation14], 64
        $region100: #{tpu_custom_call.1} parent=71 // pred_fallthru
          _
        // Predicated region
        $region101: #{tpu_custom_call.1} parent=71 // pred_check
          %p544 = pneg %p245
        $region102: #{tpu_custom_call.1} parent=71 // pred_check_branch
          %546 = sbr.rel (%p544) target = $region104
        $region103: #{tpu_custom_call.1} parent=71 // pred_region
          %548 = dma.done [#allocation17], 4096
        $region104: #{tpu_custom_call.1} parent=71 // pred_fallthru
          _
        // Predicated region
        $region105: #{tpu_custom_call.1} parent=71 // pred_check
          %p549 = pneg %p266
        $region106: #{tpu_custom_call.1} parent=71 // pred_check_branch
          %551 = sbr.rel (%p549) target = $region108
        $region107: #{tpu_custom_call.1} parent=71 // pred_region
          %553 = dma.done [#allocation17], 16
        $region108: #{tpu_custom_call.1} parent=71 // pred_fallthru
          _
        // Predicated region
        $region109: #{tpu_custom_call.1} parent=71 // pred_check
          %p554 = pneg %p308
        $region110: #{tpu_custom_call.1} parent=71 // pred_check_branch
          %556 = sbr.rel (%p554) target = $region112
        $region111: #{tpu_custom_call.1} parent=71 // pred_region
          %558 = dma.done [#allocation20], 128
        $region112: #{tpu_custom_call.1} parent=71 // pred_fallthru
          _
        %s559 = sand.u32 %s43, 1
        %s560 = scalar_lea.sflag [#allocation5], %s559
        %s561 = sand.u32 %s43, 1
        %s562 = smul.addr %s561, 8
        %s563 = scalar_lea.vmem [#allocation4], %s562
        %p564 = pneg %p56
        %p565 = pneg %p53
        %p566 = pneg %p77
        %p567 = pneg %p74
        %p568 = pneg %p98
        %p569 = pneg %p95
        %p570 = pneg %p119
        %p571 = pneg %p116
        %p572 = pneg %p140
        %p573 = pneg %p137
        %p574 = pneg %p161
        %p575 = pneg %p158
        %p576 = pneg %p182
        %p577 = pneg %p179
        %p578 = pneg %p203
        %p579 = pneg %p200
        %p580 = pneg %p224
        %p581 = pneg %p221
        %p582 = pneg %p245
        %p583 = pneg %p242
        %p584 = pneg %p266
        %p585 = pneg %p263
        %p586 = pneg %p287
        %p587 = pneg %p284
        %p588 = pneg %p308
        %p589 = pneg %p305
        %p590 = pneg %p334
        %p591 = pneg %p331
        %s592 = sand.u32 %s321, 1
        %s593 = scalar_lea.sflag [#allocation6], %s592
        %s594 = sand.u32 %s321, 1
        %s595 = smul.addr %s594, 8
        %s596 = scalar_lea.vmem [#allocation21], %s595
        %v598 = vld [vmem:[%s508] sm:$0xff]
        %v599 = vmul.f32 %v598, %v598
        %600 = vadd.xlane.f32.xlu0 %v599
        %v601 = vpop.xlane.xlu0 %600
        %v602 = vrcp.pop 128.0
        %v603 = vmul.f32 128.0, %v602
        %v604 = vsub.f32 1.0, %v603
        %v605 = vmul.f32 %v602, %v604
        %v606 = vadd.f32 %v602, %v605
        %vm607 = vweird.f32 %v602
        %v608 = vsel %vm607, %v602, %v606
        %v609 = vmul.f32 %v601, %v608
        %v610 = vadd.f32 %v609, 1e-06
        %v611 = vrsqrt.pop %v610
        %v612 = vmul.f32 %v611, %v610
        %v613 = vmul.f32 %v612, %v611
        %v614 = vmul.f32 0.5, %v613
        %v615 = vsub.f32 1.5, %v614
        %v616 = vmul.f32 %v611, %v615
        %vm617 = vweird.f32 %v610
        %vm618 = vweird.f32 %v611
        %vm619 = vmor %vm617, %vm618
        %v620 = vsel %vm619, %v611, %v616
        %v621 = vmul.f32 %v598, %v620
        %v622 = vld [vmem:[#allocation7] sm:$0x1]
        %v624 = vperm.slane %v622, 0
        %v626 = vmul.f32 %v621, %v624
        %v627 = vpack.c.bf16 %v626, %v626
        %v628 = vld [vmem:[#allocation9] sm:$0xff]
        %v629 = vld [vmem:[#allocation9 + $0x8] sm:$0xf]
        %v630 = vld [vmem:[#allocation9 + $0xc] sm:$0xff]
        %v631 = vld [vmem:[#allocation9 + $0x14] sm:$0xf]
        %v632 = vld [vmem:[#allocation9 + $0x18] sm:$0xff]
        %v633 = vld [vmem:[#allocation9 + $0x20] sm:$0xf]
        %v634 = vld [vmem:[#allocation9 + $0x24] sm:$0xff]
        %v635 = vld [vmem:[#allocation9 + $0x2c] sm:$0xf]
        %v636 = vld [vmem:[#allocation9 + $0x30] sm:$0xff]
        %v637 = vld [vmem:[#allocation9 + $0x38] sm:$0xf]
        %v638 = vld [vmem:[#allocation9 + $0x3c] sm:$0xff]
        %v639 = vld [vmem:[#allocation9 + $0x44] sm:$0xf]
        %v640 = vld [vmem:[#allocation9 + $0x48] sm:$0xff]
        %v641 = vld [vmem:[#allocation9 + $0x50] sm:$0xf]
        %v642 = vld [vmem:[#allocation9 + $0x54] sm:$0xff]
        %v643 = vld [vmem:[#allocation9 + $0x5c] sm:$0xf]
        %v644 = vld [vmem:[#allocation9 + $0x60] sm:$0xff]
        %v645 = vld [vmem:[#allocation9 + $0x68] sm:$0xf]
        %v646 = vld [vmem:[#allocation9 + $0x6c] sm:$0xff]
        %v647 = vld [vmem:[#allocation9 + $0x74] sm:$0xf]
        %v648 = vld [vmem:[#allocation9 + $0x78] sm:$0xff]
        %v649 = vld [vmem:[#allocation9 + $0x80] sm:$0xf]
        %v650 = vld [vmem:[#allocation9 + $0x84] sm:$0xff]
        %v651 = vld [vmem:[#allocation9 + $0x8c] sm:$0xf]
        %v652 = vld [vmem:[#allocation9 + $0x90] sm:$0xff]
        %v653 = vld [vmem:[#allocation9 + $0x98] sm:$0xf]
        %v654 = vld [vmem:[#allocation9 + $0x9c] sm:$0xff]
        %v655 = vld [vmem:[#allocation9 + $0xa4] sm:$0xf]
        %v656 = vld [vmem:[#allocation9 + $0xa8] sm:$0xff]
        %v657 = vld [vmem:[#allocation9 + $0xb0] sm:$0xf]
        %v658 = vld [vmem:[#allocation9 + $0xb4] sm:$0xff]
        %v659 = vld [vmem:[#allocation9 + $0xbc] sm:$0xf]
        %v660 = vld [vmem:[#allocation10] sm:$0x7]
        %v662 = vperm.slane %v660, 0
        %v663 = vperm.slane %v660, 1
        %v664 = vperm.slane %v660, 2
        %v700 = vunpack.c.l.b16 %v628
        %v701 = vunpack.c.h.b16 %v628
        %v702 = vunpack.c.l.b16 %v629
        %v703 = vunpack.c.l.b16 %v630
        %v704 = vunpack.c.h.b16 %v630
        %v705 = vunpack.c.l.b16 %v631
        %v706 = vunpack.c.l.b16 %v632
        %v707 = vunpack.c.h.b16 %v632
        %v708 = vunpack.c.l.b16 %v633
        %v709 = vunpack.c.l.b16 %v634
        %v710 = vunpack.c.h.b16 %v634
        %v711 = vunpack.c.l.b16 %v635
        %v712 = vunpack.c.l.b16 %v636
        %v713 = vunpack.c.h.b16 %v636
        %v714 = vunpack.c.l.b16 %v637
        %v715 = vunpack.c.l.b16 %v638
        %v716 = vunpack.c.h.b16 %v638
        %v717 = vunpack.c.l.b16 %v639
        %v718 = vunpack.c.l.b16 %v640
        %v719 = vunpack.c.h.b16 %v640
        %v720 = vunpack.c.l.b16 %v641
        %v721 = vunpack.c.l.b16 %v642
        %v722 = vunpack.c.h.b16 %v642
        %v723 = vunpack.c.l.b16 %v643
        %v724 = vunpack.c.l.b16 %v644
        %v725 = vunpack.c.h.b16 %v644
        %v726 = vunpack.c.l.b16 %v645
        %v727 = vunpack.c.l.b16 %v646
        %v728 = vunpack.c.h.b16 %v646
        %v729 = vunpack.c.l.b16 %v647
        %v730 = vunpack.c.l.b16 %v648
        %v731 = vunpack.c.h.b16 %v648
        %v732 = vunpack.c.l.b16 %v649
        %v733 = vunpack.c.l.b16 %v650
        %v734 = vunpack.c.h.b16 %v650
        %v735 = vunpack.c.l.b16 %v651
        %v736 = vunpack.c.l.b16 %v652
        %v737 = vunpack.c.h.b16 %v652
        %v738 = vunpack.c.l.b16 %v653
        %v739 = vunpack.c.l.b16 %v654
        %v740 = vunpack.c.h.b16 %v654
        %v741 = vunpack.c.l.b16 %v655
        %v742 = vunpack.c.l.b16 %v656
        %v743 = vunpack.c.h.b16 %v656
        %v744 = vunpack.c.l.b16 %v657
        %v745 = vunpack.c.l.b16 %v658
        %v746 = vunpack.c.h.b16 %v658
        %v747 = vunpack.c.l.b16 %v659
        %v748 = vpack.c.b16 %v703, %v700
        %v749 = vpack.c.b16 %v704, %v701
        %v750 = vpack.c.b16 %v705, %v702
        %v751 = vpack.c.b16 %v709, %v706
        %v752 = vpack.c.b16 %v710, %v707
        %v753 = vpack.c.b16 %v711, %v708
        %v754 = vpack.c.b16 %v715, %v712
        %v755 = vpack.c.b16 %v716, %v713
        %v756 = vpack.c.b16 %v717, %v714
        %v757 = vpack.c.b16 %v721, %v718
        %v758 = vpack.c.b16 %v722, %v719
        %v759 = vpack.c.b16 %v723, %v720
        %v760 = vpack.c.b16 %v727, %v724
        %v761 = vpack.c.b16 %v728, %v725
        %v762 = vpack.c.b16 %v729, %v726
        %v763 = vpack.c.b16 %v733, %v730
        %v764 = vpack.c.b16 %v734, %v731
        %v765 = vpack.c.b16 %v735, %v732
        %v766 = vpack.c.b16 %v739, %v736
        %v767 = vpack.c.b16 %v740, %v737
        %v768 = vpack.c.b16 %v741, %v738
        %v769 = vpack.c.b16 %v745, %v742
        %v770 = vpack.c.b16 %v746, %v743
        %v771 = vpack.c.b16 %v747, %v744
        %796 = vmatpush.bf16.msra.mxu0 %v769
        %797 = vmatpush.bf16.msra.mxu0 %v766
        %798 = vmatpush.bf16.msra.mxu0 %v763
        %799 = vmatpush.bf16.msra.mxu0 %v760
        %800 = vmatpush.bf16.msra.mxu0 %v757
        %801 = vmatpush.bf16.msra.mxu0 %v754
        %802 = vmatpush.bf16.msra.mxu0 %v751
        %803 = vmatpush.bf16.msra.mxu0 %v748
        %804 = vmatmul.bf16.gmra.mxu0 %v627
        %v805 = vpop.f32.mrf.mxu0
        %v806 = vadd.f32 %v662, %v805
        %v807 = vpop.f32.mrf.mxu0
        %808 = vdwg.mxu0
        %809 = vmatpush.bf16.msra.mxu0 %v770
        %810 = vmatpush.bf16.msra.mxu0 %v767
        %811 = vmatpush.bf16.msra.mxu0 %v764
        %812 = vmatpush.bf16.msra.mxu0 %v761
        %813 = vmatpush.bf16.msra.mxu0 %v758
        %814 = vmatpush.bf16.msra.mxu0 %v755
        %815 = vmatpush.bf16.msra.mxu0 %v752
        %816 = vmatpush.bf16.msra.mxu0 %v749
        %817 = vmatmul.bf16.gmra.mxu0 %v627
        %v818 = vpop.f32.mrf.mxu0
        %v819 = vadd.f32 %v663, %v818
        %v820 = vpop.f32.mrf.mxu0
        %821 = vdwg.mxu0
        %822 = vmatpush.bf16.msra.mxu0 %v771
        %823 = vmatpush.bf16.msra.mxu0 %v768
        %824 = vmatpush.bf16.msra.mxu0 %v765
        %825 = vmatpush.bf16.msra.mxu0 %v762
        %826 = vmatpush.bf16.msra.mxu0 %v759
        %827 = vmatpush.bf16.msra.mxu0 %v756
        %828 = vmatpush.bf16.msra.mxu0 %v753
        %829 = vmatpush.bf16.msra.mxu0 %v750
        %830 = vmatmul.bf16.gmra.mxu0 %v627
        %v831 = vpop.f32.mrf.mxu0
        %v832 = vadd.f32 %v664, %v831
        %v833 = vpop.f32.mrf.mxu0
        %834 = vdwg.mxu0
        %v835 = vld [vmem:[%s11] sm:$0xff]
        %v836 = vld [vmem:[#allocation19] sm:$0xff]
        %v837 = vmul.f32 %v806, %v835
        %839 = vrot.lane.b32.xlu0 %v806, 96
        %v840 = vpop.permute.xlu0 %839
        %842 = vrot.lane.b32.xlu0 %v806, 32
        %v843 = vpop.permute.xlu0 %842
        %vm845 = vcmask 261120
        %v846 = vsel %vm845, %v840, %v843
        %vm847 = vcmask 523264
        %v848 = vsel %vm847, %v846, %v840
        %vm849 = vcmask 785408
        %v850 = vsel %vm849, %v848, %v843
        %v851 = vmul.f32 %v850, %v836
        %v852 = vadd.f32 %v837, %v851
        %853 = vst [vmem:[#allocation2] sm:$0xff] %v852
        %v854 = vmul.f32 %v819, %v835
        %856 = vrot.lane.b32.xlu0 %v819, 96
        %v857 = vpop.permute.xlu0 %856
        %859 = vrot.lane.b32.xlu0 %v819, 32
        %v860 = vpop.permute.xlu0 %859
        %v862 = vsel %vm845, %v857, %v860
        %v863 = vsel %vm847, %v862, %v857
        %v864 = vsel %vm849, %v863, %v860
        %v865 = vmul.f32 %v864, %v836
        %v866 = vadd.f32 %v854, %v865
        %867 = vst [vmem:[#allocation2 + $0x8] sm:$0xff] %v866
        %868 = vst [vmem:[#allocation2 + $0x10] sm:$0xff] %v832
        %v869 = vld [vmem:[#allocation2] sm:$0xff]
        %v870 = vld [vmem:[#allocation2 + $0x8] sm:$0xff]
        %v871 = vld [vmem:[#allocation2 + $0x10] sm:$0xff]
        %v872 = vpack.c.bf16 %v869, %v869
        %v873 = vpack.c.bf16 %v870, %v870
        %v874 = vpack.c.bf16 %v871, %v871
        %v876 = vsel %vm847, %v872, 0
        %v879 = vsel %vm847, %v873, 0
        %881 = vmatpush.bf16.xpose.msra.mxu0 0
        %882 = vmatpush.bf16.xpose.msra.mxu0 0
        %883 = vmatpush.bf16.xpose.msra.mxu0 0
        %884 = vmatpush.bf16.xpose.msra.mxu0 0
        %885 = vmatpush.bf16.xpose.msra.mxu0 0
        %886 = vmatpush.bf16.xpose.msra.mxu0 0
        %887 = vmatpush.bf16.xpose.msra.mxu0 0
        %888 = vmatpush.bf16.xpose.msra.mxu0 %v879
        %889 = vmatmul.bf16.gmra.mxu0 %v876
        %v890 = vpop.f32.mrf.mxu0
        %v891 = vadd.f32 0.0, %v890
        %v892 = vpop.f32.mrf.mxu0
        %893 = vdwg.mxu0
        %vm894 = vcmask 64512
        %v895 = vsel %vm894, %v891, -inf
        %896 = vmax.xlane.f32.xlu0 %v895
        %v897 = vpop.xlane.xlu0 %896
        %v898 = vsub.f32 %v891, %v897
        %v899 = vmul.f32 %v898, 1.442695
        %v900 = vpow.pop %v899
        %v901 = vsel %vm894, %v900, 0.0
        %902 = vadd.xlane.f32.xlu0 %v901
        %v903 = vpop.xlane.xlu0 %902
        %v904 = vpack.c.bf16 %v900, %v900
        %v906 = vsel %vm894, %v904, 0
        %vm908 = vcmask 1043456
        %v910 = vsel %vm908, %v874, 0
        %912 = vmatpush.bf16.msra.mxu0 0
        %913 = vmatpush.bf16.msra.mxu0 0
        %914 = vmatpush.bf16.msra.mxu0 0
        %915 = vmatpush.bf16.msra.mxu0 0
        %916 = vmatpush.bf16.msra.mxu0 0
        %917 = vmatpush.bf16.msra.mxu0 0
        %918 = vmatpush.bf16.msra.mxu0 0
        %919 = vmatpush.bf16.msra.mxu0 %v910
        %920 = vmatmul.bf16.gmra.mxu0 %v906
        %v921 = vpop.f32.mrf.mxu0
        %v922 = vadd.f32 0.0, %v921
        %v923 = vpop.f32.mrf.mxu0
        %924 = vdwg.mxu0
        %v925 = vrcp.pop %v903
        %v926 = vmul.f32 %v922, %v925
        %928 = vrot.lane.b32.xlu0 %v872, 64
        %v929 = vpop.permute.xlu0 %928
        %931 = vrot.lane.b32.xlu0 %v873, 64
        %v932 = vpop.permute.xlu0 %931
        %v934 = vsel %vm847, %v929, 0
        %v937 = vsel %vm847, %v932, 0
        %939 = vmatpush.bf16.xpose.msra.mxu0 0
        %940 = vmatpush.bf16.xpose.msra.mxu0 0
        %941 = vmatpush.bf16.xpose.msra.mxu0 0
        %942 = vmatpush.bf16.xpose.msra.mxu0 0
        %943 = vmatpush.bf16.xpose.msra.mxu0 0
        %944 = vmatpush.bf16.xpose.msra.mxu0 0
        %945 = vmatpush.bf16.xpose.msra.mxu0 0
        %946 = vmatpush.bf16.xpose.msra.mxu0 %v937
        %947 = vmatmul.bf16.gmra.mxu0 %v934
        %v948 = vpop.f32.mrf.mxu0
        %v949 = vadd.f32 0.0, %v948
        %v950 = vpop.f32.mrf.mxu0
        %951 = vdwg.mxu0
        %v952 = vsel %vm894, %v949, -inf
        %953 = vmax.xlane.f32.xlu0 %v952
        %v954 = vpop.xlane.xlu0 %953
        %v955 = vsub.f32 %v949, %v954
        %v956 = vmul.f32 %v955, 1.442695
        %v957 = vpow.pop %v956
        %v958 = vsel %vm894, %v957, 0.0
        %959 = vadd.xlane.f32.xlu0 %v958
        %v960 = vpop.xlane.xlu0 %959
        %v961 = vpack.c.bf16 %v957, %v957
        %963 = vrot.lane.b32.xlu0 %v874, 64
        %v964 = vpop.permute.xlu0 %963
        %v966 = vsel %vm894, %v961, 0
        %v969 = vsel %vm908, %v964, 0
        %971 = vmatpush.bf16.msra.mxu0 0
        %972 = vmatpush.bf16.msra.mxu0 0
        %973 = vmatpush.bf16.msra.mxu0 0
        %974 = vmatpush.bf16.msra.mxu0 0
        %975 = vmatpush.bf16.msra.mxu0 0
        %976 = vmatpush.bf16.msra.mxu0 0
        %977 = vmatpush.bf16.msra.mxu0 0
        %978 = vmatpush.bf16.msra.mxu0 %v969
        %979 = vmatmul.bf16.gmra.mxu0 %v966
        %v980 = vpop.f32.mrf.mxu0
        %v981 = vadd.f32 0.0, %v980
        %v982 = vpop.f32.mrf.mxu0
        %983 = vdwg.mxu0
        %v984 = vrcp.pop %v960
        %v985 = vmul.f32 %v981, %v984
        %987 = vrot.lane.b32.xlu0 %v985, 64
        %v988 = vpop.permute.xlu0 %987
        %v990 = vsel %vm847, %v926, %v988
        %991 = vst [vmem:[#allocation3] sm:$0xff] %v990
        %v992 = vld [vmem:[#allocation3] sm:$0xff]
        %v993 = vpack.c.bf16 %v992, %v992
        %v994 = vld [vmem:[#allocation12] sm:$0xf]
        %v995 = vld [vmem:[#allocation12 + $0x4] sm:$0xf]
        %v996 = vld [vmem:[#allocation12 + $0x8] sm:$0xf]
        %v997 = vld [vmem:[#allocation12 + $0xc] sm:$0xf]
        %v998 = vld [vmem:[#allocation12 + $0x10] sm:$0xf]
        %v999 = vld [vmem:[#allocation12 + $0x14] sm:$0xf]
        %v1000 = vld [vmem:[#allocation12 + $0x18] sm:$0xf]
        %v1001 = vld [vmem:[#allocation12 + $0x1c] sm:$0xf]
        %v1002 = vld [vmem:[#allocation12 + $0x20] sm:$0xf]
        %v1003 = vld [vmem:[#allocation12 + $0x24] sm:$0xf]
        %v1004 = vld [vmem:[#allocation12 + $0x28] sm:$0xf]
        %v1005 = vld [vmem:[#allocation12 + $0x2c] sm:$0xf]
        %v1006 = vld [vmem:[#allocation12 + $0x30] sm:$0xf]
        %v1007 = vld [vmem:[#allocation12 + $0x34] sm:$0xf]
        %v1008 = vld [vmem:[#allocation12 + $0x38] sm:$0xf]
        %v1009 = vld [vmem:[#allocation12 + $0x3c] sm:$0xf]
        %v1010 = vld [vmem:[%s5] sm:$0x1]
        %v1012 = vperm.slane %v1010, 0
        %v1030 = vunpack.c.l.b16 %v994
        %v1031 = vunpack.c.l.b16 %v995
        %v1032 = vunpack.c.l.b16 %v996
        %v1033 = vunpack.c.l.b16 %v997
        %v1034 = vunpack.c.l.b16 %v998
        %v1035 = vunpack.c.l.b16 %v999
        %v1036 = vunpack.c.l.b16 %v1000
        %v1037 = vunpack.c.l.b16 %v1001
        %v1038 = vunpack.c.l.b16 %v1002
        %v1039 = vunpack.c.l.b16 %v1003
        %v1040 = vunpack.c.l.b16 %v1004
        %v1041 = vunpack.c.l.b16 %v1005
        %v1042 = vunpack.c.l.b16 %v1006
        %v1043 = vunpack.c.l.b16 %v1007
        %v1044 = vunpack.c.l.b16 %v1008
        %v1045 = vunpack.c.l.b16 %v1009
        %v1046 = vpack.c.b16 %v1031, %v1030
        %v1047 = vpack.c.b16 %v1033, %v1032
        %v1048 = vpack.c.b16 %v1035, %v1034
        %v1049 = vpack.c.b16 %v1037, %v1036
        %v1050 = vpack.c.b16 %v1039, %v1038
        %v1051 = vpack.c.b16 %v1041, %v1040
        %v1052 = vpack.c.b16 %v1043, %v1042
        %v1053 = vpack.c.b16 %v1045, %v1044
        %1062 = vmatpush.bf16.msra.mxu0 %v1053
        %1063 = vmatpush.bf16.msra.mxu0 %v1052
        %1064 = vmatpush.bf16.msra.mxu0 %v1051
        %1065 = vmatpush.bf16.msra.mxu0 %v1050
        %1066 = vmatpush.bf16.msra.mxu0 %v1049
        %1067 = vmatpush.bf16.msra.mxu0 %v1048
        %1068 = vmatpush.bf16.msra.mxu0 %v1047
        %1069 = vmatpush.bf16.msra.mxu0 %v1046
        %1070 = vmatmul.bf16.gmra.mxu0 %v993
        %v1071 = vpop.f32.mrf.mxu0
        %v1072 = vadd.f32 %v1012, %v1071
        %v1073 = vpop.f32.mrf.mxu0
        %1074 = vdwg.mxu0
        %v1075 = vadd.f32 %v598, %v1072
        %v1076 = vmul.f32 %v1075, %v1075
        %1077 = vadd.xlane.f32.xlu0 %v1076
        %v1078 = vpop.xlane.xlu0 %1077
        %v1079 = vmul.f32 %v1078, %v608
        %v1080 = vadd.f32 %v1079, 1e-06
        %v1081 = vrsqrt.pop %v1080
        %v1082 = vmul.f32 %v1081, %v1080
        %v1083 = vmul.f32 %v1082, %v1081
        %v1084 = vmul.f32 0.5, %v1083
        %v1085 = vsub.f32 1.5, %v1084
        %v1086 = vmul.f32 %v1081, %v1085
        %vm1087 = vweird.f32 %v1080
        %vm1088 = vweird.f32 %v1081
        %vm1089 = vmor %vm1087, %vm1088
        %v1090 = vsel %vm1089, %v1081, %v1086
        %v1091 = vmul.f32 %v1075, %v1090
        %v1092 = vld [vmem:[%s6] sm:$0x1]
        %v1094 = vperm.slane %v1092, 0
        %v1096 = vmul.f32 %v1091, %v1094
        %v1097 = vpack.c.bf16 %v1096, %v1096
        %v1098 = vld [vmem:[#allocation13] sm:$0xff]
        %v1099 = vld [vmem:[#allocation13 + $0x8] sm:$0xff]
        %v1100 = vld [vmem:[#allocation13 + $0x10] sm:$0xff]
        %v1101 = vld [vmem:[#allocation13 + $0x18] sm:$0xff]
        %v1102 = vld [vmem:[#allocation13 + $0x20] sm:$0xff]
        %v1103 = vld [vmem:[#allocation13 + $0x28] sm:$0xff]
        %v1104 = vld [vmem:[#allocation13 + $0x30] sm:$0xff]
        %v1105 = vld [vmem:[#allocation13 + $0x38] sm:$0xff]
        %v1106 = vld [vmem:[#allocation13 + $0x40] sm:$0xff]
        %v1107 = vld [vmem:[#allocation13 + $0x48] sm:$0xff]
        %v1108 = vld [vmem:[#allocation13 + $0x50] sm:$0xff]
        %v1109 = vld [vmem:[#allocation13 + $0x58] sm:$0xff]
        %v1110 = vld [vmem:[#allocation13 + $0x60] sm:$0xff]
        %v1111 = vld [vmem:[#allocation13 + $0x68] sm:$0xff]
        %v1112 = vld [vmem:[#allocation13 + $0x70] sm:$0xff]
        %v1113 = vld [vmem:[#allocation13 + $0x78] sm:$0xff]
        %v1114 = vld [vmem:[#allocation13 + $0x80] sm:$0xff]
        %v1115 = vld [vmem:[#allocation13 + $0x88] sm:$0xff]
        %v1116 = vld [vmem:[#allocation13 + $0x90] sm:$0xff]
        %v1117 = vld [vmem:[#allocation13 + $0x98] sm:$0xff]
        %v1118 = vld [vmem:[#allocation13 + $0xa0] sm:$0xff]
        %v1119 = vld [vmem:[#allocation13 + $0xa8] sm:$0xff]
        %v1120 = vld [vmem:[#allocation13 + $0xb0] sm:$0xff]
        %v1121 = vld [vmem:[#allocation13 + $0xb8] sm:$0xff]
        %v1122 = vld [vmem:[#allocation13 + $0xc0] sm:$0xff]
        %v1123 = vld [vmem:[#allocation13 + $0xc8] sm:$0xff]
        %v1124 = vld [vmem:[#allocation13 + $0xd0] sm:$0xff]
        %v1125 = vld [vmem:[#allocation13 + $0xd8] sm:$0xff]
        %v1126 = vld [vmem:[#allocation13 + $0xe0] sm:$0xff]
        %v1127 = vld [vmem:[#allocation13 + $0xe8] sm:$0xff]
        %v1128 = vld [vmem:[#allocation13 + $0xf0] sm:$0xff]
        %v1129 = vld [vmem:[#allocation13 + $0xf8] sm:$0xff]
        %v1130 = vld [vmem:[#allocation15] sm:$0xf]
        %v1132 = vperm.slane %v1130, 0
        %v1133 = vperm.slane %v1130, 1
        %v1134 = vperm.slane %v1130, 2
        %v1135 = vperm.slane %v1130, 3
        %v1172 = vunpack.c.l.b16 %v1098
        %v1173 = vunpack.c.h.b16 %v1098
        %v1174 = vunpack.c.l.b16 %v1099
        %v1175 = vunpack.c.h.b16 %v1099
        %v1176 = vunpack.c.l.b16 %v1100
        %v1177 = vunpack.c.h.b16 %v1100
        %v1178 = vunpack.c.l.b16 %v1101
        %v1179 = vunpack.c.h.b16 %v1101
        %v1180 = vunpack.c.l.b16 %v1102
        %v1181 = vunpack.c.h.b16 %v1102
        %v1182 = vunpack.c.l.b16 %v1103
        %v1183 = vunpack.c.h.b16 %v1103
        %v1184 = vunpack.c.l.b16 %v1104
        %v1185 = vunpack.c.h.b16 %v1104
        %v1186 = vunpack.c.l.b16 %v1105
        %v1187 = vunpack.c.h.b16 %v1105
        %v1188 = vunpack.c.l.b16 %v1106
        %v1189 = vunpack.c.h.b16 %v1106
        %v1190 = vunpack.c.l.b16 %v1107
        %v1191 = vunpack.c.h.b16 %v1107
        %v1192 = vunpack.c.l.b16 %v1108
        %v1193 = vunpack.c.h.b16 %v1108
        %v1194 = vunpack.c.l.b16 %v1109
        %v1195 = vunpack.c.h.b16 %v1109
        %v1196 = vunpack.c.l.b16 %v1110
        %v1197 = vunpack.c.h.b16 %v1110
        %v1198 = vunpack.c.l.b16 %v1111
        %v1199 = vunpack.c.h.b16 %v1111
        %v1200 = vunpack.c.l.b16 %v1112
        %v1201 = vunpack.c.h.b16 %v1112
        %v1202 = vunpack.c.l.b16 %v1113
        %v1203 = vunpack.c.h.b16 %v1113
        %v1204 = vunpack.c.l.b16 %v1114
        %v1205 = vunpack.c.h.b16 %v1114
        %v1206 = vunpack.c.l.b16 %v1115
        %v1207 = vunpack.c.h.b16 %v1115
        %v1208 = vunpack.c.l.b16 %v1116
        %v1209 = vunpack.c.h.b16 %v1116
        %v1210 = vunpack.c.l.b16 %v1117
        %v1211 = vunpack.c.h.b16 %v1117
        %v1212 = vunpack.c.l.b16 %v1118
        %v1213 = vunpack.c.h.b16 %v1118
        %v1214 = vunpack.c.l.b16 %v1119
        %v1215 = vunpack.c.h.b16 %v1119
        %v1216 = vunpack.c.l.b16 %v1120
        %v1217 = vunpack.c.h.b16 %v1120
        %v1218 = vunpack.c.l.b16 %v1121
        %v1219 = vunpack.c.h.b16 %v1121
        %v1220 = vunpack.c.l.b16 %v1122
        %v1221 = vunpack.c.h.b16 %v1122
        %v1222 = vunpack.c.l.b16 %v1123
        %v1223 = vunpack.c.h.b16 %v1123
        %v1224 = vunpack.c.l.b16 %v1124
        %v1225 = vunpack.c.h.b16 %v1124
        %v1226 = vunpack.c.l.b16 %v1125
        %v1227 = vunpack.c.h.b16 %v1125
        %v1228 = vunpack.c.l.b16 %v1126
        %v1229 = vunpack.c.h.b16 %v1126
        %v1230 = vunpack.c.l.b16 %v1127
        %v1231 = vunpack.c.h.b16 %v1127
        %v1232 = vunpack.c.l.b16 %v1128
        %v1233 = vunpack.c.h.b16 %v1128
        %v1234 = vunpack.c.l.b16 %v1129
        %v1235 = vunpack.c.h.b16 %v1129
        %v1236 = vpack.c.b16 %v1176, %v1172
        %v1237 = vpack.c.b16 %v1177, %v1173
        %v1238 = vpack.c.b16 %v1178, %v1174
        %v1239 = vpack.c.b16 %v1179, %v1175
        %v1240 = vpack.c.b16 %v1184, %v1180
        %v1241 = vpack.c.b16 %v1185, %v1181
        %v1242 = vpack.c.b16 %v1186, %v1182
        %v1243 = vpack.c.b16 %v1187, %v1183
        %v1244 = vpack.c.b16 %v1192, %v1188
        %v1245 = vpack.c.b16 %v1193, %v1189
        %v1246 = vpack.c.b16 %v1194, %v1190
        %v1247 = vpack.c.b16 %v1195, %v1191
        %v1248 = vpack.c.b16 %v1200, %v1196
        %v1249 = vpack.c.b16 %v1201, %v1197
        %v1250 = vpack.c.b16 %v1202, %v1198
        %v1251 = vpack.c.b16 %v1203, %v1199
        %v1252 = vpack.c.b16 %v1208, %v1204
        %v1253 = vpack.c.b16 %v1209, %v1205
        %v1254 = vpack.c.b16 %v1210, %v1206
        %v1255 = vpack.c.b16 %v1211, %v1207
        %v1256 = vpack.c.b16 %v1216, %v1212
        %v1257 = vpack.c.b16 %v1217, %v1213
        %v1258 = vpack.c.b16 %v1218, %v1214
        %v1259 = vpack.c.b16 %v1219, %v1215
        %v1260 = vpack.c.b16 %v1224, %v1220
        %v1261 = vpack.c.b16 %v1225, %v1221
        %v1262 = vpack.c.b16 %v1226, %v1222
        %v1263 = vpack.c.b16 %v1227, %v1223
        %v1264 = vpack.c.b16 %v1232, %v1228
        %v1265 = vpack.c.b16 %v1233, %v1229
        %v1266 = vpack.c.b16 %v1234, %v1230
        %v1267 = vpack.c.b16 %v1235, %v1231
        %1300 = vmatpush.bf16.msra.mxu0 %v1264
        %1301 = vmatpush.bf16.msra.mxu0 %v1260
        %1302 = vmatpush.bf16.msra.mxu0 %v1256
        %1303 = vmatpush.bf16.msra.mxu0 %v1252
        %1304 = vmatpush.bf16.msra.mxu0 %v1248
        %1305 = vmatpush.bf16.msra.mxu0 %v1244
        %1306 = vmatpush.bf16.msra.mxu0 %v1240
        %1307 = vmatpush.bf16.msra.mxu0 %v1236
        %1308 = vmatmul.bf16.gmra.mxu0 %v1097
        %v1309 = vpop.f32.mrf.mxu0
        %v1310 = vadd.f32 %v1132, %v1309
        %v1311 = vpop.f32.mrf.mxu0
        %1312 = vdwg.mxu0
        %1313 = vmatpush.bf16.msra.mxu0 %v1265
        %1314 = vmatpush.bf16.msra.mxu0 %v1261
        %1315 = vmatpush.bf16.msra.mxu0 %v1257
        %1316 = vmatpush.bf16.msra.mxu0 %v1253
        %1317 = vmatpush.bf16.msra.mxu0 %v1249
        %1318 = vmatpush.bf16.msra.mxu0 %v1245
        %1319 = vmatpush.bf16.msra.mxu0 %v1241
        %1320 = vmatpush.bf16.msra.mxu0 %v1237
        %1321 = vmatmul.bf16.gmra.mxu0 %v1097
        %v1322 = vpop.f32.mrf.mxu0
        %v1323 = vadd.f32 %v1133, %v1322
        %v1324 = vpop.f32.mrf.mxu0
        %1325 = vdwg.mxu0
        %1326 = vmatpush.bf16.msra.mxu0 %v1266
        %1327 = vmatpush.bf16.msra.mxu0 %v1262
        %1328 = vmatpush.bf16.msra.mxu0 %v1258
        %1329 = vmatpush.bf16.msra.mxu0 %v1254
        %1330 = vmatpush.bf16.msra.mxu0 %v1250
        %1331 = vmatpush.bf16.msra.mxu0 %v1246
        %1332 = vmatpush.bf16.msra.mxu0 %v1242
        %1333 = vmatpush.bf16.msra.mxu0 %v1238
        %1334 = vmatmul.bf16.gmra.mxu0 %v1097
        %v1335 = vpop.f32.mrf.mxu0
        %v1336 = vadd.f32 %v1134, %v1335
        %v1337 = vpop.f32.mrf.mxu0
        %1338 = vdwg.mxu0
        %1339 = vmatpush.bf16.msra.mxu0 %v1267
        %1340 = vmatpush.bf16.msra.mxu0 %v1263
        %1341 = vmatpush.bf16.msra.mxu0 %v1259
        %1342 = vmatpush.bf16.msra.mxu0 %v1255
        %1343 = vmatpush.bf16.msra.mxu0 %v1251
        %1344 = vmatpush.bf16.msra.mxu0 %v1247
        %1345 = vmatpush.bf16.msra.mxu0 %v1243
        %1346 = vmatpush.bf16.msra.mxu0 %v1239
        %1347 = vmatmul.bf16.gmra.mxu0 %v1097
        %v1348 = vpop.f32.mrf.mxu0
        %v1349 = vadd.f32 %v1135, %v1348
        %v1350 = vpop.f32.mrf.mxu0
        %1351 = vdwg.mxu0
        %v1352 = vmax.f32 %v1310, 0.0
        %v1353 = vmax.f32 %v1323, 0.0
        %v1354 = vmax.f32 %v1336, 0.0
        %v1355 = vmax.f32 %v1349, 0.0
        %v1356 = vmul.f32 %v1352, %v1352
        %v1357 = vmul.f32 %v1353, %v1353
        %v1358 = vmul.f32 %v1354, %v1354
        %v1359 = vmul.f32 %v1355, %v1355
        %v1360 = vpack.c.bf16 %v1356, %v1356
        %v1361 = vpack.c.bf16 %v1357, %v1357
        %v1362 = vpack.c.bf16 %v1358, %v1358
        %v1363 = vpack.c.bf16 %v1359, %v1359
        %v1364 = vld [vmem:[#allocation16] sm:$0xf]
        %v1365 = vld [vmem:[#allocation16 + $0x4] sm:$0xf]
        %v1366 = vld [vmem:[#allocation16 + $0x8] sm:$0xf]
        %v1367 = vld [vmem:[#allocation16 + $0xc] sm:$0xf]
        %v1368 = vld [vmem:[#allocation16 + $0x10] sm:$0xf]
        %v1369 = vld [vmem:[#allocation16 + $0x14] sm:$0xf]
        %v1370 = vld [vmem:[#allocation16 + $0x18] sm:$0xf]
        %v1371 = vld [vmem:[#allocation16 + $0x1c] sm:$0xf]
        %v1372 = vld [vmem:[#allocation16 + $0x20] sm:$0xf]
        %v1373 = vld [vmem:[#allocation16 + $0x24] sm:$0xf]
        %v1374 = vld [vmem:[#allocation16 + $0x28] sm:$0xf]
        %v1375 = vld [vmem:[#allocation16 + $0x2c] sm:$0xf]
        %v1376 = vld [vmem:[#allocation16 + $0x30] sm:$0xf]
        %v1377 = vld [vmem:[#allocation16 + $0x34] sm:$0xf]
        %v1378 = vld [vmem:[#allocation16 + $0x38] sm:$0xf]
        %v1379 = vld [vmem:[#allocation16 + $0x3c] sm:$0xf]
        %v1380 = vld [vmem:[#allocation16 + $0x40] sm:$0xf]
        %v1381 = vld [vmem:[#allocation16 + $0x44] sm:$0xf]
        %v1382 = vld [vmem:[#allocation16 + $0x48] sm:$0xf]
        %v1383 = vld [vmem:[#allocation16 + $0x4c] sm:$0xf]
        %v1384 = vld [vmem:[#allocation16 + $0x50] sm:$0xf]
        %v1385 = vld [vmem:[#allocation16 + $0x54] sm:$0xf]
        %v1386 = vld [vmem:[#allocation16 + $0x58] sm:$0xf]
        %v1387 = vld [vmem:[#allocation16 + $0x5c] sm:$0xf]
        %v1388 = vld [vmem:[#allocation16 + $0x60] sm:$0xf]
        %v1389 = vld [vmem:[#allocation16 + $0x64] sm:$0xf]
        %v1390 = vld [vmem:[#allocation16 + $0x68] sm:$0xf]
        %v1391 = vld [vmem:[#allocation16 + $0x6c] sm:$0xf]
        %v1392 = vld [vmem:[#allocation16 + $0x70] sm:$0xf]
        %v1393 = vld [vmem:[#allocation16 + $0x74] sm:$0xf]
        %v1394 = vld [vmem:[#allocation16 + $0x78] sm:$0xf]
        %v1395 = vld [vmem:[#allocation16 + $0x7c] sm:$0xf]
        %v1396 = vld [vmem:[#allocation16 + $0x80] sm:$0xf]
        %v1397 = vld [vmem:[#allocation16 + $0x84] sm:$0xf]
        %v1398 = vld [vmem:[#allocation16 + $0x88] sm:$0xf]
        %v1399 = vld [vmem:[#allocation16 + $0x8c] sm:$0xf]
        %v1400 = vld [vmem:[#allocation16 + $0x90] sm:$0xf]
        %v1401 = vld [vmem:[#allocation16 + $0x94] sm:$0xf]
        %v1402 = vld [vmem:[#allocation16 + $0x98] sm:$0xf]
        %v1403 = vld [vmem:[#allocation16 + $0x9c] sm:$0xf]
        %v1404 = vld [vmem:[#allocation16 + $0xa0] sm:$0xf]
        %v1405 = vld [vmem:[#allocation16 + $0xa4] sm:$0xf]
        %v1406 = vld [vmem:[#allocation16 + $0xa8] sm:$0xf]
        %v1407 = vld [vmem:[#allocation16 + $0xac] sm:$0xf]
        %v1408 = vld [vmem:[#allocation16 + $0xb0] sm:$0xf]
        %v1409 = vld [vmem:[#allocation16 + $0xb4] sm:$0xf]
        %v1410 = vld [vmem:[#allocation16 + $0xb8] sm:$0xf]
        %v1411 = vld [vmem:[#allocation16 + $0xbc] sm:$0xf]
        %v1412 = vld [vmem:[#allocation16 + $0xc0] sm:$0xf]
        %v1413 = vld [vmem:[#allocation16 + $0xc4] sm:$0xf]
        %v1414 = vld [vmem:[#allocation16 + $0xc8] sm:$0xf]
        %v1415 = vld [vmem:[#allocation16 + $0xcc] sm:$0xf]
        %v1416 = vld [vmem:[#allocation16 + $0xd0] sm:$0xf]
        %v1417 = vld [vmem:[#allocation16 + $0xd4] sm:$0xf]
        %v1418 = vld [vmem:[#allocation16 + $0xd8] sm:$0xf]
        %v1419 = vld [vmem:[#allocation16 + $0xdc] sm:$0xf]
        %v1420 = vld [vmem:[#allocation16 + $0xe0] sm:$0xf]
        %v1421 = vld [vmem:[#allocation16 + $0xe4] sm:$0xf]
        %v1422 = vld [vmem:[#allocation16 + $0xe8] sm:$0xf]
        %v1423 = vld [vmem:[#allocation16 + $0xec] sm:$0xf]
        %v1424 = vld [vmem:[#allocation16 + $0xf0] sm:$0xf]
        %v1425 = vld [vmem:[#allocation16 + $0xf4] sm:$0xf]
        %v1426 = vld [vmem:[#allocation16 + $0xf8] sm:$0xf]
        %v1427 = vld [vmem:[#allocation16 + $0xfc] sm:$0xf]
        %v1428 = vld [vmem:[#allocation18] sm:$0x1]
        %v1430 = vperm.slane %v1428, 0
        %v1496 = vunpack.c.l.b16 %v1364
        %v1497 = vunpack.c.l.b16 %v1365
        %v1498 = vunpack.c.l.b16 %v1366
        %v1499 = vunpack.c.l.b16 %v1367
        %v1500 = vunpack.c.l.b16 %v1368
        %v1501 = vunpack.c.l.b16 %v1369
        %v1502 = vunpack.c.l.b16 %v1370
        %v1503 = vunpack.c.l.b16 %v1371
        %v1504 = vunpack.c.l.b16 %v1372
        %v1505 = vunpack.c.l.b16 %v1373
        %v1506 = vunpack.c.l.b16 %v1374
        %v1507 = vunpack.c.l.b16 %v1375
        %v1508 = vunpack.c.l.b16 %v1376
        %v1509 = vunpack.c.l.b16 %v1377
        %v1510 = vunpack.c.l.b16 %v1378
        %v1511 = vunpack.c.l.b16 %v1379
        %v1512 = vunpack.c.l.b16 %v1380
        %v1513 = vunpack.c.l.b16 %v1381
        %v1514 = vunpack.c.l.b16 %v1382
        %v1515 = vunpack.c.l.b16 %v1383
        %v1516 = vunpack.c.l.b16 %v1384
        %v1517 = vunpack.c.l.b16 %v1385
        %v1518 = vunpack.c.l.b16 %v1386
        %v1519 = vunpack.c.l.b16 %v1387
        %v1520 = vunpack.c.l.b16 %v1388
        %v1521 = vunpack.c.l.b16 %v1389
        %v1522 = vunpack.c.l.b16 %v1390
        %v1523 = vunpack.c.l.b16 %v1391
        %v1524 = vunpack.c.l.b16 %v1392
        %v1525 = vunpack.c.l.b16 %v1393
        %v1526 = vunpack.c.l.b16 %v1394
        %v1527 = vunpack.c.l.b16 %v1395
        %v1528 = vunpack.c.l.b16 %v1396
        %v1529 = vunpack.c.l.b16 %v1397
        %v1530 = vunpack.c.l.b16 %v1398
        %v1531 = vunpack.c.l.b16 %v1399
        %v1532 = vunpack.c.l.b16 %v1400
        %v1533 = vunpack.c.l.b16 %v1401
        %v1534 = vunpack.c.l.b16 %v1402
        %v1535 = vunpack.c.l.b16 %v1403
        %v1536 = vunpack.c.l.b16 %v1404
        %v1537 = vunpack.c.l.b16 %v1405
        %v1538 = vunpack.c.l.b16 %v1406
        %v1539 = vunpack.c.l.b16 %v1407
        %v1540 = vunpack.c.l.b16 %v1408
        %v1541 = vunpack.c.l.b16 %v1409
        %v1542 = vunpack.c.l.b16 %v1410
        %v1543 = vunpack.c.l.b16 %v1411
        %v1544 = vunpack.c.l.b16 %v1412
        %v1545 = vunpack.c.l.b16 %v1413
        %v1546 = vunpack.c.l.b16 %v1414
        %v1547 = vunpack.c.l.b16 %v1415
        %v1548 = vunpack.c.l.b16 %v1416
        %v1549 = vunpack.c.l.b16 %v1417
        %v1550 = vunpack.c.l.b16 %v1418
        %v1551 = vunpack.c.l.b16 %v1419
        %v1552 = vunpack.c.l.b16 %v1420
        %v1553 = vunpack.c.l.b16 %v1421
        %v1554 = vunpack.c.l.b16 %v1422
        %v1555 = vunpack.c.l.b16 %v1423
        %v1556 = vunpack.c.l.b16 %v1424
        %v1557 = vunpack.c.l.b16 %v1425
        %v1558 = vunpack.c.l.b16 %v1426
        %v1559 = vunpack.c.l.b16 %v1427
        %v1560 = vpack.c.b16 %v1497, %v1496
        %v1561 = vpack.c.b16 %v1499, %v1498
        %v1562 = vpack.c.b16 %v1501, %v1500
        %v1563 = vpack.c.b16 %v1503, %v1502
        %v1564 = vpack.c.b16 %v1505, %v1504
        %v1565 = vpack.c.b16 %v1507, %v1506
        %v1566 = vpack.c.b16 %v1509, %v1508
        %v1567 = vpack.c.b16 %v1511, %v1510
        %v1568 = vpack.c.b16 %v1513, %v1512
        %v1569 = vpack.c.b16 %v1515, %v1514
        %v1570 = vpack.c.b16 %v1517, %v1516
        %v1571 = vpack.c.b16 %v1519, %v1518
        %v1572 = vpack.c.b16 %v1521, %v1520
        %v1573 = vpack.c.b16 %v1523, %v1522
        %v1574 = vpack.c.b16 %v1525, %v1524
        %v1575 = vpack.c.b16 %v1527, %v1526
        %v1576 = vpack.c.b16 %v1529, %v1528
        %v1577 = vpack.c.b16 %v1531, %v1530
        %v1578 = vpack.c.b16 %v1533, %v1532
        %v1579 = vpack.c.b16 %v1535, %v1534
        %v1580 = vpack.c.b16 %v1537, %v1536
        %v1581 = vpack.c.b16 %v1539, %v1538
        %v1582 = vpack.c.b16 %v1541, %v1540
        %v1583 = vpack.c.b16 %v1543, %v1542
        %v1584 = vpack.c.b16 %v1545, %v1544
        %v1585 = vpack.c.b16 %v1547, %v1546
        %v1586 = vpack.c.b16 %v1549, %v1548
        %v1587 = vpack.c.b16 %v1551, %v1550
        %v1588 = vpack.c.b16 %v1553, %v1552
        %v1589 = vpack.c.b16 %v1555, %v1554
        %v1590 = vpack.c.b16 %v1557, %v1556
        %v1591 = vpack.c.b16 %v1559, %v1558
        %1624 = vmatpush.bf16.msra.mxu0 %v1567
        %1625 = vmatpush.bf16.msra.mxu0 %v1566
        %1626 = vmatpush.bf16.msra.mxu0 %v1565
        %1627 = vmatpush.bf16.msra.mxu0 %v1564
        %1628 = vmatpush.bf16.msra.mxu0 %v1563
        %1629 = vmatpush.bf16.msra.mxu0 %v1562
        %1630 = vmatpush.bf16.msra.mxu0 %v1561
        %1631 = vmatpush.bf16.msra.mxu0 %v1560
        %1632 = vmatmul.bf16.gmra.mxu0 %v1360
        %v1633 = vpop.f32.mrf.mxu0
        %v1634 = vadd.f32 %v1430, %v1633
        %v1635 = vpop.f32.mrf.mxu0
        %1636 = vdwg.mxu0
        %1637 = vmatpush.bf16.msra.mxu0 %v1575
        %1638 = vmatpush.bf16.msra.mxu0 %v1574
        %1639 = vmatpush.bf16.msra.mxu0 %v1573
        %1640 = vmatpush.bf16.msra.mxu0 %v1572
        %1641 = vmatpush.bf16.msra.mxu0 %v1571
        %1642 = vmatpush.bf16.msra.mxu0 %v1570
        %1643 = vmatpush.bf16.msra.mxu0 %v1569
        %1644 = vmatpush.bf16.msra.mxu0 %v1568
        %1645 = vmatmul.bf16.gmra.mxu0 %v1361
        %v1646 = vpop.f32.mrf.mxu0
        %v1647 = vadd.f32 %v1634, %v1646
        %v1648 = vpop.f32.mrf.mxu0
        %1649 = vdwg.mxu0
        %1650 = vmatpush.bf16.msra.mxu0 %v1583
        %1651 = vmatpush.bf16.msra.mxu0 %v1582
        %1652 = vmatpush.bf16.msra.mxu0 %v1581
        %1653 = vmatpush.bf16.msra.mxu0 %v1580
        %1654 = vmatpush.bf16.msra.mxu0 %v1579
        %1655 = vmatpush.bf16.msra.mxu0 %v1578
        %1656 = vmatpush.bf16.msra.mxu0 %v1577
        %1657 = vmatpush.bf16.msra.mxu0 %v1576
        %1658 = vmatmul.bf16.gmra.mxu0 %v1362
        %v1659 = vpop.f32.mrf.mxu0
        %v1660 = vadd.f32 %v1647, %v1659
        %v1661 = vpop.f32.mrf.mxu0
        %1662 = vdwg.mxu0
        %1663 = vmatpush.bf16.msra.mxu0 %v1591
        %1664 = vmatpush.bf16.msra.mxu0 %v1590
        %1665 = vmatpush.bf16.msra.mxu0 %v1589
        %1666 = vmatpush.bf16.msra.mxu0 %v1588
        %1667 = vmatpush.bf16.msra.mxu0 %v1587
        %1668 = vmatpush.bf16.msra.mxu0 %v1586
        %1669 = vmatpush.bf16.msra.mxu0 %v1585
        %1670 = vmatpush.bf16.msra.mxu0 %v1584
        %1671 = vmatmul.bf16.gmra.mxu0 %v1363
        %v1672 = vpop.f32.mrf.mxu0
        %v1673 = vadd.f32 %v1660, %v1672
        %v1674 = vpop.f32.mrf.mxu0
        %1675 = vdwg.mxu0
        %v1676 = vadd.f32 %v1075, %v1673
        %1677 = vst [vmem:[%s596] sm:$0xff] %v1676
        %s1678 = sand.u32 %s321, 1
        %s1679 = scalar_lea.sflag [#allocation6], %s1678
        %s1680 = sand.u32 %s321, 1
        %s1681 = smul.addr %s1680, 8
        %s1682 = scalar_lea.vmem [#allocation21], %s1681
        // Predicated region
        $region113: #{tpu_custom_call.1} parent=71 // pred_check
          %p1683 = pneg %p331
        $region114: #{tpu_custom_call.1} parent=71 // pred_check_branch
          %1685 = sbr.rel (%p1683) target = $region116
        $region115: #{tpu_custom_call.1} parent=71 // pred_region
          %1687 = vsyncadd %s1679, 0
          %s1688 = smul.addr %s35, 8
          %s1689 = scalar_lea.hbm %s13, %s1688
          %s1691 = sshll.u32 %s1682, 4
          %s1692 = int_to_ptr.vmem [resolvable:$true] %s1691
          %s1693 = sshll.u32 %s1689, 4
          %s1694 = int_to_ptr.hbm [resolvable:$true] %s1693
          %1696 = dma.vmem_to_hbm [thread:$0]  %s1692, 128, %s1694, %s1679
        $region116: #{tpu_custom_call.1} parent=71 // pred_fallthru
          _
      $region72: #{tpu_custom_call.1} parent=5 // pred_fallthru
        _
      %p1697 = scmp.le.s32.totalorder 2, %s30
      // Predicated region
      $region117: #{tpu_custom_call.1} parent=5 // pred_check
        %p1698 = pneg %p1697
      $region118: #{tpu_custom_call.1} parent=5 // pred_check_branch
        %1700 = sbr.rel (%p1698) target = $region120
      $region119: #{tpu_custom_call.1} parent=5 // pred_region
        %s1701 = ssub.s32 %s30, 2
        // Predicated region
        $region121: #{tpu_custom_call.1} parent=119 // pred_check
          %p1702 = pneg %p337
        $region122: #{tpu_custom_call.1} parent=119 // pred_check_branch
          %1704 = sbr.rel (%p1702) target = $region124
        $region123: #{tpu_custom_call.1} parent=119 // pred_region
          %s1705 = sand.u32 %s322, 1
          %s1706 = scalar_lea.sflag [#allocation6], %s1705
          %s1707 = sand.u32 %s322, 1
          %s1708 = smul.addr %s1707, 8
          %s1709 = scalar_lea.vmem [#allocation21], %s1708
          %1711 = dma.done %s1706, 128
        $region124: #{tpu_custom_call.1} parent=119 // pred_fallthru
          _
      $region120: #{tpu_custom_call.1} parent=5 // pred_fallthru
        _
    $region6: #{tpu_custom_call.1} parent=1 // loop_footer
      %s34 = sadd.s32 1, %s30
    $region7: #{tpu_custom_call.1} parent=1 // loop_footer_branch
      %29 = sbr.rel target = $region3
    $region8: #{tpu_custom_call.1} parent=1 // loop_exit
      _
    %1712 = vsyncpa [#allocation5], 1
    %s1713 = scalar_lea.sflag [#allocation5], 1
    %1714 = vsyncpa %s1713, 1
    %1715 = vsyncpa [#allocation8], 1
    %1716 = vsyncpa [#allocation11], 1
    %1717 = vsyncpa [#allocation14], 1
    %1718 = vsyncpa [#allocation17], 1
    %1719 = vsyncpa [#allocation20], 1
    %1720 = vsyncpa [#allocation6], 1
    %s1721 = scalar_lea.sflag [#allocation6], 1
    %1722 = vsyncpa %s1721, 1

// kernel: tpu_custom_call.1
$region0: #{tpu_custom_call.1}
  #allocation0 [shape = 'u32[]', space=smem, size = 0x4, offset = 0x4, fixed_abs, tag = 'smem constant byte address 0x4 - core index']
  #allocation1 [shape = 'u32[72,128]{1,0:T(1,128)}', space=vmem, size = 0x9000, scoped, tag = 'internal scratch']
  #allocation2 [shape = 'f32[8,384]{1,0:T(8,128)}', space=vmem, size = 0x3000, scoped, tag = 'scratch operand']
  #allocation3 [shape = 'f32[8,128]{1,0:T(8,128)}', space=vmem, size = 0x1000, scoped, tag = 'scratch operand']
  %s0 = inlined_call_operand.hbm [shape: f32[16,128], index: 0, kind: input, shape index: {}]
  %s1 = inlined_call_operand.hbm [shape: f32[1,128], index: 1, kind: input, shape index: {}]
  %s2 = inlined_call_operand.hbm [shape: bf16[128,384], index: 2, kind: input, shape index: {}]
  %s3 = inlined_call_operand.hbm [shape: f32[1,384], index: 3, kind: input, shape index: {}]
  %s4 = inlined_call_operand.hbm [shape: bf16[128,128], index: 4, kind: input, shape index: {}]
  %s5 = inlined_call_operand.vmem [shape: f32[1,128], index: 5, kind: input, shape index: {}]
  %s6 = inlined_call_operand.vmem [shape: f32[1,128], index: 6, kind: input, shape index: {}]
  %s7 = inlined_call_operand.hbm [shape: bf16[128,512], index: 7, kind: input, shape index: {}]
  %s8 = inlined_call_operand.hbm [shape: f32[1,512], index: 8, kind: input, shape index: {}]
  %s9 = inlined_call_operand.hbm [shape: bf16[512,128], index: 9, kind: input, shape index: {}]
  %s10 = inlined_call_operand.hbm [shape: f32[1,128], index: 10, kind: input, shape index: {}]
  %s11 = inlined_call_operand.vmem [shape: f32[8,128], index: 11, kind: input, shape index: {}]
  %s12 = inlined_call_operand.hbm [shape: f32[8,128], index: 12, kind: input, shape index: {}]
  %s13 = inlined_call_operand.hbm [shape: f32[16,128], index: 13, kind: output, shape index: {}]
  %s14 = sld [smem:[#allocation0]]
  $region125: #{tpu_custom_call.1} parent=0
    _
  %s16 = ssub.s32 1, %s14
  %s17 = scalar_select 0, %s16, %s14
  $region1: #{tpu_custom_call.1} parent=0
    #allocation4 [shape = 'u8[8192]{0}', space=vmem, size = 0x2000, scoped, tag = 'input window, operand 0']
    #allocation5 [shape = 's32[2]{0}', space=sflag, size = 0x8, scoped, tag = 'scoped memory for tpu_custom_call.1']
    #allocation6 [shape = 's32[2]{0}', space=sflag, size = 0x8, scoped, tag = 'scoped memory for tpu_custom_call.1']
    #allocation7 [shape = 'u8[512]{0}', space=vmem, size = 0x400, scoped, tag = 'input window, operand 1, single buffered']
    #allocation8 [shape = 's32[1]{0}', space=sflag, size = 0x4, scoped, tag = 'scoped memory for tpu_custom_call.1']
    #allocation9 [shape = 'u8[98304]{0}', space=vmem, size = 0x18000, scoped, tag = 'input window, operand 2, single buffered']
    #allocation10 [shape = 'u8[1536]{0}', space=vmem, size = 0x800, scoped, tag = 'input window, operand 3, single buffered']
    #allocation11 [shape = 's32[1]{0}', space=sflag, size = 0x4, scoped, tag = 'scoped memory for tpu_custom_call.1']
    #allocation12 [shape = 'u8[32768]{0}', space=vmem, size = 0x8000, scoped, tag = 'input window, operand 4, single buffered']
    #allocation13 [shape = 'u8[131072]{0}', space=vmem, size = 0x20000, scoped, tag = 'input window, operand 7, single buffered']
    #allocation14 [shape = 's32[1]{0}', space=sflag, size = 0x4, scoped, tag = 'scoped memory for tpu_custom_call.1']
    #allocation15 [shape = 'u8[2048]{0}', space=vmem, size = 0x800, scoped, tag = 'input window, operand 8, single buffered']
    #allocation16 [shape = 'u8[131072]{0}', space=vmem, size = 0x20000, scoped, tag = 'input window, operand 9, single buffered']
    #allocation17 [shape = 's32[1]{0}', space=sflag, size = 0x4, scoped, tag = 'scoped memory for tpu_custom_call.1']
    #allocation18 [shape = 'u8[512]{0}', space=vmem, size = 0x400, scoped, tag = 'input window, operand 10, single buffered']
    #allocation19 [shape = 'u8[4096]{0}', space=vmem, size = 0x1000, scoped, tag = 'input window, operand 12, single buffered']
    #allocation20 [shape = 's32[1]{0}', space=sflag, size = 0x4, scoped, tag = 'scoped memory for tpu_custom_call.1']
    #allocation21 [shape = 'u8[8192]{0}', space=vmem, size = 0x2000, scoped, tag = 'output window, operand 0']
    %18 = vsyncpa [#allocation5], 0
    %s19 = scalar_lea.sflag [#allocation5], 1
    %20 = vsyncpa %s19, 0
    %21 = vsyncpa [#allocation8], 0
    %22 = vsyncpa [#allocation11], 0
    %23 = vsyncpa [#allocation14], 0
    %24 = vsyncpa [#allocation17], 0
    %25 = vsyncpa [#allocation20], 0
    %26 = vsyncpa [#allocation6], 0
    %s27 = scalar_lea.sflag [#allocation6], 1
    %28 = vsyncpa %s27, 0
    loop: start=0, step=1, limit=4
    $region2: #{tpu_custom_call.1} parent=1 // loop_pre_header
      _
    $region3: #{tpu_custom_call.1} parent=1 // loop_header
      %s30 = sphi 0, %s34
      %p31 = scmp.ge.s32.totalorder %s30, 4
      %s40 = sphi 0, %s42
      %s43 = sphi 0, %s40
      %s44 = sphi 0, %s43
      %s60 = sphi 0, %s44
      %s64 = sphi 0, %s64
      %s66 = sphi 0, %s64
      %s67 = sphi 0, %s66
      %s81 = sphi 0, %s67
      %s85 = sphi 0, %s85
      %s87 = sphi 0, %s85
      %s88 = sphi 0, %s87
      %s102 = sphi 0, %s88
      %s106 = sphi 0, %s106
      %s108 = sphi 0, %s106
      %s109 = sphi 0, %s108
      %s123 = sphi 0, %s109
      %s127 = sphi 0, %s127
      %s129 = sphi 0, %s127
      %s130 = sphi 0, %s129
      %s144 = sphi 0, %s130
      %s148 = sphi 0, %s148
      %s150 = sphi 0, %s148
      %s151 = sphi 0, %s150
      %s165 = sphi 0, %s151
      %s169 = sphi 0, %s169
      %s171 = sphi 0, %s169
      %s172 = sphi 0, %s171
      %s186 = sphi 0, %s172
      %s190 = sphi 0, %s190
      %s192 = sphi 0, %s190
      %s193 = sphi 0, %s192
      %s207 = sphi 0, %s193
      %s211 = sphi 0, %s211
      %s213 = sphi 0, %s211
      %s214 = sphi 0, %s213
      %s228 = sphi 0, %s214
      %s232 = sphi 0, %s232
      %s234 = sphi 0, %s232
      %s235 = sphi 0, %s234
      %s249 = sphi 0, %s235
      %s253 = sphi 0, %s253
      %s255 = sphi 0, %s253
      %s256 = sphi 0, %s255
      %s270 = sphi 0, %s256
      %s274 = sphi 0, %s274
      %s276 = sphi 0, %s274
      %s277 = sphi 0, %s276
      %s291 = sphi 0, %s277
      %s295 = sphi 0, %s295
      %s297 = sphi 0, %s295
      %s298 = sphi 0, %s297
      %s312 = sphi 0, %s298
      %s318 = sphi 0, %s320
      %s321 = sphi 0, %s318
      %s322 = sphi 0, %s321
      %s338 = sphi 0, %s322
    $region4: #{tpu_custom_call.1} parent=1 // loop_header_branch
      %33 = sbr.rel (%p31) target = $region8
    $region5: #{tpu_custom_call.1} parent=1 // loop_body
      %s35 = ssub.s32 %s30, 1
      %s36 = ssub.s32 %s30, 2
      %s37 = sadd.s32 %s30, 1
      %s38 = ssub.s32 %s30, %s37
      %p39 = scmp.eq.s32.totalorder %s38, 0
      %s41 = sadd.s32 %s40, 1
      %s42 = scalar_select %p39, %s40, %s41
      %p45 = pneg %p39
      %p46 = scmp.eq.s32.totalorder %s30, 1
      %p47 = por %p45, %p46
      %p48 = scmp.ne.s32.totalorder %s40, %s43
      %p49 = scmp.eq.s32.totalorder %s30, 0
      %p50 = por %p48, %p49
      %p51 = scmp.ne.s32.totalorder %s40, %s43
      %p52 = scmp.eq.s32.totalorder %s35, 1
      %p53 = por %p51, %p52
      %p54 = scmp.ne.s32.totalorder %s43, %s44
      %p55 = scmp.eq.s32.totalorder %s35, 0
      %p56 = por %p54, %p55
      %p57 = scmp.ne.s32.totalorder %s43, %s44
      %p58 = scmp.eq.s32.totalorder %s36, 1
      %p59 = por %p57, %p58
      %p61 = scmp.ne.s32.totalorder %s44, %s60
      %p62 = scmp.eq.s32.totalorder %s36, 0
      %p63 = por %p61, %p62
      %s65 = sadd.s32 %s64, 1
      %p68 = scmp.eq.s32.totalorder %s30, 1
      %p69 = scmp.ne.s32.totalorder %s64, %s66
      %p70 = scmp.eq.s32.totalorder %s30, 0
      %p71 = por %p69, %p70
      %p72 = scmp.ne.s32.totalorder %s64, %s66
      %p73 = scmp.eq.s32.totalorder %s35, 1
      %p74 = por %p72, %p73
      %p75 = scmp.ne.s32.totalorder %s66, %s67
      %p76 = scmp.eq.s32.totalorder %s35, 0
      %p77 = por %p75, %p76
      %p78 = scmp.ne.s32.totalorder %s66, %s67
      %p79 = scmp.eq.s32.totalorder %s36, 1
      %p80 = por %p78, %p79
      %p82 = scmp.ne.s32.totalorder %s67, %s81
      %p83 = scmp.eq.s32.totalorder %s36, 0
      %p84 = por %p82, %p83
      %s86 = sadd.s32 %s85, 1
      %p89 = scmp.eq.s32.totalorder %s30, 1
      %p90 = scmp.ne.s32.totalorder %s85, %s87
      %p91 = scmp.eq.s32.totalorder %s30, 0
      %p92 = por %p90, %p91
      %p93 = scmp.ne.s32.totalorder %s85, %s87
      %p94 = scmp.eq.s32.totalorder %s35, 1
      %p95 = por %p93, %p94
      %p96 = scmp.ne.s32.totalorder %s87, %s88
      %p97 = scmp.eq.s32.totalorder %s35, 0
      %p98 = por %p96, %p97
      %p99 = scmp.ne.s32.totalorder %s87, %s88
      %p100 = scmp.eq.s32.totalorder %s36, 1
      %p101 = por %p99, %p100
      %p103 = scmp.ne.s32.totalorder %s88, %s102
      %p104 = scmp.eq.s32.totalorder %s36, 0
      %p105 = por %p103, %p104
      %s107 = sadd.s32 %s106, 1
      %p110 = scmp.eq.s32.totalorder %s30, 1
      %p111 = scmp.ne.s32.totalorder %s106, %s108
      %p112 = scmp.eq.s32.totalorder %s30, 0
      %p113 = por %p111, %p112
      %p114 = scmp.ne.s32.totalorder %s106, %s108
      %p115 = scmp.eq.s32.totalorder %s35, 1
      %p116 = por %p114, %p115
      %p117 = scmp.ne.s32.totalorder %s108, %s109
      %p118 = scmp.eq.s32.totalorder %s35, 0
      %p119 = por %p117, %p118
      %p120 = scmp.ne.s32.totalorder %s108, %s109
      %p121 = scmp.eq.s32.totalorder %s36, 1
      %p122 = por %p120, %p121
      %p124 = scmp.ne.s32.totalorder %s109, %s123
      %p125 = scmp.eq.s32.totalorder %s36, 0
      %p126 = por %p124, %p125
      %s128 = sadd.s32 %s127, 1
      %p131 = scmp.eq.s32.totalorder %s30, 1
      %p132 = scmp.ne.s32.totalorder %s127, %s129
      %p133 = scmp.eq.s32.totalorder %s30, 0
      %p134 = por %p132, %p133
      %p135 = scmp.ne.s32.totalorder %s127, %s129
      %p136 = scmp.eq.s32.totalorder %s35, 1
      %p137 = por %p135, %p136
      %p138 = scmp.ne.s32.totalorder %s129, %s130
      %p139 = scmp.eq.s32.totalorder %s35, 0
      %p140 = por %p138, %p139
      %p141 = scmp.ne.s32.totalorder %s129, %s130
      %p142 = scmp.eq.s32.totalorder %s36, 1
      %p143 = por %p141, %p142
      %p145 = scmp.ne.s32.totalorder %s130, %s144
      %p146 = scmp.eq.s32.totalorder %s36, 0
      %p147 = por %p145, %p146
      %s149 = sadd.s32 %s148, 1
      %p152 = scmp.eq.s32.totalorder %s30, 1
      %p153 = scmp.ne.s32.totalorder %s148, %s150
      %p154 = scmp.eq.s32.totalorder %s30, 0
      %p155 = por %p153, %p154
      %p156 = scmp.ne.s32.totalorder %s148, %s150
      %p157 = scmp.eq.s32.totalorder %s35, 1
      %p158 = por %p156, %p157
      %p159 = scmp.ne.s32.totalorder %s150, %s151
      %p160 = scmp.eq.s32.totalorder %s35, 0
      %p161 = por %p159, %p160
      %p162 = scmp.ne.s32.totalorder %s150, %s151
      %p163 = scmp.eq.s32.totalorder %s36, 1
      %p164 = por %p162, %p163
      %p166 = scmp.ne.s32.totalorder %s151, %s165
      %p167 = scmp.eq.s32.totalorder %s36, 0
      %p168 = por %p166, %p167
      %s170 = sadd.s32 %s169, 1
      %p173 = scmp.eq.s32.totalorder %s30, 1
      %p174 = scmp.ne.s32.totalorder %s169, %s171
      %p175 = scmp.eq.s32.totalorder %s30, 0
      %p176 = por %p174, %p175
      %p177 = scmp.ne.s32.totalorder %s169, %s171
      %p178 = scmp.eq.s32.totalorder %s35, 1
      %p179 = por %p177, %p178
      %p180 = scmp.ne.s32.totalorder %s171, %s172
      %p181 = scmp.eq.s32.totalorder %s35, 0
      %p182 = por %p180, %p181
      %p183 = scmp.ne.s32.totalorder %s171, %s172
      %p184 = scmp.eq.s32.totalorder %s36, 1
      %p185 = por %p183, %p184
      %p187 = scmp.ne.s32.totalorder %s172, %s186
      %p188 = scmp.eq.s32.totalorder %s36, 0
      %p189 = por %p187, %p188
      %s191 = sadd.s32 %s190, 1
      %p194 = scmp.eq.s32.totalorder %s30, 1
      %p195 = scmp.ne.s32.totalorder %s190, %s192
      %p196 = scmp.eq.s32.totalorder %s30, 0
      %p197 = por %p195, %p196
      %p198 = scmp.ne.s32.totalorder %s190, %s192
      %p199 = scmp.eq.s32.totalorder %s35, 1
      %p200 = por %p198, %p199
      %p201 = scmp.ne.s32.totalorder %s192, %s193
      %p202 = scmp.eq.s32.totalorder %s35, 0
      %p203 = por %p201, %p202
      %p204 = scmp.ne.s32.totalorder %s192, %s193
      %p205 = scmp.eq.s32.totalorder %s36, 1
      %p206 = por %p204, %p205
      %p208 = scmp.ne.s32.totalorder %s193, %s207
      %p209 = scmp.eq.s32.totalorder %s36, 0
      %p210 = por %p208, %p209
      %s212 = sadd.s32 %s211, 1
      %p215 = scmp.eq.s32.totalorder %s30, 1
      %p216 = scmp.ne.s32.totalorder %s211, %s213
      %p217 = scmp.eq.s32.totalorder %s30, 0
      %p218 = por %p216, %p217
      %p219 = scmp.ne.s32.totalorder %s211, %s213
      %p220 = scmp.eq.s32.totalorder %s35, 1
      %p221 = por %p219, %p220
      %p222 = scmp.ne.s32.totalorder %s213, %s214
      %p223 = scmp.eq.s32.totalorder %s35, 0
      %p224 = por %p222, %p223
      %p225 = scmp.ne.s32.totalorder %s213, %s214
      %p226 = scmp.eq.s32.totalorder %s36, 1
      %p227 = por %p225, %p226
      %p229 = scmp.ne.s32.totalorder %s214, %s228
      %p230 = scmp.eq.s32.totalorder %s36, 0
      %p231 = por %p229, %p230
      %s233 = sadd.s32 %s232, 1
      %p236 = scmp.eq.s32.totalorder %s30, 1
      %p237 = scmp.ne.s32.totalorder %s232, %s234
      %p238 = scmp.eq.s32.totalorder %s30, 0
      %p239 = por %p237, %p238
      %p240 = scmp.ne.s32.totalorder %s232, %s234
      %p241 = scmp.eq.s32.totalorder %s35, 1
      %p242 = por %p240, %p241
      %p243 = scmp.ne.s32.totalorder %s234, %s235
      %p244 = scmp.eq.s32.totalorder %s35, 0
      %p245 = por %p243, %p244
      %p246 = scmp.ne.s32.totalorder %s234, %s235
      %p247 = scmp.eq.s32.totalorder %s36, 1
      %p248 = por %p246, %p247
      %p250 = scmp.ne.s32.totalorder %s235, %s249
      %p251 = scmp.eq.s32.totalorder %s36, 0
      %p252 = por %p250, %p251
      %s254 = sadd.s32 %s253, 1
      %p257 = scmp.eq.s32.totalorder %s30, 1
      %p258 = scmp.ne.s32.totalorder %s253, %s255
      %p259 = scmp.eq.s32.totalorder %s30, 0
      %p260 = por %p258, %p259
      %p261 = scmp.ne.s32.totalorder %s253, %s255
      %p262 = scmp.eq.s32.totalorder %s35, 1
      %p263 = por %p261, %p262
      %p264 = scmp.ne.s32.totalorder %s255, %s256
      %p265 = scmp.eq.s32.totalorder %s35, 0
      %p266 = por %p264, %p265
      %p267 = scmp.ne.s32.totalorder %s255, %s256
      %p268 = scmp.eq.s32.totalorder %s36, 1
      %p269 = por %p267, %p268
      %p271 = scmp.ne.s32.totalorder %s256, %s270
      %p272 = scmp.eq.s32.totalorder %s36, 0
      %p273 = por %p271, %p272
      %s275 = sadd.s32 %s274, 1
      %p278 = scmp.eq.s32.totalorder %s30, 1
      %p279 = scmp.ne.s32.totalorder %s274, %s276
      %p280 = scmp.eq.s32.totalorder %s30, 0
      %p281 = por %p279, %p280
      %p282 = scmp.ne.s32.totalorder %s274, %s276
      %p283 = scmp.eq.s32.totalorder %s35, 1
      %p284 = por %p282, %p283
      %p285 = scmp.ne.s32.totalorder %s276, %s277
      %p286 = scmp.eq.s32.totalorder %s35, 0
      %p287 = por %p285, %p286
      %p288 = scmp.ne.s32.totalorder %s276, %s277
      %p289 = scmp.eq.s32.totalorder %s36, 1
      %p290 = por %p288, %p289
      %p292 = scmp.ne.s32.totalorder %s277, %s291
      %p293 = scmp.eq.s32.totalorder %s36, 0
      %p294 = por %p292, %p293
      %s296 = sadd.s32 %s295, 1
      %p299 = scmp.eq.s32.totalorder %s30, 1
      %p300 = scmp.ne.s32.totalorder %s295, %s297
      %p301 = scmp.eq.s32.totalorder %s30, 0
      %p302 = por %p300, %p301
      %p303 = scmp.ne.s32.totalorder %s295, %s297
      %p304 = scmp.eq.s32.totalorder %s35, 1
      %p305 = por %p303, %p304
      %p306 = scmp.ne.s32.totalorder %s297, %s298
      %p307 = scmp.eq.s32.totalorder %s35, 0
      %p308 = por %p306, %p307
      %p309 = scmp.ne.s32.totalorder %s297, %s298
      %p310 = scmp.eq.s32.totalorder %s36, 1
      %p311 = por %p309, %p310
      %p313 = scmp.ne.s32.totalorder %s298, %s312
      %p314 = scmp.eq.s32.totalorder %s36, 0
      %p315 = por %p313, %p314
      %s316 = ssub.s32 %s30, %s37
      %p317 = scmp.eq.s32.totalorder %s316, 0
      %s319 = sadd.s32 %s318, 1
      %s320 = scalar_select %p317, %s318, %s319
      %p323 = pneg %p317
      %p324 = scmp.eq.s32.totalorder %s30, 1
      %p325 = por %p323, %p324
      %p326 = scmp.ne.s32.totalorder %s318, %s321
      %p327 = scmp.eq.s32.totalorder %s30, 0
      %p328 = por %p326, %p327
      %p329 = scmp.ne.s32.totalorder %s318, %s321
      %p330 = scmp.eq.s32.totalorder %s35, 1
      %p331 = por %p329, %p330
      %p332 = scmp.ne.s32.totalorder %s321, %s322
      %p333 = scmp.eq.s32.totalorder %s35, 0
      %p334 = por %p332, %p333
      %p335 = scmp.ne.s32.totalorder %s321, %s322
      %p336 = scmp.eq.s32.totalorder %s36, 1
      %p337 = por %p335, %p336
      %p339 = scmp.ne.s32.totalorder %s322, %s338
      %p340 = scmp.eq.s32.totalorder %s36, 0
      %p341 = por %p339, %p340
      %p342 = scmp.le.s32.totalorder 1, %s30
      %p343 = scmp.lt.s32.totalorder %s30, 3
      %p344 = pnand %p342, %p343
      %p345 = pneg %p344
      // Predicated region
      $region9: #{tpu_custom_call.1} parent=5 // pred_check
        _
      $region10: #{tpu_custom_call.1} parent=5 // pred_check_branch
        %347 = sbr.rel (%p344) target = $region12
      $region11: #{tpu_custom_call.1} parent=5 // pred_region
        %s348 = ssub.s32 %s30, 1
        // Predicated region
        $region13: #{tpu_custom_call.1} parent=11 // pred_check
          %p349 = pneg %p77
        $region14: #{tpu_custom_call.1} parent=11 // pred_check_branch
          %351 = sbr.rel (%p349) target = $region16
        $region15: #{tpu_custom_call.1} parent=11 // pred_region
          %353 = vsyncadd [#allocation8], 0
          %s355 = sshll.u32 %s1, 4
          %s356 = int_to_ptr.hbm [resolvable:$true] %s355
          %s357 = sshll.u32 [#allocation7], 4
          %s358 = int_to_ptr.vmem [resolvable:$true] %s357
          %360 = dma.hbm_to_vmem [thread:$0]  %s356, 16, %s358, [#allocation8]
        $region16: #{tpu_custom_call.1} parent=11 // pred_fallthru
          _
        // Predicated region
        $region17: #{tpu_custom_call.1} parent=11 // pred_check
          %p361 = pneg %p98
        $region18: #{tpu_custom_call.1} parent=11 // pred_check_branch
          %363 = sbr.rel (%p361) target = $region20
        $region19: #{tpu_custom_call.1} parent=11 // pred_region
          %365 = vsyncadd [#allocation8], 0
          %s366 = sshll.u32 %s2, 4
          %s367 = int_to_ptr.hbm [resolvable:$true] %s366
          %s368 = sshll.u32 [#allocation9], 4
          %s369 = int_to_ptr.vmem [resolvable:$true] %s368
          %374 = dma.hbm_to_vmem [thread:$0]  %s367, 3072, %s369, [#allocation8], 192, 192, 12
        $region20: #{tpu_custom_call.1} parent=11 // pred_fallthru
          _
        // Predicated region
        $region21: #{tpu_custom_call.1} parent=11 // pred_check
          %p375 = pneg %p119
        $region22: #{tpu_custom_call.1} parent=11 // pred_check_branch
          %377 = sbr.rel (%p375) target = $region24
        $region23: #{tpu_custom_call.1} parent=11 // pred_region
          %379 = vsyncadd [#allocation11], 0
          %s381 = sshll.u32 %s3, 4
          %s382 = int_to_ptr.hbm [resolvable:$true] %s381
          %s383 = sshll.u32 [#allocation10], 4
          %s384 = int_to_ptr.vmem [resolvable:$true] %s383
          %386 = dma.hbm_to_vmem [thread:$0]  %s382, 48, %s384, [#allocation11]
        $region24: #{tpu_custom_call.1} parent=11 // pred_fallthru
          _
        // Predicated region
        $region25: #{tpu_custom_call.1} parent=11 // pred_check
          %p387 = pneg %p140
        $region26: #{tpu_custom_call.1} parent=11 // pred_check_branch
          %389 = sbr.rel (%p387) target = $region28
        $region27: #{tpu_custom_call.1} parent=11 // pred_region
          %391 = vsyncadd [#allocation11], 0
          %s392 = sshll.u32 %s4, 4
          %s393 = int_to_ptr.hbm [resolvable:$true] %s392
          %s394 = sshll.u32 [#allocation12], 4
          %s395 = int_to_ptr.vmem [resolvable:$true] %s394
          %400 = dma.hbm_to_vmem [thread:$0]  %s393, 1024, %s395, [#allocation11], 64, 64, 4
        $region28: #{tpu_custom_call.1} parent=11 // pred_fallthru
          _
        // Predicated region
        $region29: #{tpu_custom_call.1} parent=11 // pred_check
          %p401 = pneg %p161
        $region30: #{tpu_custom_call.1} parent=11 // pred_check_branch
          %403 = sbr.rel (%p401) target = $region32
        $region31: #{tpu_custom_call.1} parent=11 // pred_region
          _
        $region32: #{tpu_custom_call.1} parent=11 // pred_fallthru
          _
        // Predicated region
        $region33: #{tpu_custom_call.1} parent=11 // pred_check
          %p404 = pneg %p182
        $region34: #{tpu_custom_call.1} parent=11 // pred_check_branch
          %406 = sbr.rel (%p404) target = $region36
        $region35: #{tpu_custom_call.1} parent=11 // pred_region
          _
        $region36: #{tpu_custom_call.1} parent=11 // pred_fallthru
          _
        // Predicated region
        $region37: #{tpu_custom_call.1} parent=11 // pred_check
          %p407 = pneg %p203
        $region38: #{tpu_custom_call.1} parent=11 // pred_check_branch
          %409 = sbr.rel (%p407) target = $region40
        $region39: #{tpu_custom_call.1} parent=11 // pred_region
          %411 = vsyncadd [#allocation14], 0
          %s412 = sshll.u32 %s7, 4
          %s413 = int_to_ptr.hbm [resolvable:$true] %s412
          %s414 = sshll.u32 [#allocation13], 4
          %s415 = int_to_ptr.vmem [resolvable:$true] %s414
          %420 = dma.hbm_to_vmem [thread:$0]  %s413, 4096, %s415, [#allocation14], 256, 256, 16
        $region40: #{tpu_custom_call.1} parent=11 // pred_fallthru
          _
        // Predicated region
        $region41: #{tpu_custom_call.1} parent=11 // pred_check
          %p421 = pneg %p224
        $region42: #{tpu_custom_call.1} parent=11 // pred_check_branch
          %423 = sbr.rel (%p421) target = $region44
        $region43: #{tpu_custom_call.1} parent=11 // pred_region
          %425 = vsyncadd [#allocation14], 0
          %s427 = sshll.u32 %s8, 4
          %s428 = int_to_ptr.hbm [resolvable:$true] %s427
          %s429 = sshll.u32 [#allocation15], 4
          %s430 = int_to_ptr.vmem [resolvable:$true] %s429
          %432 = dma.hbm_to_vmem [thread:$0]  %s428, 64, %s430, [#allocation14]
        $region44: #{tpu_custom_call.1} parent=11 // pred_fallthru
          _
        // Predicated region
        $region45: #{tpu_custom_call.1} parent=11 // pred_check
          %p433 = pneg %p245
        $region46: #{tpu_custom_call.1} parent=11 // pred_check_branch
          %435 = sbr.rel (%p433) target = $region48
        $region47: #{tpu_custom_call.1} parent=11 // pred_region
          %437 = vsyncadd [#allocation17], 0
          %s438 = sshll.u32 %s9, 4
          %s439 = int_to_ptr.hbm [resolvable:$true] %s438
          %s440 = sshll.u32 [#allocation16], 4
          %s441 = int_to_ptr.vmem [resolvable:$true] %s440
          %446 = dma.hbm_to_vmem [thread:$0]  %s439, 4096, %s441, [#allocation17], 64, 64, 4
        $region48: #{tpu_custom_call.1} parent=11 // pred_fallthru
          _
        // Predicated region
        $region49: #{tpu_custom_call.1} parent=11 // pred_check
          %p447 = pneg %p266
        $region50: #{tpu_custom_call.1} parent=11 // pred_check_branch
          %449 = sbr.rel (%p447) target = $region52
        $region51: #{tpu_custom_call.1} parent=11 // pred_region
          %451 = vsyncadd [#allocation17], 0
          %s453 = sshll.u32 %s10, 4
          %s454 = int_to_ptr.hbm [resolvable:$true] %s453
          %s455 = sshll.u32 [#allocation18], 4
          %s456 = int_to_ptr.vmem [resolvable:$true] %s455
          %458 = dma.hbm_to_vmem [thread:$0]  %s454, 16, %s456, [#allocation17]
        $region52: #{tpu_custom_call.1} parent=11 // pred_fallthru
          _
        // Predicated region
        $region53: #{tpu_custom_call.1} parent=11 // pred_check
          %p459 = pneg %p287
        $region54: #{tpu_custom_call.1} parent=11 // pred_check_branch
          %461 = sbr.rel (%p459) target = $region56
        $region55: #{tpu_custom_call.1} parent=11 // pred_region
          _
        $region56: #{tpu_custom_call.1} parent=11 // pred_fallthru
          _
        // Predicated region
        $region57: #{tpu_custom_call.1} parent=11 // pred_check
          %p462 = pneg %p308
        $region58: #{tpu_custom_call.1} parent=11 // pred_check_branch
          %464 = sbr.rel (%p462) target = $region60
        $region59: #{tpu_custom_call.1} parent=11 // pred_region
          %466 = vsyncadd [#allocation20], 0
          %s468 = sshll.u32 %s12, 4
          %s469 = int_to_ptr.hbm [resolvable:$true] %s468
          %s470 = sshll.u32 [#allocation19], 4
          %s471 = int_to_ptr.vmem [resolvable:$true] %s470
          %473 = dma.hbm_to_vmem [thread:$0]  %s469, 128, %s471, [#allocation20]
        $region60: #{tpu_custom_call.1} parent=11 // pred_fallthru
          _
      $region12: #{tpu_custom_call.1} parent=5 // pred_fallthru
        _
      %p474 = scmp.lt.s32.totalorder %s30, 2
      // Predicated region
      $region61: #{tpu_custom_call.1} parent=5 // pred_check
        %p475 = pneg %p474
      $region62: #{tpu_custom_call.1} parent=5 // pred_check_branch
        %477 = sbr.rel (%p475) target = $region64
      $region63: #{tpu_custom_call.1} parent=5 // pred_region
        // Predicated region
        $region65: #{tpu_custom_call.1} parent=63 // pred_check
          %p478 = pneg %p50
        $region66: #{tpu_custom_call.1} parent=63 // pred_check_branch
          %480 = sbr.rel (%p478) target = $region68
        $region67: #{tpu_custom_call.1} parent=63 // pred_region
          %s481 = sand.u32 %s40, 1
          %s482 = scalar_lea.sflag [#allocation5], %s481
          %s483 = sand.u32 %s40, 1
          %s484 = smul.addr %s483, 8
          %s485 = scalar_lea.vmem [#allocation4], %s484
          %487 = vsyncadd %s482, 0
          %s488 = smul.addr %s30, 8
          %s489 = scalar_lea.hbm %s0, %s488
          %s491 = sshll.u32 %s489, 4
          %s492 = int_to_ptr.hbm [resolvable:$true] %s491
          %s493 = sshll.u32 %s485, 4
          %s494 = int_to_ptr.vmem [resolvable:$true] %s493
          %496 = dma.hbm_to_vmem [thread:$0]  %s492, 128, %s494, %s482
        $region68: #{tpu_custom_call.1} parent=63 // pred_fallthru
          _
      $region64: #{tpu_custom_call.1} parent=5 // pred_fallthru
        _
      %p497 = scmp.le.s32.totalorder 1, %s30
      %p498 = scmp.lt.s32.totalorder %s30, 3
      %p499 = pnand %p497, %p498
      %p500 = pneg %p499
      // Predicated region
      $region69: #{tpu_custom_call.1} parent=5 // pred_check
        _
      $region70: #{tpu_custom_call.1} parent=5 // pred_check_branch
        %502 = sbr.rel (%p499) target = $region72
      $region71: #{tpu_custom_call.1} parent=5 // pred_region
        %s503 = ssub.s32 %s30, 1
        %s504 = sand.u32 %s43, 1
        %s505 = scalar_lea.sflag [#allocation5], %s504
        %s506 = sand.u32 %s43, 1
        %s507 = smul.addr %s506, 8
        %s508 = scalar_lea.vmem [#allocation4], %s507
        // Predicated region
        $region73: #{tpu_custom_call.1} parent=71 // pred_check
          %p509 = pneg %p56
        $region74: #{tpu_custom_call.1} parent=71 // pred_check_branch
          %511 = sbr.rel (%p509) target = $region76
        $region75: #{tpu_custom_call.1} parent=71 // pred_region
          %513 = dma.done %s505, 128
        $region76: #{tpu_custom_call.1} parent=71 // pred_fallthru
          _
        // Predicated region
        $region77: #{tpu_custom_call.1} parent=71 // pred_check
          %p514 = pneg %p77
        $region78: #{tpu_custom_call.1} parent=71 // pred_check_branch
          %516 = sbr.rel (%p514) target = $region80
        $region79: #{tpu_custom_call.1} parent=71 // pred_region
          %518 = dma.done [#allocation8], 16
        $region80: #{tpu_custom_call.1} parent=71 // pred_fallthru
          _
        // Predicated region
        $region81: #{tpu_custom_call.1} parent=71 // pred_check
          %p519 = pneg %p98
        $region82: #{tpu_custom_call.1} parent=71 // pred_check_branch
          %521 = sbr.rel (%p519) target = $region84
        $region83: #{tpu_custom_call.1} parent=71 // pred_region
          %523 = dma.done [#allocation8], 3072
        $region84: #{tpu_custom_call.1} parent=71 // pred_fallthru
          _
        // Predicated region
        $region85: #{tpu_custom_call.1} parent=71 // pred_check
          %p524 = pneg %p119
        $region86: #{tpu_custom_call.1} parent=71 // pred_check_branch
          %526 = sbr.rel (%p524) target = $region88
        $region87: #{tpu_custom_call.1} parent=71 // pred_region
          %528 = dma.done [#allocation11], 48
        $region88: #{tpu_custom_call.1} parent=71 // pred_fallthru
          _
        // Predicated region
        $region89: #{tpu_custom_call.1} parent=71 // pred_check
          %p529 = pneg %p140
        $region90: #{tpu_custom_call.1} parent=71 // pred_check_branch
          %531 = sbr.rel (%p529) target = $region92
        $region91: #{tpu_custom_call.1} parent=71 // pred_region
          %533 = dma.done [#allocation11], 1024
        $region92: #{tpu_custom_call.1} parent=71 // pred_fallthru
          _
        // Predicated region
        $region93: #{tpu_custom_call.1} parent=71 // pred_check
          %p534 = pneg %p203
        $region94: #{tpu_custom_call.1} parent=71 // pred_check_branch
          %536 = sbr.rel (%p534) target = $region96
        $region95: #{tpu_custom_call.1} parent=71 // pred_region
          %538 = dma.done [#allocation14], 4096
        $region96: #{tpu_custom_call.1} parent=71 // pred_fallthru
          _
        // Predicated region
        $region97: #{tpu_custom_call.1} parent=71 // pred_check
          %p539 = pneg %p224
        $region98: #{tpu_custom_call.1} parent=71 // pred_check_branch
          %541 = sbr.rel (%p539) target = $region100
        $region99: #{tpu_custom_call.1} parent=71 // pred_region
          %543 = dma.done [#allocation14], 64
        $region100: #{tpu_custom_call.1} parent=71 // pred_fallthru
          _
        // Predicated region
        $region101: #{tpu_custom_call.1} parent=71 // pred_check
          %p544 = pneg %p245
        $region102: #{tpu_custom_call.1} parent=71 // pred_check_branch
          %546 = sbr.rel (%p544) target = $region104
        $region103: #{tpu_custom_call.1} parent=71 // pred_region
          %548 = dma.done [#allocation17], 4096
        $region104: #{tpu_custom_call.1} parent=71 // pred_fallthru
          _
        // Predicated region
        $region105: #{tpu_custom_call.1} parent=71 // pred_check
          %p549 = pneg %p266
        $region106: #{tpu_custom_call.1} parent=71 // pred_check_branch
          %551 = sbr.rel (%p549) target = $region108
        $region107: #{tpu_custom_call.1} parent=71 // pred_region
          %553 = dma.done [#allocation17], 16
        $region108: #{tpu_custom_call.1} parent=71 // pred_fallthru
          _
        // Predicated region
        $region109: #{tpu_custom_call.1} parent=71 // pred_check
          %p554 = pneg %p308
        $region110: #{tpu_custom_call.1} parent=71 // pred_check_branch
          %556 = sbr.rel (%p554) target = $region112
        $region111: #{tpu_custom_call.1} parent=71 // pred_region
          %558 = dma.done [#allocation20], 128
        $region112: #{tpu_custom_call.1} parent=71 // pred_fallthru
          _
        %s559 = sand.u32 %s43, 1
        %s560 = scalar_lea.sflag [#allocation5], %s559
        %s561 = sand.u32 %s43, 1
        %s562 = smul.addr %s561, 8
        %s563 = scalar_lea.vmem [#allocation4], %s562
        %p564 = pneg %p56
        %p565 = pneg %p53
        %p566 = pneg %p77
        %p567 = pneg %p74
        %p568 = pneg %p98
        %p569 = pneg %p95
        %p570 = pneg %p119
        %p571 = pneg %p116
        %p572 = pneg %p140
        %p573 = pneg %p137
        %p574 = pneg %p161
        %p575 = pneg %p158
        %p576 = pneg %p182
        %p577 = pneg %p179
        %p578 = pneg %p203
        %p579 = pneg %p200
        %p580 = pneg %p224
        %p581 = pneg %p221
        %p582 = pneg %p245
        %p583 = pneg %p242
        %p584 = pneg %p266
        %p585 = pneg %p263
        %p586 = pneg %p287
        %p587 = pneg %p284
        %p588 = pneg %p308
        %p589 = pneg %p305
        %p590 = pneg %p334
        %p591 = pneg %p331
        %s592 = sand.u32 %s321, 1
        %s593 = scalar_lea.sflag [#allocation6], %s592
        %s594 = sand.u32 %s321, 1
        %s595 = smul.addr %s594, 8
        %s596 = scalar_lea.vmem [#allocation21], %s595
        %v598 = vld [vmem:[%s508] sm:$0xff]
        %v599 = vmul.f32 %v598, %v598
        %600 = vadd.xlane.f32.xlu0 %v599
        %v601 = vpop.xlane.xlu0 %600
        %v602 = vrcp.pop 128.0
        %v603 = vmul.f32 128.0, %v602
        %v604 = vsub.f32 1.0, %v603
        %v605 = vmul.f32 %v602, %v604
        %v606 = vadd.f32 %v602, %v605
        %vm607 = vweird.f32 %v602
        %v608 = vsel %vm607, %v602, %v606
        %v609 = vmul.f32 %v601, %v608
        %v610 = vadd.f32 %v609, 1e-06
        %v611 = vrsqrt.pop %v610
        %v612 = vmul.f32 %v611, %v610
        %v613 = vmul.f32 %v612, %v611
        %v614 = vmul.f32 0.5, %v613
        %v615 = vsub.f32 1.5, %v614
        %v616 = vmul.f32 %v611, %v615
        %vm617 = vweird.f32 %v610
        %vm618 = vweird.f32 %v611
        %vm619 = vmor %vm617, %vm618
        %v620 = vsel %vm619, %v611, %v616
        %v621 = vmul.f32 %v598, %v620
        %v622 = vld [vmem:[#allocation7] sm:$0x1]
        %v624 = vperm.slane %v622, 0
        %v626 = vmul.f32 %v621, %v624
        %v627 = vpack.c.bf16 %v626, %v626
        %v628 = vld [vmem:[#allocation9] sm:$0xff]
        %v629 = vld [vmem:[#allocation9 + $0x8] sm:$0xf]
        %v630 = vld [vmem:[#allocation9 + $0xc] sm:$0xff]
        %v631 = vld [vmem:[#allocation9 + $0x14] sm:$0xf]
        %v632 = vld [vmem:[#allocation9 + $0x18] sm:$0xff]
        %v633 = vld [vmem:[#allocation9 + $0x20] sm:$0xf]
        %v634 = vld [vmem:[#allocation9 + $0x24] sm:$0xff]
        %v635 = vld [vmem:[#allocation9 + $0x2c] sm:$0xf]
        %v636 = vld [vmem:[#allocation9 + $0x30] sm:$0xff]
        %v637 = vld [vmem:[#allocation9 + $0x38] sm:$0xf]
        %v638 = vld [vmem:[#allocation9 + $0x3c] sm:$0xff]
        %v639 = vld [vmem:[#allocation9 + $0x44] sm:$0xf]
        %v640 = vld [vmem:[#allocation9 + $0x48] sm:$0xff]
        %v641 = vld [vmem:[#allocation9 + $0x50] sm:$0xf]
        %v642 = vld [vmem:[#allocation9 + $0x54] sm:$0xff]
        %v643 = vld [vmem:[#allocation9 + $0x5c] sm:$0xf]
        %v644 = vld [vmem:[#allocation9 + $0x60] sm:$0xff]
        %v645 = vld [vmem:[#allocation9 + $0x68] sm:$0xf]
        %v646 = vld [vmem:[#allocation9 + $0x6c] sm:$0xff]
        %v647 = vld [vmem:[#allocation9 + $0x74] sm:$0xf]
        %v648 = vld [vmem:[#allocation9 + $0x78] sm:$0xff]
        %v649 = vld [vmem:[#allocation9 + $0x80] sm:$0xf]
        %v650 = vld [vmem:[#allocation9 + $0x84] sm:$0xff]
        %v651 = vld [vmem:[#allocation9 + $0x8c] sm:$0xf]
        %v652 = vld [vmem:[#allocation9 + $0x90] sm:$0xff]
        %v653 = vld [vmem:[#allocation9 + $0x98] sm:$0xf]
        %v654 = vld [vmem:[#allocation9 + $0x9c] sm:$0xff]
        %v655 = vld [vmem:[#allocation9 + $0xa4] sm:$0xf]
        %v656 = vld [vmem:[#allocation9 + $0xa8] sm:$0xff]
        %v657 = vld [vmem:[#allocation9 + $0xb0] sm:$0xf]
        %v658 = vld [vmem:[#allocation9 + $0xb4] sm:$0xff]
        %v659 = vld [vmem:[#allocation9 + $0xbc] sm:$0xf]
        %v660 = vld [vmem:[#allocation10] sm:$0x7]
        %v662 = vperm.slane %v660, 0
        %v663 = vperm.slane %v660, 1
        %v664 = vperm.slane %v660, 2
        %v700 = vunpack.c.l.b16 %v628
        %v701 = vunpack.c.h.b16 %v628
        %v702 = vunpack.c.l.b16 %v629
        %v703 = vunpack.c.l.b16 %v630
        %v704 = vunpack.c.h.b16 %v630
        %v705 = vunpack.c.l.b16 %v631
        %v706 = vunpack.c.l.b16 %v632
        %v707 = vunpack.c.h.b16 %v632
        %v708 = vunpack.c.l.b16 %v633
        %v709 = vunpack.c.l.b16 %v634
        %v710 = vunpack.c.h.b16 %v634
        %v711 = vunpack.c.l.b16 %v635
        %v712 = vunpack.c.l.b16 %v636
        %v713 = vunpack.c.h.b16 %v636
        %v714 = vunpack.c.l.b16 %v637
        %v715 = vunpack.c.l.b16 %v638
        %v716 = vunpack.c.h.b16 %v638
        %v717 = vunpack.c.l.b16 %v639
        %v718 = vunpack.c.l.b16 %v640
        %v719 = vunpack.c.h.b16 %v640
        %v720 = vunpack.c.l.b16 %v641
        %v721 = vunpack.c.l.b16 %v642
        %v722 = vunpack.c.h.b16 %v642
        %v723 = vunpack.c.l.b16 %v643
        %v724 = vunpack.c.l.b16 %v644
        %v725 = vunpack.c.h.b16 %v644
        %v726 = vunpack.c.l.b16 %v645
        %v727 = vunpack.c.l.b16 %v646
        %v728 = vunpack.c.h.b16 %v646
        %v729 = vunpack.c.l.b16 %v647
        %v730 = vunpack.c.l.b16 %v648
        %v731 = vunpack.c.h.b16 %v648
        %v732 = vunpack.c.l.b16 %v649
        %v733 = vunpack.c.l.b16 %v650
        %v734 = vunpack.c.h.b16 %v650
        %v735 = vunpack.c.l.b16 %v651
        %v736 = vunpack.c.l.b16 %v652
        %v737 = vunpack.c.h.b16 %v652
        %v738 = vunpack.c.l.b16 %v653
        %v739 = vunpack.c.l.b16 %v654
        %v740 = vunpack.c.h.b16 %v654
        %v741 = vunpack.c.l.b16 %v655
        %v742 = vunpack.c.l.b16 %v656
        %v743 = vunpack.c.h.b16 %v656
        %v744 = vunpack.c.l.b16 %v657
        %v745 = vunpack.c.l.b16 %v658
        %v746 = vunpack.c.h.b16 %v658
        %v747 = vunpack.c.l.b16 %v659
        %v748 = vpack.c.b16 %v703, %v700
        %v749 = vpack.c.b16 %v704, %v701
        %v750 = vpack.c.b16 %v705, %v702
        %v751 = vpack.c.b16 %v709, %v706
        %v752 = vpack.c.b16 %v710, %v707
        %v753 = vpack.c.b16 %v711, %v708
        %v754 = vpack.c.b16 %v715, %v712
        %v755 = vpack.c.b16 %v716, %v713
        %v756 = vpack.c.b16 %v717, %v714
        %v757 = vpack.c.b16 %v721, %v718
        %v758 = vpack.c.b16 %v722, %v719
        %v759 = vpack.c.b16 %v723, %v720
        %v760 = vpack.c.b16 %v727, %v724
        %v761 = vpack.c.b16 %v728, %v725
        %v762 = vpack.c.b16 %v729, %v726
        %v763 = vpack.c.b16 %v733, %v730
        %v764 = vpack.c.b16 %v734, %v731
        %v765 = vpack.c.b16 %v735, %v732
        %v766 = vpack.c.b16 %v739, %v736
        %v767 = vpack.c.b16 %v740, %v737
        %v768 = vpack.c.b16 %v741, %v738
        %v769 = vpack.c.b16 %v745, %v742
        %v770 = vpack.c.b16 %v746, %v743
        %v771 = vpack.c.b16 %v747, %v744
        %796 = vmatpush.bf16.msra.mxu0 %v769
        %797 = vmatpush.bf16.msra.mxu0 %v766
        %798 = vmatpush.bf16.msra.mxu0 %v763
        %799 = vmatpush.bf16.msra.mxu0 %v760
        %800 = vmatpush.bf16.msra.mxu0 %v757
        %801 = vmatpush.bf16.msra.mxu0 %v754
        %802 = vmatpush.bf16.msra.mxu0 %v751
        %803 = vmatpush.bf16.msra.mxu0 %v748
        %804 = vmatmul.bf16.gmra.mxu0 %v627
        %v805 = vpop.f32.mrf.mxu0
        %v806 = vadd.f32 %v662, %v805
        %v807 = vpop.f32.mrf.mxu0
        %808 = vdwg.mxu0
        %809 = vmatpush.bf16.msra.mxu0 %v770
        %810 = vmatpush.bf16.msra.mxu0 %v767
        %811 = vmatpush.bf16.msra.mxu0 %v764
        %812 = vmatpush.bf16.msra.mxu0 %v761
        %813 = vmatpush.bf16.msra.mxu0 %v758
        %814 = vmatpush.bf16.msra.mxu0 %v755
        %815 = vmatpush.bf16.msra.mxu0 %v752
        %816 = vmatpush.bf16.msra.mxu0 %v749
        %817 = vmatmul.bf16.gmra.mxu0 %v627
        %v818 = vpop.f32.mrf.mxu0
        %v819 = vadd.f32 %v663, %v818
        %v820 = vpop.f32.mrf.mxu0
        %821 = vdwg.mxu0
        %822 = vmatpush.bf16.msra.mxu0 %v771
        %823 = vmatpush.bf16.msra.mxu0 %v768
        %824 = vmatpush.bf16.msra.mxu0 %v765
        %825 = vmatpush.bf16.msra.mxu0 %v762
        %826 = vmatpush.bf16.msra.mxu0 %v759
        %827 = vmatpush.bf16.msra.mxu0 %v756
        %828 = vmatpush.bf16.msra.mxu0 %v753
        %829 = vmatpush.bf16.msra.mxu0 %v750
        %830 = vmatmul.bf16.gmra.mxu0 %v627
        %v831 = vpop.f32.mrf.mxu0
        %v832 = vadd.f32 %v664, %v831
        %v833 = vpop.f32.mrf.mxu0
        %834 = vdwg.mxu0
        %v835 = vld [vmem:[%s11] sm:$0xff]
        %v836 = vld [vmem:[#allocation19] sm:$0xff]
        %v837 = vmul.f32 %v806, %v835
        %839 = vrot.lane.b32.xlu0 %v806, 96
        %v840 = vpop.permute.xlu0 %839
        %842 = vrot.lane.b32.xlu0 %v806, 32
        %v843 = vpop.permute.xlu0 %842
        %vm845 = vcmask 261120
        %v846 = vsel %vm845, %v840, %v843
        %vm847 = vcmask 523264
        %v848 = vsel %vm847, %v846, %v840
        %vm849 = vcmask 785408
        %v850 = vsel %vm849, %v848, %v843
        %v851 = vmul.f32 %v850, %v836
        %v852 = vadd.f32 %v837, %v851
        %853 = vst [vmem:[#allocation2] sm:$0xff] %v852
        %v854 = vmul.f32 %v819, %v835
        %856 = vrot.lane.b32.xlu0 %v819, 96
        %v857 = vpop.permute.xlu0 %856
        %859 = vrot.lane.b32.xlu0 %v819, 32
        %v860 = vpop.permute.xlu0 %859
        %v862 = vsel %vm845, %v857, %v860
        %v863 = vsel %vm847, %v862, %v857
        %v864 = vsel %vm849, %v863, %v860
        %v865 = vmul.f32 %v864, %v836
        %v866 = vadd.f32 %v854, %v865
        %867 = vst [vmem:[#allocation2 + $0x8] sm:$0xff] %v866
        %868 = vst [vmem:[#allocation2 + $0x10] sm:$0xff] %v832
        %v869 = vld [vmem:[#allocation2] sm:$0xff]
        %v870 = vld [vmem:[#allocation2 + $0x8] sm:$0xff]
        %v871 = vld [vmem:[#allocation2 + $0x10] sm:$0xff]
        %v872 = vpack.c.bf16 %v869, %v869
        %v873 = vpack.c.bf16 %v870, %v870
        %v874 = vpack.c.bf16 %v871, %v871
        %v876 = vsel %vm847, %v872, 0
        %v879 = vsel %vm847, %v873, 0
        %881 = vmatpush.bf16.xpose.msra.mxu0 0
        %882 = vmatpush.bf16.xpose.msra.mxu0 0
        %883 = vmatpush.bf16.xpose.msra.mxu0 0
        %884 = vmatpush.bf16.xpose.msra.mxu0 0
        %885 = vmatpush.bf16.xpose.msra.mxu0 0
        %886 = vmatpush.bf16.xpose.msra.mxu0 0
        %887 = vmatpush.bf16.xpose.msra.mxu0 0
        %888 = vmatpush.bf16.xpose.msra.mxu0 %v879
        %889 = vmatmul.bf16.gmra.mxu0 %v876
        %v890 = vpop.f32.mrf.mxu0
        %v891 = vadd.f32 0.0, %v890
        %v892 = vpop.f32.mrf.mxu0
        %893 = vdwg.mxu0
        %vm894 = vcmask 64512
        %v895 = vsel %vm894, %v891, -inf
        %896 = vmax.xlane.f32.xlu0 %v895
        %v897 = vpop.xlane.xlu0 %896
        %v898 = vsub.f32 %v891, %v897
        %v899 = vmul.f32 %v898, 1.442695
        %v900 = vpow.pop %v899
        %v901 = vsel %vm894, %v900, 0.0
        %902 = vadd.xlane.f32.xlu0 %v901
        %v903 = vpop.xlane.xlu0 %902
        %v904 = vpack.c.bf16 %v900, %v900
        %v906 = vsel %vm894, %v904, 0
        %vm908 = vcmask 1043456
        %v910 = vsel %vm908, %v874, 0
        %912 = vmatpush.bf16.msra.mxu0 0
        %913 = vmatpush.bf16.msra.mxu0 0
        %914 = vmatpush.bf16.msra.mxu0 0
        %915 = vmatpush.bf16.msra.mxu0 0
        %916 = vmatpush.bf16.msra.mxu0 0
        %917 = vmatpush.bf16.msra.mxu0 0
        %918 = vmatpush.bf16.msra.mxu0 0
        %919 = vmatpush.bf16.msra.mxu0 %v910
        %920 = vmatmul.bf16.gmra.mxu0 %v906
        %v921 = vpop.f32.mrf.mxu0
        %v922 = vadd.f32 0.0, %v921
        %v923 = vpop.f32.mrf.mxu0
        %924 = vdwg.mxu0
        %v925 = vrcp.pop %v903
        %v926 = vmul.f32 %v922, %v925
        %928 = vrot.lane.b32.xlu0 %v872, 64
        %v929 = vpop.permute.xlu0 %928
        %931 = vrot.lane.b32.xlu0 %v873, 64
        %v932 = vpop.permute.xlu0 %931
        %v934 = vsel %vm847, %v929, 0
        %v937 = vsel %vm847, %v932, 0
        %939 = vmatpush.bf16.xpose.msra.mxu0 0
        %940 = vmatpush.bf16.xpose.msra.mxu0 0
        %941 = vmatpush.bf16.xpose.msra.mxu0 0
        %942 = vmatpush.bf16.xpose.msra.mxu0 0
        %943 = vmatpush.bf16.xpose.msra.mxu0 0
        %944 = vmatpush.bf16.xpose.msra.mxu0 0
        %945 = vmatpush.bf16.xpose.msra.mxu0 0
        %946 = vmatpush.bf16.xpose.msra.mxu0 %v937
        %947 = vmatmul.bf16.gmra.mxu0 %v934
        %v948 = vpop.f32.mrf.mxu0
        %v949 = vadd.f32 0.0, %v948
        %v950 = vpop.f32.mrf.mxu0
        %951 = vdwg.mxu0
        %v952 = vsel %vm894, %v949, -inf
        %953 = vmax.xlane.f32.xlu0 %v952
        %v954 = vpop.xlane.xlu0 %953
        %v955 = vsub.f32 %v949, %v954
        %v956 = vmul.f32 %v955, 1.442695
        %v957 = vpow.pop %v956
        %v958 = vsel %vm894, %v957, 0.0
        %959 = vadd.xlane.f32.xlu0 %v958
        %v960 = vpop.xlane.xlu0 %959
        %v961 = vpack.c.bf16 %v957, %v957
        %963 = vrot.lane.b32.xlu0 %v874, 64
        %v964 = vpop.permute.xlu0 %963
        %v966 = vsel %vm894, %v961, 0
        %v969 = vsel %vm908, %v964, 0
        %971 = vmatpush.bf16.msra.mxu0 0
        %972 = vmatpush.bf16.msra.mxu0 0
        %973 = vmatpush.bf16.msra.mxu0 0
        %974 = vmatpush.bf16.msra.mxu0 0
        %975 = vmatpush.bf16.msra.mxu0 0
        %976 = vmatpush.bf16.msra.mxu0 0
        %977 = vmatpush.bf16.msra.mxu0 0
        %978 = vmatpush.bf16.msra.mxu0 %v969
        %979 = vmatmul.bf16.gmra.mxu0 %v966
        %v980 = vpop.f32.mrf.mxu0
        %v981 = vadd.f32 0.0, %v980
        %v982 = vpop.f32.mrf.mxu0
        %983 = vdwg.mxu0
        %v984 = vrcp.pop %v960
        %v985 = vmul.f32 %v981, %v984
        %987 = vrot.lane.b32.xlu0 %v985, 64
        %v988 = vpop.permute.xlu0 %987
        %v990 = vsel %vm847, %v926, %v988
        %991 = vst [vmem:[#allocation3] sm:$0xff] %v990
        %v992 = vld [vmem:[#allocation3] sm:$0xff]
        %v993 = vpack.c.bf16 %v992, %v992
        %v994 = vld [vmem:[#allocation12] sm:$0xf]
        %v995 = vld [vmem:[#allocation12 + $0x4] sm:$0xf]
        %v996 = vld [vmem:[#allocation12 + $0x8] sm:$0xf]
        %v997 = vld [vmem:[#allocation12 + $0xc] sm:$0xf]
        %v998 = vld [vmem:[#allocation12 + $0x10] sm:$0xf]
        %v999 = vld [vmem:[#allocation12 + $0x14] sm:$0xf]
        %v1000 = vld [vmem:[#allocation12 + $0x18] sm:$0xf]
        %v1001 = vld [vmem:[#allocation12 + $0x1c] sm:$0xf]
        %v1002 = vld [vmem:[#allocation12 + $0x20] sm:$0xf]
        %v1003 = vld [vmem:[#allocation12 + $0x24] sm:$0xf]
        %v1004 = vld [vmem:[#allocation12 + $0x28] sm:$0xf]
        %v1005 = vld [vmem:[#allocation12 + $0x2c] sm:$0xf]
        %v1006 = vld [vmem:[#allocation12 + $0x30] sm:$0xf]
        %v1007 = vld [vmem:[#allocation12 + $0x34] sm:$0xf]
        %v1008 = vld [vmem:[#allocation12 + $0x38] sm:$0xf]
        %v1009 = vld [vmem:[#allocation12 + $0x3c] sm:$0xf]
        %v1010 = vld [vmem:[%s5] sm:$0x1]
        %v1012 = vperm.slane %v1010, 0
        %v1030 = vunpack.c.l.b16 %v994
        %v1031 = vunpack.c.l.b16 %v995
        %v1032 = vunpack.c.l.b16 %v996
        %v1033 = vunpack.c.l.b16 %v997
        %v1034 = vunpack.c.l.b16 %v998
        %v1035 = vunpack.c.l.b16 %v999
        %v1036 = vunpack.c.l.b16 %v1000
        %v1037 = vunpack.c.l.b16 %v1001
        %v1038 = vunpack.c.l.b16 %v1002
        %v1039 = vunpack.c.l.b16 %v1003
        %v1040 = vunpack.c.l.b16 %v1004
        %v1041 = vunpack.c.l.b16 %v1005
        %v1042 = vunpack.c.l.b16 %v1006
        %v1043 = vunpack.c.l.b16 %v1007
        %v1044 = vunpack.c.l.b16 %v1008
        %v1045 = vunpack.c.l.b16 %v1009
        %v1046 = vpack.c.b16 %v1031, %v1030
        %v1047 = vpack.c.b16 %v1033, %v1032
        %v1048 = vpack.c.b16 %v1035, %v1034
        %v1049 = vpack.c.b16 %v1037, %v1036
        %v1050 = vpack.c.b16 %v1039, %v1038
        %v1051 = vpack.c.b16 %v1041, %v1040
        %v1052 = vpack.c.b16 %v1043, %v1042
        %v1053 = vpack.c.b16 %v1045, %v1044
        %1062 = vmatpush.bf16.msra.mxu0 %v1053
        %1063 = vmatpush.bf16.msra.mxu0 %v1052
        %1064 = vmatpush.bf16.msra.mxu0 %v1051
        %1065 = vmatpush.bf16.msra.mxu0 %v1050
        %1066 = vmatpush.bf16.msra.mxu0 %v1049
        %1067 = vmatpush.bf16.msra.mxu0 %v1048
        %1068 = vmatpush.bf16.msra.mxu0 %v1047
        %1069 = vmatpush.bf16.msra.mxu0 %v1046
        %1070 = vmatmul.bf16.gmra.mxu0 %v993
        %v1071 = vpop.f32.mrf.mxu0
        %v1072 = vadd.f32 %v1012, %v1071
        %v1073 = vpop.f32.mrf.mxu0
        %1074 = vdwg.mxu0
        %v1075 = vadd.f32 %v598, %v1072
        %v1076 = vmul.f32 %v1075, %v1075
        %1077 = vadd.xlane.f32.xlu0 %v1076
        %v1078 = vpop.xlane.xlu0 %1077
        %v1079 = vmul.f32 %v1078, %v608
        %v1080 = vadd.f32 %v1079, 1e-06
        %v1081 = vrsqrt.pop %v1080
        %v1082 = vmul.f32 %v1081, %v1080
        %v1083 = vmul.f32 %v1082, %v1081
        %v1084 = vmul.f32 0.5, %v1083
        %v1085 = vsub.f32 1.5, %v1084
        %v1086 = vmul.f32 %v1081, %v1085
        %vm1087 = vweird.f32 %v1080
        %vm1088 = vweird.f32 %v1081
        %vm1089 = vmor %vm1087, %vm1088
        %v1090 = vsel %vm1089, %v1081, %v1086
        %v1091 = vmul.f32 %v1075, %v1090
        %v1092 = vld [vmem:[%s6] sm:$0x1]
        %v1094 = vperm.slane %v1092, 0
        %v1096 = vmul.f32 %v1091, %v1094
        %v1097 = vpack.c.bf16 %v1096, %v1096
        %v1098 = vld [vmem:[#allocation13] sm:$0xff]
        %v1099 = vld [vmem:[#allocation13 + $0x8] sm:$0xff]
        %v1100 = vld [vmem:[#allocation13 + $0x10] sm:$0xff]
        %v1101 = vld [vmem:[#allocation13 + $0x18] sm:$0xff]
        %v1102 = vld [vmem:[#allocation13 + $0x20] sm:$0xff]
        %v1103 = vld [vmem:[#allocation13 + $0x28] sm:$0xff]
        %v1104 = vld [vmem:[#allocation13 + $0x30] sm:$0xff]
        %v1105 = vld [vmem:[#allocation13 + $0x38] sm:$0xff]
        %v1106 = vld [vmem:[#allocation13 + $0x40] sm:$0xff]
        %v1107 = vld [vmem:[#allocation13 + $0x48] sm:$0xff]
        %v1108 = vld [vmem:[#allocation13 + $0x50] sm:$0xff]
        %v1109 = vld [vmem:[#allocation13 + $0x58] sm:$0xff]
        %v1110 = vld [vmem:[#allocation13 + $0x60] sm:$0xff]
        %v1111 = vld [vmem:[#allocation13 + $0x68] sm:$0xff]
        %v1112 = vld [vmem:[#allocation13 + $0x70] sm:$0xff]
        %v1113 = vld [vmem:[#allocation13 + $0x78] sm:$0xff]
        %v1114 = vld [vmem:[#allocation13 + $0x80] sm:$0xff]
        %v1115 = vld [vmem:[#allocation13 + $0x88] sm:$0xff]
        %v1116 = vld [vmem:[#allocation13 + $0x90] sm:$0xff]
        %v1117 = vld [vmem:[#allocation13 + $0x98] sm:$0xff]
        %v1118 = vld [vmem:[#allocation13 + $0xa0] sm:$0xff]
        %v1119 = vld [vmem:[#allocation13 + $0xa8] sm:$0xff]
        %v1120 = vld [vmem:[#allocation13 + $0xb0] sm:$0xff]
        %v1121 = vld [vmem:[#allocation13 + $0xb8] sm:$0xff]
        %v1122 = vld [vmem:[#allocation13 + $0xc0] sm:$0xff]
        %v1123 = vld [vmem:[#allocation13 + $0xc8] sm:$0xff]
        %v1124 = vld [vmem:[#allocation13 + $0xd0] sm:$0xff]
        %v1125 = vld [vmem:[#allocation13 + $0xd8] sm:$0xff]
        %v1126 = vld [vmem:[#allocation13 + $0xe0] sm:$0xff]
        %v1127 = vld [vmem:[#allocation13 + $0xe8] sm:$0xff]
        %v1128 = vld [vmem:[#allocation13 + $0xf0] sm:$0xff]
        %v1129 = vld [vmem:[#allocation13 + $0xf8] sm:$0xff]
        %v1130 = vld [vmem:[#allocation15] sm:$0xf]
        %v1132 = vperm.slane %v1130, 0
        %v1133 = vperm.slane %v1130, 1
        %v1134 = vperm.slane %v1130, 2
        %v1135 = vperm.slane %v1130, 3
        %v1172 = vunpack.c.l.b16 %v1098
        %v1173 = vunpack.c.h.b16 %v1098
        %v1174 = vunpack.c.l.b16 %v1099
        %v1175 = vunpack.c.h.b16 %v1099
        %v1176 = vunpack.c.l.b16 %v1100
        %v1177 = vunpack.c.h.b16 %v1100
        %v1178 = vunpack.c.l.b16 %v1101
        %v1179 = vunpack.c.h.b16 %v1101
        %v1180 = vunpack.c.l.b16 %v1102
        %v1181 = vunpack.c.h.b16 %v1102
        %v1182 = vunpack.c.l.b16 %v1103
        %v1183 = vunpack.c.h.b16 %v1103
        %v1184 = vunpack.c.l.b16 %v1104
        %v1185 = vunpack.c.h.b16 %v1104
        %v1186 = vunpack.c.l.b16 %v1105
        %v1187 = vunpack.c.h.b16 %v1105
        %v1188 = vunpack.c.l.b16 %v1106
        %v1189 = vunpack.c.h.b16 %v1106
        %v1190 = vunpack.c.l.b16 %v1107
        %v1191 = vunpack.c.h.b16 %v1107
        %v1192 = vunpack.c.l.b16 %v1108
        %v1193 = vunpack.c.h.b16 %v1108
        %v1194 = vunpack.c.l.b16 %v1109
        %v1195 = vunpack.c.h.b16 %v1109
        %v1196 = vunpack.c.l.b16 %v1110
        %v1197 = vunpack.c.h.b16 %v1110
        %v1198 = vunpack.c.l.b16 %v1111
        %v1199 = vunpack.c.h.b16 %v1111
        %v1200 = vunpack.c.l.b16 %v1112
        %v1201 = vunpack.c.h.b16 %v1112
        %v1202 = vunpack.c.l.b16 %v1113
        %v1203 = vunpack.c.h.b16 %v1113
        %v1204 = vunpack.c.l.b16 %v1114
        %v1205 = vunpack.c.h.b16 %v1114
        %v1206 = vunpack.c.l.b16 %v1115
        %v1207 = vunpack.c.h.b16 %v1115
        %v1208 = vunpack.c.l.b16 %v1116
        %v1209 = vunpack.c.h.b16 %v1116
        %v1210 = vunpack.c.l.b16 %v1117
        %v1211 = vunpack.c.h.b16 %v1117
        %v1212 = vunpack.c.l.b16 %v1118
        %v1213 = vunpack.c.h.b16 %v1118
        %v1214 = vunpack.c.l.b16 %v1119
        %v1215 = vunpack.c.h.b16 %v1119
        %v1216 = vunpack.c.l.b16 %v1120
        %v1217 = vunpack.c.h.b16 %v1120
        %v1218 = vunpack.c.l.b16 %v1121
        %v1219 = vunpack.c.h.b16 %v1121
        %v1220 = vunpack.c.l.b16 %v1122
        %v1221 = vunpack.c.h.b16 %v1122
        %v1222 = vunpack.c.l.b16 %v1123
        %v1223 = vunpack.c.h.b16 %v1123
        %v1224 = vunpack.c.l.b16 %v1124
        %v1225 = vunpack.c.h.b16 %v1124
        %v1226 = vunpack.c.l.b16 %v1125
        %v1227 = vunpack.c.h.b16 %v1125
        %v1228 = vunpack.c.l.b16 %v1126
        %v1229 = vunpack.c.h.b16 %v1126
        %v1230 = vunpack.c.l.b16 %v1127
        %v1231 = vunpack.c.h.b16 %v1127
        %v1232 = vunpack.c.l.b16 %v1128
        %v1233 = vunpack.c.h.b16 %v1128
        %v1234 = vunpack.c.l.b16 %v1129
        %v1235 = vunpack.c.h.b16 %v1129
        %v1236 = vpack.c.b16 %v1176, %v1172
        %v1237 = vpack.c.b16 %v1177, %v1173
        %v1238 = vpack.c.b16 %v1178, %v1174
        %v1239 = vpack.c.b16 %v1179, %v1175
        %v1240 = vpack.c.b16 %v1184, %v1180
        %v1241 = vpack.c.b16 %v1185, %v1181
        %v1242 = vpack.c.b16 %v1186, %v1182
        %v1243 = vpack.c.b16 %v1187, %v1183
        %v1244 = vpack.c.b16 %v1192, %v1188
        %v1245 = vpack.c.b16 %v1193, %v1189
        %v1246 = vpack.c.b16 %v1194, %v1190
        %v1247 = vpack.c.b16 %v1195, %v1191
        %v1248 = vpack.c.b16 %v1200, %v1196
        %v1249 = vpack.c.b16 %v1201, %v1197
        %v1250 = vpack.c.b16 %v1202, %v1198
        %v1251 = vpack.c.b16 %v1203, %v1199
        %v1252 = vpack.c.b16 %v1208, %v1204
        %v1253 = vpack.c.b16 %v1209, %v1205
        %v1254 = vpack.c.b16 %v1210, %v1206
        %v1255 = vpack.c.b16 %v1211, %v1207
        %v1256 = vpack.c.b16 %v1216, %v1212
        %v1257 = vpack.c.b16 %v1217, %v1213
        %v1258 = vpack.c.b16 %v1218, %v1214
        %v1259 = vpack.c.b16 %v1219, %v1215
        %v1260 = vpack.c.b16 %v1224, %v1220
        %v1261 = vpack.c.b16 %v1225, %v1221
        %v1262 = vpack.c.b16 %v1226, %v1222
        %v1263 = vpack.c.b16 %v1227, %v1223
        %v1264 = vpack.c.b16 %v1232, %v1228
        %v1265 = vpack.c.b16 %v1233, %v1229
        %v1266 = vpack.c.b16 %v1234, %v1230
        %v1267 = vpack.c.b16 %v1235, %v1231
        %1300 = vmatpush.bf16.msra.mxu0 %v1264
        %1301 = vmatpush.bf16.msra.mxu0 %v1260
        %1302 = vmatpush.bf16.msra.mxu0 %v1256
        %1303 = vmatpush.bf16.msra.mxu0 %v1252
        %1304 = vmatpush.bf16.msra.mxu0 %v1248
        %1305 = vmatpush.bf16.msra.mxu0 %v1244
        %1306 = vmatpush.bf16.msra.mxu0 %v1240
        %1307 = vmatpush.bf16.msra.mxu0 %v1236
        %1308 = vmatmul.bf16.gmra.mxu0 %v1097
        %v1309 = vpop.f32.mrf.mxu0
        %v1310 = vadd.f32 %v1132, %v1309
        %v1311 = vpop.f32.mrf.mxu0
        %1312 = vdwg.mxu0
        %1313 = vmatpush.bf16.msra.mxu0 %v1265
        %1314 = vmatpush.bf16.msra.mxu0 %v1261
        %1315 = vmatpush.bf16.msra.mxu0 %v1257
        %1316 = vmatpush.bf16.msra.mxu0 %v1253
        %1317 = vmatpush.bf16.msra.mxu0 %v1249
        %1318 = vmatpush.bf16.msra.mxu0 %v1245
        %1319 = vmatpush.bf16.msra.mxu0 %v1241
        %1320 = vmatpush.bf16.msra.mxu0 %v1237
        %1321 = vmatmul.bf16.gmra.mxu0 %v1097
        %v1322 = vpop.f32.mrf.mxu0
        %v1323 = vadd.f32 %v1133, %v1322
        %v1324 = vpop.f32.mrf.mxu0
        %1325 = vdwg.mxu0
        %1326 = vmatpush.bf16.msra.mxu0 %v1266
        %1327 = vmatpush.bf16.msra.mxu0 %v1262
        %1328 = vmatpush.bf16.msra.mxu0 %v1258
        %1329 = vmatpush.bf16.msra.mxu0 %v1254
        %1330 = vmatpush.bf16.msra.mxu0 %v1250
        %1331 = vmatpush.bf16.msra.mxu0 %v1246
        %1332 = vmatpush.bf16.msra.mxu0 %v1242
        %1333 = vmatpush.bf16.msra.mxu0 %v1238
        %1334 = vmatmul.bf16.gmra.mxu0 %v1097
        %v1335 = vpop.f32.mrf.mxu0
        %v1336 = vadd.f32 %v1134, %v1335
        %v1337 = vpop.f32.mrf.mxu0
        %1338 = vdwg.mxu0
        %1339 = vmatpush.bf16.msra.mxu0 %v1267
        %1340 = vmatpush.bf16.msra.mxu0 %v1263
        %1341 = vmatpush.bf16.msra.mxu0 %v1259
        %1342 = vmatpush.bf16.msra.mxu0 %v1255
        %1343 = vmatpush.bf16.msra.mxu0 %v1251
        %1344 = vmatpush.bf16.msra.mxu0 %v1247
        %1345 = vmatpush.bf16.msra.mxu0 %v1243
        %1346 = vmatpush.bf16.msra.mxu0 %v1239
        %1347 = vmatmul.bf16.gmra.mxu0 %v1097
        %v1348 = vpop.f32.mrf.mxu0
        %v1349 = vadd.f32 %v1135, %v1348
        %v1350 = vpop.f32.mrf.mxu0
        %1351 = vdwg.mxu0
        %v1352 = vmax.f32 %v1310, 0.0
        %v1353 = vmax.f32 %v1323, 0.0
        %v1354 = vmax.f32 %v1336, 0.0
        %v1355 = vmax.f32 %v1349, 0.0
        %v1356 = vmul.f32 %v1352, %v1352
        %v1357 = vmul.f32 %v1353, %v1353
        %v1358 = vmul.f32 %v1354, %v1354
        %v1359 = vmul.f32 %v1355, %v1355
        %v1360 = vpack.c.bf16 %v1356, %v1356
        %v1361 = vpack.c.bf16 %v1357, %v1357
        %v1362 = vpack.c.bf16 %v1358, %v1358
        %v1363 = vpack.c.bf16 %v1359, %v1359
        %v1364 = vld [vmem:[#allocation16] sm:$0xf]
        %v1365 = vld [vmem:[#allocation16 + $0x4] sm:$0xf]
        %v1366 = vld [vmem:[#allocation16 + $0x8] sm:$0xf]
        %v1367 = vld [vmem:[#allocation16 + $0xc] sm:$0xf]
        %v1368 = vld [vmem:[#allocation16 + $0x10] sm:$0xf]
        %v1369 = vld [vmem:[#allocation16 + $0x14] sm:$0xf]
        %v1370 = vld [vmem:[#allocation16 + $0x18] sm:$0xf]
        %v1371 = vld [vmem:[#allocation16 + $0x1c] sm:$0xf]
        %v1372 = vld [vmem:[#allocation16 + $0x20] sm:$0xf]
        %v1373 = vld [vmem:[#allocation16 + $0x24] sm:$0xf]
        %v1374 = vld [vmem:[#allocation16 + $0x28] sm:$0xf]
        %v1375 = vld [vmem:[#allocation16 + $0x2c] sm:$0xf]
        %v1376 = vld [vmem:[#allocation16 + $0x30] sm:$0xf]
        %v1377 = vld [vmem:[#allocation16 + $0x34] sm:$0xf]
        %v1378 = vld [vmem:[#allocation16 + $0x38] sm:$0xf]
        %v1379 = vld [vmem:[#allocation16 + $0x3c] sm:$0xf]
        %v1380 = vld [vmem:[#allocation16 + $0x40] sm:$0xf]
        %v1381 = vld [vmem:[#allocation16 + $0x44] sm:$0xf]
        %v1382 = vld [vmem:[#allocation16 + $0x48] sm:$0xf]
        %v1383 = vld [vmem:[#allocation16 + $0x4c] sm:$0xf]
        %v1384 = vld [vmem:[#allocation16 + $0x50] sm:$0xf]
        %v1385 = vld [vmem:[#allocation16 + $0x54] sm:$0xf]
        %v1386 = vld [vmem:[#allocation16 + $0x58] sm:$0xf]
        %v1387 = vld [vmem:[#allocation16 + $0x5c] sm:$0xf]
        %v1388 = vld [vmem:[#allocation16 + $0x60] sm:$0xf]
        %v1389 = vld [vmem:[#allocation16 + $0x64] sm:$0xf]
        %v1390 = vld [vmem:[#allocation16 + $0x68] sm:$0xf]
        %v1391 = vld [vmem:[#allocation16 + $0x6c] sm:$0xf]
        %v1392 = vld [vmem:[#allocation16 + $0x70] sm:$0xf]
        %v1393 = vld [vmem:[#allocation16 + $0x74] sm:$0xf]
        %v1394 = vld [vmem:[#allocation16 + $0x78] sm:$0xf]
        %v1395 = vld [vmem:[#allocation16 + $0x7c] sm:$0xf]
        %v1396 = vld [vmem:[#allocation16 + $0x80] sm:$0xf]
        %v1397 = vld [vmem:[#allocation16 + $0x84] sm:$0xf]
        %v1398 = vld [vmem:[#allocation16 + $0x88] sm:$0xf]
        %v1399 = vld [vmem:[#allocation16 + $0x8c] sm:$0xf]
        %v1400 = vld [vmem:[#allocation16 + $0x90] sm:$0xf]
        %v1401 = vld [vmem:[#allocation16 + $0x94] sm:$0xf]
        %v1402 = vld [vmem:[#allocation16 + $0x98] sm:$0xf]
        %v1403 = vld [vmem:[#allocation16 + $0x9c] sm:$0xf]
        %v1404 = vld [vmem:[#allocation16 + $0xa0] sm:$0xf]
        %v1405 = vld [vmem:[#allocation16 + $0xa4] sm:$0xf]
        %v1406 = vld [vmem:[#allocation16 + $0xa8] sm:$0xf]
        %v1407 = vld [vmem:[#allocation16 + $0xac] sm:$0xf]
        %v1408 = vld [vmem:[#allocation16 + $0xb0] sm:$0xf]
        %v1409 = vld [vmem:[#allocation16 + $0xb4] sm:$0xf]
        %v1410 = vld [vmem:[#allocation16 + $0xb8] sm:$0xf]
        %v1411 = vld [vmem:[#allocation16 + $0xbc] sm:$0xf]
        %v1412 = vld [vmem:[#allocation16 + $0xc0] sm:$0xf]
        %v1413 = vld [vmem:[#allocation16 + $0xc4] sm:$0xf]
        %v1414 = vld [vmem:[#allocation16 + $0xc8] sm:$0xf]
        %v1415 = vld [vmem:[#allocation16 + $0xcc] sm:$0xf]
        %v1416 = vld [vmem:[#allocation16 + $0xd0] sm:$0xf]
        %v1417 = vld [vmem:[#allocation16 + $0xd4] sm:$0xf]
        %v1418 = vld [vmem:[#allocation16 + $0xd8] sm:$0xf]
        %v1419 = vld [vmem:[#allocation16 + $0xdc] sm:$0xf]
        %v1420 = vld [vmem:[#allocation16 + $0xe0] sm:$0xf]
        %v1421 = vld [vmem:[#allocation16 + $0xe4] sm:$0xf]
        %v1422 = vld [vmem:[#allocation16 + $0xe8] sm:$0xf]
        %v1423 = vld [vmem:[#allocation16 + $0xec] sm:$0xf]
        %v1424 = vld [vmem:[#allocation16 + $0xf0] sm:$0xf]
        %v1425 = vld [vmem:[#allocation16 + $0xf4] sm:$0xf]
        %v1426 = vld [vmem:[#allocation16 + $0xf8] sm:$0xf]
        %v1427 = vld [vmem:[#allocation16 + $0xfc] sm:$0xf]
        %v1428 = vld [vmem:[#allocation18] sm:$0x1]
        %v1430 = vperm.slane %v1428, 0
        %v1496 = vunpack.c.l.b16 %v1364
        %v1497 = vunpack.c.l.b16 %v1365
        %v1498 = vunpack.c.l.b16 %v1366
        %v1499 = vunpack.c.l.b16 %v1367
        %v1500 = vunpack.c.l.b16 %v1368
        %v1501 = vunpack.c.l.b16 %v1369
        %v1502 = vunpack.c.l.b16 %v1370
        %v1503 = vunpack.c.l.b16 %v1371
        %v1504 = vunpack.c.l.b16 %v1372
        %v1505 = vunpack.c.l.b16 %v1373
        %v1506 = vunpack.c.l.b16 %v1374
        %v1507 = vunpack.c.l.b16 %v1375
        %v1508 = vunpack.c.l.b16 %v1376
        %v1509 = vunpack.c.l.b16 %v1377
        %v1510 = vunpack.c.l.b16 %v1378
        %v1511 = vunpack.c.l.b16 %v1379
        %v1512 = vunpack.c.l.b16 %v1380
        %v1513 = vunpack.c.l.b16 %v1381
        %v1514 = vunpack.c.l.b16 %v1382
        %v1515 = vunpack.c.l.b16 %v1383
        %v1516 = vunpack.c.l.b16 %v1384
        %v1517 = vunpack.c.l.b16 %v1385
        %v1518 = vunpack.c.l.b16 %v1386
        %v1519 = vunpack.c.l.b16 %v1387
        %v1520 = vunpack.c.l.b16 %v1388
        %v1521 = vunpack.c.l.b16 %v1389
        %v1522 = vunpack.c.l.b16 %v1390
        %v1523 = vunpack.c.l.b16 %v1391
        %v1524 = vunpack.c.l.b16 %v1392
        %v1525 = vunpack.c.l.b16 %v1393
        %v1526 = vunpack.c.l.b16 %v1394
        %v1527 = vunpack.c.l.b16 %v1395
        %v1528 = vunpack.c.l.b16 %v1396
        %v1529 = vunpack.c.l.b16 %v1397
        %v1530 = vunpack.c.l.b16 %v1398
        %v1531 = vunpack.c.l.b16 %v1399
        %v1532 = vunpack.c.l.b16 %v1400
        %v1533 = vunpack.c.l.b16 %v1401
        %v1534 = vunpack.c.l.b16 %v1402
        %v1535 = vunpack.c.l.b16 %v1403
        %v1536 = vunpack.c.l.b16 %v1404
        %v1537 = vunpack.c.l.b16 %v1405
        %v1538 = vunpack.c.l.b16 %v1406
        %v1539 = vunpack.c.l.b16 %v1407
        %v1540 = vunpack.c.l.b16 %v1408
        %v1541 = vunpack.c.l.b16 %v1409
        %v1542 = vunpack.c.l.b16 %v1410
        %v1543 = vunpack.c.l.b16 %v1411
        %v1544 = vunpack.c.l.b16 %v1412
        %v1545 = vunpack.c.l.b16 %v1413
        %v1546 = vunpack.c.l.b16 %v1414
        %v1547 = vunpack.c.l.b16 %v1415
        %v1548 = vunpack.c.l.b16 %v1416
        %v1549 = vunpack.c.l.b16 %v1417
        %v1550 = vunpack.c.l.b16 %v1418
        %v1551 = vunpack.c.l.b16 %v1419
        %v1552 = vunpack.c.l.b16 %v1420
        %v1553 = vunpack.c.l.b16 %v1421
        %v1554 = vunpack.c.l.b16 %v1422
        %v1555 = vunpack.c.l.b16 %v1423
        %v1556 = vunpack.c.l.b16 %v1424
        %v1557 = vunpack.c.l.b16 %v1425
        %v1558 = vunpack.c.l.b16 %v1426
        %v1559 = vunpack.c.l.b16 %v1427
        %v1560 = vpack.c.b16 %v1497, %v1496
        %v1561 = vpack.c.b16 %v1499, %v1498
        %v1562 = vpack.c.b16 %v1501, %v1500
        %v1563 = vpack.c.b16 %v1503, %v1502
        %v1564 = vpack.c.b16 %v1505, %v1504
        %v1565 = vpack.c.b16 %v1507, %v1506
        %v1566 = vpack.c.b16 %v1509, %v1508
        %v1567 = vpack.c.b16 %v1511, %v1510
        %v1568 = vpack.c.b16 %v1513, %v1512
        %v1569 = vpack.c.b16 %v1515, %v1514
        %v1570 = vpack.c.b16 %v1517, %v1516
        %v1571 = vpack.c.b16 %v1519, %v1518
        %v1572 = vpack.c.b16 %v1521, %v1520
        %v1573 = vpack.c.b16 %v1523, %v1522
        %v1574 = vpack.c.b16 %v1525, %v1524
        %v1575 = vpack.c.b16 %v1527, %v1526
        %v1576 = vpack.c.b16 %v1529, %v1528
        %v1577 = vpack.c.b16 %v1531, %v1530
        %v1578 = vpack.c.b16 %v1533, %v1532
        %v1579 = vpack.c.b16 %v1535, %v1534
        %v1580 = vpack.c.b16 %v1537, %v1536
        %v1581 = vpack.c.b16 %v1539, %v1538
        %v1582 = vpack.c.b16 %v1541, %v1540
        %v1583 = vpack.c.b16 %v1543, %v1542
        %v1584 = vpack.c.b16 %v1545, %v1544
        %v1585 = vpack.c.b16 %v1547, %v1546
        %v1586 = vpack.c.b16 %v1549, %v1548
        %v1587 = vpack.c.b16 %v1551, %v1550
        %v1588 = vpack.c.b16 %v1553, %v1552
        %v1589 = vpack.c.b16 %v1555, %v1554
        %v1590 = vpack.c.b16 %v1557, %v1556
        %v1591 = vpack.c.b16 %v1559, %v1558
        %1624 = vmatpush.bf16.msra.mxu0 %v1567
        %1625 = vmatpush.bf16.msra.mxu0 %v1566
        %1626 = vmatpush.bf16.msra.mxu0 %v1565
        %1627 = vmatpush.bf16.msra.mxu0 %v1564
        %1628 = vmatpush.bf16.msra.mxu0 %v1563
        %1629 = vmatpush.bf16.msra.mxu0 %v1562
        %1630 = vmatpush.bf16.msra.mxu0 %v1561
        %1631 = vmatpush.bf16.msra.mxu0 %v1560
        %1632 = vmatmul.bf16.gmra.mxu0 %v1360
        %v1633 = vpop.f32.mrf.mxu0
        %v1634 = vadd.f32 %v1430, %v1633
        %v1635 = vpop.f32.mrf.mxu0
        %1636 = vdwg.mxu0
        %1637 = vmatpush.bf16.msra.mxu0 %v1575
        %1638 = vmatpush.bf16.msra.mxu0 %v1574
        %1639 = vmatpush.bf16.msra.mxu0 %v1573
        %1640 = vmatpush.bf16.msra.mxu0 %v1572
        %1641 = vmatpush.bf16.msra.mxu0 %v1571
        %1642 = vmatpush.bf16.msra.mxu0 %v1570
        %1643 = vmatpush.bf16.msra.mxu0 %v1569
        %1644 = vmatpush.bf16.msra.mxu0 %v1568
        %1645 = vmatmul.bf16.gmra.mxu0 %v1361
        %v1646 = vpop.f32.mrf.mxu0
        %v1647 = vadd.f32 %v1634, %v1646
        %v1648 = vpop.f32.mrf.mxu0
        %1649 = vdwg.mxu0
        %1650 = vmatpush.bf16.msra.mxu0 %v1583
        %1651 = vmatpush.bf16.msra.mxu0 %v1582
        %1652 = vmatpush.bf16.msra.mxu0 %v1581
        %1653 = vmatpush.bf16.msra.mxu0 %v1580
        %1654 = vmatpush.bf16.msra.mxu0 %v1579
        %1655 = vmatpush.bf16.msra.mxu0 %v1578
        %1656 = vmatpush.bf16.msra.mxu0 %v1577
        %1657 = vmatpush.bf16.msra.mxu0 %v1576
        %1658 = vmatmul.bf16.gmra.mxu0 %v1362
        %v1659 = vpop.f32.mrf.mxu0
        %v1660 = vadd.f32 %v1647, %v1659
        %v1661 = vpop.f32.mrf.mxu0
        %1662 = vdwg.mxu0
        %1663 = vmatpush.bf16.msra.mxu0 %v1591
        %1664 = vmatpush.bf16.msra.mxu0 %v1590
        %1665 = vmatpush.bf16.msra.mxu0 %v1589
        %1666 = vmatpush.bf16.msra.mxu0 %v1588
        %1667 = vmatpush.bf16.msra.mxu0 %v1587
        %1668 = vmatpush.bf16.msra.mxu0 %v1586
        %1669 = vmatpush.bf16.msra.mxu0 %v1585
        %1670 = vmatpush.bf16.msra.mxu0 %v1584
        %1671 = vmatmul.bf16.gmra.mxu0 %v1363
        %v1672 = vpop.f32.mrf.mxu0
        %v1673 = vadd.f32 %v1660, %v1672
        %v1674 = vpop.f32.mrf.mxu0
        %1675 = vdwg.mxu0
        %v1676 = vadd.f32 %v1075, %v1673
        %1677 = vst [vmem:[%s596] sm:$0xff] %v1676
        %s1678 = sand.u32 %s321, 1
        %s1679 = scalar_lea.sflag [#allocation6], %s1678
        %s1680 = sand.u32 %s321, 1
        %s1681 = smul.addr %s1680, 8
        %s1682 = scalar_lea.vmem [#allocation21], %s1681
        // Predicated region
        $region113: #{tpu_custom_call.1} parent=71 // pred_check
          %p1683 = pneg %p331
        $region114: #{tpu_custom_call.1} parent=71 // pred_check_branch
          %1685 = sbr.rel (%p1683) target = $region116
        $region115: #{tpu_custom_call.1} parent=71 // pred_region
          %1687 = vsyncadd %s1679, 0
          %s1688 = smul.addr %s35, 8
          %s1689 = scalar_lea.hbm %s13, %s1688
          %s1691 = sshll.u32 %s1682, 4
          %s1692 = int_to_ptr.vmem [resolvable:$true] %s1691
          %s1693 = sshll.u32 %s1689, 4
          %s1694 = int_to_ptr.hbm [resolvable:$true] %s1693
          %1696 = dma.vmem_to_hbm [thread:$0]  %s1692, 128, %s1694, %s1679
        $region116: #{tpu_custom_call.1} parent=71 // pred_fallthru
          _
      $region72: #{tpu_custom_call.1} parent=5 // pred_fallthru
        _
      %p1697 = scmp.le.s32.totalorder 2, %s30
      // Predicated region
      $region117: #{tpu_custom_call.1} parent=5 // pred_check
        %p1698 = pneg %p1697
      $region118: #{tpu_custom_call.1} parent=5 // pred_check_branch
        %1700 = sbr.rel (%p1698) target = $region120
      $region119: #{tpu_custom_call.1} parent=5 // pred_region
        %s1701 = ssub.s32 %s30, 2
        // Predicated region
        $region121: #{tpu_custom_call.1} parent=119 // pred_check
          %p1702 = pneg %p337
        $region122: #{tpu_custom_call.1} parent=119 // pred_check_branch
          %1704 = sbr.rel (%p1702) target = $region124
        $region123: #{tpu_custom_call.1} parent=119 // pred_region
          %s1705 = sand.u32 %s322, 1
          %s1706 = scalar_lea.sflag [#allocation6], %s1705
          %s1707 = sand.u32 %s322, 1
          %s1708 = smul.addr %s1707, 8
          %s1709 = scalar_lea.vmem [#allocation21], %s1708
          %1711 = dma.done %s1706, 128
        $region124: #{tpu_custom_call.1} parent=119 // pred_fallthru
          _
      $region120: #{tpu_custom_call.1} parent=5 // pred_fallthru
        _
    $region6: #{tpu_custom_call.1} parent=1 // loop_footer
      %s34 = sadd.s32 1, %s30
    $region7: #{tpu_custom_call.1} parent=1 // loop_footer_branch
      %29 = sbr.rel target = $region3
    $region8: #{tpu_custom_call.1} parent=1 // loop_exit
      _
    %1712 = vsyncpa [#allocation5], 1
    %s1713 = scalar_lea.sflag [#allocation5], 1
    %1714 = vsyncpa %s1713, 1
    %1715 = vsyncpa [#allocation8], 1
    %1716 = vsyncpa [#allocation11], 1
    %1717 = vsyncpa [#allocation14], 1
    %1718 = vsyncpa [#allocation17], 1
    %1719 = vsyncpa [#allocation20], 1
    %1720 = vsyncpa [#allocation6], 1
    %s1721 = scalar_lea.sflag [#allocation6], 1
    %1722 = vsyncpa %s1721, 1

</llo_original>
